<compile_context>
chip_gen: v7x
topology: tpu7x:2x2x1
jax: 0.10.0
libtpu: 0.0.40
codegen_flags: <defaults>
</compile_context>

<pallas_src>
import math
import functools

import jax
import jax.numpy as jnp
from jax import lax
from jax.experimental import pallas as pl
from jax.experimental.pallas import tpu as pltpu


def _pick_vmem_limit():
    """~80% of physical VMEM, capped at 100 MiB (v7x: ~51 MiB, v5e/v6e: 100 MiB)."""
    try:
        info = pltpu.get_tpu_info()
        cap = getattr(info, "vmem_capacity_bytes", None)
        if cap:
            return min(int(cap * 0.8), 100 * 1024 * 1024)
    except Exception:
        pass
    return 64 * 1024 * 1024


VMEM_LIMIT = _pick_vmem_limit()

# Tile targets (bf16 operands + f32 accumulator, double-buffered, << VMEM budget)
TM_TARGET = 512
TN_TARGET = 512
TK_TARGET = 1024
LN_ROWS_TARGET = 1024
ATTN_TQ_TARGET = 256


def _round_up(x, m):
    return ((x + m - 1) // m) * m


def _tile_and_pad(dim, target, align):
    """Return (tile, padded_dim).

    Prefers the full dim (always a legal block), then the largest exact divisor
    <= target that is a multiple of `align`, otherwise the target tile with the
    dimension zero-padded up to a tile multiple."""
    if dim <= target:
        return dim, dim
    t = (target // align) * align
    while t >= align:
        if dim % t == 0:
            return t, dim
        t -= align
    t = (target // align) * align
    return t, _round_up(dim, t)


def _gelu_f32(x):
    c = math.sqrt(2.0 / math.pi)
    return 0.5 * x * (1.0 + jnp.tanh(c * (x + 0.044715 * x * x * x)))


# ----------------------------- Pallas kernels ------------------------------

def _layernorm_kernel(x_ref, g_ref, b_ref, o_ref):
    x = x_ref[...].astype(jnp.float32)
    mean = jnp.mean(x, axis=-1, keepdims=True)
    xc = x - mean
    var = jnp.mean(xc * xc, axis=-1, keepdims=True)
    y = xc * lax.rsqrt(var + 1e-5) * g_ref[...] + b_ref[...]
    o_ref[...] = y.astype(o_ref.dtype)


def _mm_kernel(x_ref, w_ref, b_ref, o_ref, acc_ref, *, fuse_gelu):
    k = pl.program_id(2)
    prod = jnp.dot(x_ref[...], w_ref[...], preferred_element_type=jnp.float32)

    @pl.when(k == 0)
    def _():
        acc_ref[...] = prod            # first partial: no zero-fill + add

    @pl.when(k > 0)
    def _():
        acc_ref[...] += prod

    @pl.when(k == pl.num_programs(2) - 1)
    def _():
        y = acc_ref[...] + b_ref[...].astype(jnp.float32)
        if fuse_gelu:
            y = _gelu_f32(y)
        o_ref[...] = y.astype(o_ref.dtype)


def _mm_res_kernel(x_ref, w_ref, b_ref, res_ref, o_ref, acc_ref):
    k = pl.program_id(2)
    prod = jnp.dot(x_ref[...], w_ref[...], preferred_element_type=jnp.float32)

    @pl.when(k == 0)
    def _():
        acc_ref[...] = prod

    @pl.when(k > 0)
    def _():
        acc_ref[...] += prod

    @pl.when(k == pl.num_programs(2) - 1)
    def _():
        y = (acc_ref[...] + b_ref[...].astype(jnp.float32)
             + res_ref[...].astype(jnp.float32))
        o_ref[...] = y.astype(o_ref.dtype)


def _mm_nobias_kernel(x_ref, w_ref, o_ref, acc_ref):
    k = pl.program_id(2)
    prod = jnp.dot(x_ref[...], w_ref[...], preferred_element_type=jnp.float32)

    @pl.when(k == 0)
    def _():
        acc_ref[...] = prod

    @pl.when(k > 0)
    def _():
        acc_ref[...] += prod

    @pl.when(k == pl.num_programs(2) - 1)
    def _():
        o_ref[...] = acc_ref[...].astype(o_ref.dtype)


def _flash_attn_kernel(q_ref, k_ref, v_ref, o_ref, m_scr, l_scr, acc_scr,
                       *, scale, tq, tkv):
    # q_ref: (tq, hd) bf16; k_ref/v_ref: (tkv, hd) bf16; o_ref: (tq, hd) bf16.
    qi = pl.program_id(2)
    ki = pl.program_id(3)
    nkv = pl.num_programs(3)

    @pl.when(ki == 0)
    def _():
        m_scr[...] = jnp.full_like(m_scr, -1e30)
        l_scr[...] = jnp.zeros_like(l_scr)
        acc_scr[...] = jnp.zeros_like(acc_scr)

    q_start = qi * tq
    q_end = q_start + (tq - 1)
    kv_start = ki * tkv
    kv_end = kv_start + (tkv - 1)

    def tile_update(apply_mask):
        q = q_ref[...]
        k = k_ref[...]
        v = v_ref[...]
        # (tq, hd) x (tkv, hd) contracting on hd -> (tq, tkv); no K transpose.
        s = lax.dot_general(q, k, (((1,), (1,)), ((), ())),
                            preferred_element_type=jnp.float32) * scale
        if apply_mask:
            row = q_start + lax.broadcasted_iota(jnp.int32, (tq, tkv), 0)
            col = kv_start + lax.broadcasted_iota(jnp.int32, (tq, tkv), 1)
            s = jnp.where(col <= row, s, jnp.float32(-1e30))
        m_prev = m_scr[...]
        m_new = jnp.maximum(m_prev, jnp.max(s, axis=-1, keepdims=True))
        alpha = jnp.exp(m_prev - m_new)
        p = jnp.exp(s - m_new)
        l_scr[...] = alpha * l_scr[...] + jnp.sum(p, axis=-1, keepdims=True)
        acc_scr[...] = alpha * acc_scr[...] + jnp.dot(
            p.astype(v.dtype), v, preferred_element_type=jnp.float32)
        m_scr[...] = m_new

    # Fully-unmasked tile (strictly below the diagonal): no iota, no where.
    @pl.when(kv_end <= q_start)
    def _():
        tile_update(False)

    # Diagonal tile: needs the causal mask.  Fully-masked tiles run neither branch.
    @pl.when(jnp.logical_and(kv_start <= q_end, kv_end > q_start))
    def _():
        tile_update(True)

    @pl.when(ki == nkv - 1)
    def _():
        inv_l = pl.reciprocal(l_scr[...], approx=True)
        o_ref[...] = (acc_scr[...] * inv_l).astype(o_ref.dtype)


# ------------------------------ wrappers ------------------------------------

def pallas_layernorm(x2d, g, b, out_dtype=jnp.bfloat16):
    M, C = x2d.shape
    tm, Mp = _tile_and_pad(M, LN_ROWS_TARGET, 8)
    x_in = x2d if Mp == M else jnp.pad(x2d, ((0, Mp - M), (0, 0)))
    out = pl.pallas_call(
        _layernorm_kernel,
        out_shape=jax.ShapeDtypeStruct((Mp, C), out_dtype),
        grid=(Mp // tm,),
        in_specs=[pl.BlockSpec((tm, C), lambda i: (i, 0)),
                  pl.BlockSpec((1, C), lambda i: (0, 0)),
                  pl.BlockSpec((1, C), lambda i: (0, 0))],
        out_specs=pl.BlockSpec((tm, C), lambda i: (i, 0)),
        compiler_params=pltpu.CompilerParams(
            dimension_semantics=("parallel",),
            vmem_limit_bytes=VMEM_LIMIT),
    )(x_in, g, b)
    return out if Mp == M else out[:M]


def pallas_matmul(x, w, b=None, res=None, fuse_gelu=False, out_dtype=jnp.bfloat16,
                  tm_target=TM_TARGET, tn_target=TN_TARGET, tk_target=TK_TARGET):
    """out = act(x @ w + b) (+ res).  x, w in bf16; accumulation in f32."""
    M, K = x.shape
    K2, N = w.shape
    assert K == K2

    tm, Mp = _tile_and_pad(M, tm_target, 8)
    tn, Np = _tile_and_pad(N, tn_target, 128)
    tk, Kp = _tile_and_pad(K, tk_target, 128)

    if (Mp, Kp) != (M, K):
        x = jnp.pad(x, ((0, Mp - M), (0, Kp - K)))
    if (Kp, Np) != (K, N):
        w = jnp.pad(w, ((0, Kp - K), (0, Np - N)))

    grid = (Mp // tm, Np // tn, Kp // tk)

    in_specs = [pl.BlockSpec((tm, tk), lambda i, j, k: (i, k)),
                pl.BlockSpec((tk, tn), lambda i, j, k: (k, j))]
    args = [x, w]
    io_alias = {}

    if b is not None:
        if Np != N:
            b = jnp.pad(b, ((0, 0), (0, Np - N)))
        in_specs.append(pl.BlockSpec((1, tn), lambda i, j, k: (0, j)))
        args.append(b)

    if res is not None:
        assert b is not None and res.dtype == out_dtype
        if (Mp, Np) != (M, N):
            res = jnp.pad(res, ((0, Mp - M), (0, Np - N)))
        in_specs.append(pl.BlockSpec((tm, tn), lambda i, j, k: (i, j)))
        args.append(res)
        io_alias = {len(args) - 1: 0}          # alias residual buffer to output
        kernel = _mm_res_kernel
    elif b is not None:
        kernel = functools.partial(_mm_kernel, fuse_gelu=fuse_gelu)
    else:
        kernel = _mm_nobias_kernel

    out = pl.pallas_call(
        kernel,
        out_shape=jax.ShapeDtypeStruct((Mp, Np), out_dtype),
        grid_spec=pltpu.PrefetchScalarGridSpec(
            num_scalar_prefetch=0,
            grid=grid,
            in_specs=in_specs,
            out_specs=pl.BlockSpec((tm, tn), lambda i, j, k: (i, j)),
            scratch_shapes=[pltpu.VMEM((tm, tn), jnp.float32)]),
        compiler_params=pltpu.CompilerParams(
            dimension_semantics=("parallel", "parallel", "arbitrary"),
            vmem_limit_bytes=VMEM_LIMIT),
        input_output_aliases=io_alias,
    )(*args)

    if (Mp, Np) != (M, N):
        out = out[:M, :N]
    return out


def pallas_attention(qkv, n_head, B, T):
    """qkv: (B*T, 3C) bf16 -> (B*T, C) bf16 causal self-attention output."""
    BT, threeC = qkv.shape
    C = threeC // 3
    hd = C // n_head
    scale = 1.0 / math.sqrt(hd)

    # (B*T, 3C) -> (3, B, H, T, hd): one-time layout plumbing so the kernel sees
    # lane-dense tiles whose minor dim is the full head_dim.
    arr = qkv.reshape(B, T, 3, n_head, hd).transpose(2, 0, 3, 1, 4)
    q, k, v = arr[0], arr[1], arr[2]

    tq, Tp = _tile_and_pad(T, ATTN_TQ_TARGET, 8)
    tkv = tq
    if Tp != T:
        pad = ((0, 0), (0, 0), (0, Tp - T), (0, 0))
        q = jnp.pad(q, pad)
        k = jnp.pad(k, pad)
        v = jnp.pad(v, pad)

    grid = (B, n_head, Tp // tq, Tp // tkv)
    kernel = functools.partial(_flash_attn_kernel, scale=scale, tq=tq, tkv=tkv)

    out = pl.pallas_call(
        kernel,
        out_shape=jax.ShapeDtypeStruct((B, n_head, Tp, hd), jnp.bfloat16),
        grid=grid,
        in_specs=[
            pl.BlockSpec((None, None, tq, hd), lambda bi, h, qi, ki: (bi, h, qi, 0)),
            pl.BlockSpec((None, None, tkv, hd), lambda bi, h, qi, ki: (bi, h, ki, 0)),
            pl.BlockSpec((None, None, tkv, hd), lambda bi, h, qi, ki: (bi, h, ki, 0)),
        ],
        out_specs=pl.BlockSpec((None, None, tq, hd),
                               lambda bi, h, qi, ki: (bi, h, qi, 0)),
        scratch_shapes=[pltpu.VMEM((tq, 1), jnp.float32),   # m (running max)
                        pltpu.VMEM((tq, 1), jnp.float32),   # l (running denom)
                        pltpu.VMEM((tq, hd), jnp.float32)], # acc
        compiler_params=pltpu.CompilerParams(
            dimension_semantics=("parallel", "parallel", "parallel", "arbitrary"),
            vmem_limit_bytes=VMEM_LIMIT),
    )(q, k, v)

    if Tp != T:
        out = out[:, :, :T, :]
    # (B, H, T, hd) -> (B*T, C)
    return out.transpose(0, 2, 1, 3).reshape(B * T, C)


# --------------------------- model (forward) --------------------------------

def block_forward(p, x, n_head):
    B, T, C = x.shape
    x2 = x.reshape(B * T, C)                                   # bf16 residual stream

    # ---- attention branch ----
    h = pallas_layernorm(x2, p["ln1_g"], p["ln1_b"])           # bf16
    qkv = pallas_matmul(h, p["w_attn"], p["b_attn"])           # (B*T, 3C) bf16
    y = pallas_attention(qkv, n_head, B, T)                    # (B*T, C) bf16
    x2 = pallas_matmul(y, p["w_proj"], p["b_proj"], res=x2)    # x + attn(ln_1(x))

    # ---- MLP branch (GELU fused into c_fc epilogue) ----
    h2 = pallas_layernorm(x2, p["ln2_g"], p["ln2_b"])          # bf16
    f = pallas_matmul(h2, p["w_fc"], p["b_fc"], fuse_gelu=True)  # (B*T, 4C) bf16
    x2 = pallas_matmul(f, p["w_fcproj"], p["b_fcproj"], res=x2)  # x + mlp(ln_2(x))

    return x2.reshape(B, T, C)


def gpt_forward(params, idx, n_head):
    B, T = idx.shape
    wte = params["wte"]                         # (V, C) f32 (embedding view)
    wpe = params["wpe"]                         # (block_size, C) f32
    C = wte.shape[1]

    tok_emb = jnp.take(wte, idx, axis=0)        # (B, T, C)
    pos_emb = wpe[:T][None, :, :]               # (1, T, C)
    x = (tok_emb + pos_emb).astype(jnp.bfloat16)   # bf16 residual stream

    for p in params["blocks"]:
        x = block_forward(p, x, n_head)

    # Inference path: ln_f + lm_head only on the last token.
    x_last = x[:, -1, :]                                        # (B, C) bf16
    xf = pallas_layernorm(x_last, params["lnf_g"], params["lnf_b"])

    # lm_head (weight-tied, bias-free); single k step (tk=C), wide N tiles.
    logits = pallas_matmul(xf, params["w_head"], out_dtype=jnp.float32,
                           tn_target=2048, tk_target=4096)
    return logits[:, None, :]                   # (B, 1, V), matching x[:, [-1], :]


# --------------------------- parameter init ----------------------------------

def init_params(key, vocab_size, block_size, n_layer, n_embd):
    C = n_embd
    keys = jax.random.split(key, 2 + 6 * n_layer)
    ki = iter(keys)

    def nrm(k, shape):
        return (0.02 * jax.random.normal(k, shape)).astype(jnp.float32)

    wte = nrm(next(ki), (vocab_size, C))
    params = {
        "wte": wte,                                           # f32 for embedding gather
        "w_head": wte.T.astype(jnp.bfloat16),                 # tied lm_head, (C, V) bf16
        "wpe": nrm(next(ki), (block_size, C)),
        "lnf_g": jnp.ones((1, C), jnp.float32),
        "lnf_b": jnp.zeros((1, C), jnp.float32),
        "blocks": [],
    }
    for _ in range(n_layer):
        blk = {
            "ln1_g": jnp.ones((1, C), jnp.float32),
            "ln1_b": jnp.zeros((1, C), jnp.float32),
            "w_attn": nrm(next(ki), (C, 3 * C)).astype(jnp.bfloat16),
            "b_attn": jnp.zeros((1, 3 * C), jnp.float32),
            "w_proj": nrm(next(ki), (C, C)).astype(jnp.bfloat16),
            "b_proj": jnp.zeros((1, C), jnp.float32),
            "ln2_g": jnp.ones((1, C), jnp.float32),
            "ln2_b": jnp.zeros((1, C), jnp.float32),
            "w_fc": nrm(next(ki), (C, 4 * C)).astype(jnp.bfloat16),
            "b_fc": jnp.zeros((1, 4 * C), jnp.float32),
            "w_fcproj": nrm(next(ki), (4 * C, C)).astype(jnp.bfloat16),
            "b_fcproj": jnp.zeros((1, C), jnp.float32),
        }
        # consume remaining keys deterministically even if unused
        next(ki); next(ki)
        params["blocks"].append(blk)
    return params


# --------------------------------- main --------------------------------------

if __name__ == "__main__":
    # small GPTConfig: block_size=16, vocab_size=128, n_layer=2, n_head=4, n_embd=32
    VOCAB, BLOCK, NLAYER, NHEAD, NEMBD = 128, 16, 2, 4, 32
    B, T = 2, 8

    key = jax.random.PRNGKey(0)
    pkey, ikey = jax.random.split(key)
    params = init_params(pkey, VOCAB, BLOCK, NLAYER, NEMBD)
    idx = jax.random.randint(ikey, (B, T), 0, VOCAB, dtype=jnp.int32)

    fwd = jax.jit(functools.partial(gpt_forward, n_head=NHEAD))
    logits = fwd(params, idx)
    jax.block_until_ready(logits)

    assert logits.shape == (B, 1, VOCAB)
    assert jnp.all(jnp.isfinite(logits))
    print("KERNEL_OK")
</pallas_src>

<mosaic_0001>
module attributes {stable_mosaic.version = 11 : i64} {
  func.func @_mm_kernel(%arg0: i32, %arg1: i32, %arg2: i32, %arg3: memref<16x32xbf16, #tpu.memory_space<vmem>>, %arg4: memref<32x96xbf16, #tpu.memory_space<vmem>>, %arg5: memref<1x96xf32, #tpu.memory_space<vmem>>, %arg6: memref<16x96xbf16, #tpu.memory_space<vmem>>, %arg7: memref<16x96xf32, #tpu.memory_space<vmem>>) attributes {dimension_semantics = [#tpu.dimension_semantics<parallel>, #tpu.dimension_semantics<parallel>, #tpu.dimension_semantics<arbitrary>], iteration_bounds = array<i64: 1, 1, 1>, scalar_prefetch = 0 : i64, scratch_operands = 1 : i64, tpu.core_type = #tpu.core_type<tc>, window_params = [{transform_indices = @transform_0, window_bounds = array<i64: 16, 32>}, {transform_indices = @transform_1, window_bounds = array<i64: 32, 96>}, {transform_indices = @transform_2, window_bounds = array<i64: 1, 96>}, {transform_indices = @transform_3, window_bounds = array<i64: 16, 96>}]} {
    %c0 = arith.constant 0 : index
    %c0_0 = arith.constant 0 : index
    %0 = vector.load %arg3[%c0, %c0_0] : memref<16x32xbf16, #tpu.memory_space<vmem>>, vector<16x32xbf16>
    %c0_1 = arith.constant 0 : index
    %c0_2 = arith.constant 0 : index
    %1 = vector.load %arg4[%c0_1, %c0_2] : memref<32x96xbf16, #tpu.memory_space<vmem>>, vector<32x96xbf16>
    %cst = arith.constant dense<0.000000e+00> : vector<16x96xf32>
    %2 = tpu.matmul %0, %1, %cst {dimension_numbers = #tpu.dot_dimension_numbers<[1], [0], [0], [1], [0, 0, 1, 1], [], []>} : vector<16x32xbf16>, vector<32x96xbf16>, vector<16x96xf32> -> vector<16x96xf32>
    %c0_i32 = arith.constant 0 : i32
    %3 = arith.cmpi eq, %arg2, %c0_i32 : i32
    %4 = arith.extui %3 : i1 to i32
    %c0_i32_3 = arith.constant 0 : i32
    %5 = arith.cmpi ne, %4, %c0_i32_3 : i32
    scf.if %5 {
      %c0_8 = arith.constant 0 : index
      %c0_9 = arith.constant 0 : index
      %12 = vector.load %arg7[%c0_8, %c0_9] : memref<16x96xf32, #tpu.memory_space<vmem>>, vector<16x96xf32>
      tpu.vector_store %arg7[%c0_8, %c0_9], %2 {strides = array<i32>} : memref<16x96xf32, #tpu.memory_space<vmem>>, vector<16x96xf32>,
    } else {
    }
    %c0_i32_4 = arith.constant 0 : i32
    %6 = arith.cmpi sgt, %arg2, %c0_i32_4 : i32
    %7 = arith.extui %6 : i1 to i32
    %c0_i32_5 = arith.constant 0 : i32
    %8 = arith.cmpi ne, %7, %c0_i32_5 : i32
    scf.if %8 {
      %c0_8 = arith.constant 0 : index
      %c0_9 = arith.constant 0 : index
      %12 = vector.load %arg7[%c0_8, %c0_9] : memref<16x96xf32, #tpu.memory_space<vmem>>, vector<16x96xf32>
      %13 = arith.addf %12, %2 : vector<16x96xf32>
      %c0_10 = arith.constant 0 : index
      %c0_11 = arith.constant 0 : index
      %14 = vector.load %arg7[%c0_10, %c0_11] : memref<16x96xf32, #tpu.memory_space<vmem>>, vector<16x96xf32>
      tpu.vector_store %arg7[%c0_10, %c0_11], %13 {strides = array<i32>} : memref<16x96xf32, #tpu.memory_space<vmem>>, vector<16x96xf32>,
    } else {
    }
    %c0_i32_6 = arith.constant 0 : i32
    %9 = arith.cmpi eq, %arg2, %c0_i32_6 : i32
    %10 = arith.extui %9 : i1 to i32
    %c0_i32_7 = arith.constant 0 : i32
    %11 = arith.cmpi ne, %10, %c0_i32_7 : i32
    scf.if %11 {
      %c0_8 = arith.constant 0 : index
      %c0_9 = arith.constant 0 : index
      %12 = vector.load %arg7[%c0_8, %c0_9] : memref<16x96xf32, #tpu.memory_space<vmem>>, vector<16x96xf32>
      %c0_10 = arith.constant 0 : index
      %c0_11 = arith.constant 0 : index
      %13 = vector.load %arg5[%c0_10, %c0_11] : memref<1x96xf32, #tpu.memory_space<vmem>>, vector<1x96xf32>
      %14 = vector.broadcast %13 : vector<1x96xf32> to vector<16x96xf32>
      %15 = arith.addf %12, %14 : vector<16x96xf32>
      %16 = arith.truncf %15 : vector<16x96xf32> to vector<16x96xbf16>
      %c0_12 = arith.constant 0 : index
      %c0_13 = arith.constant 0 : index
      %17 = vector.load %arg6[%c0_12, %c0_13] : memref<16x96xbf16, #tpu.memory_space<vmem>>, vector<16x96xbf16>
      tpu.vector_store %arg6[%c0_12, %c0_13], %16 {strides = array<i32>} : memref<16x96xbf16, #tpu.memory_space<vmem>>, vector<16x96xbf16>,
    } else {
    }
    return
  }
  func.func @transform_0(%arg0: i32, %arg1: i32, %arg2: i32) -> (i32, i32) {
    %c0_i32 = arith.constant 0 : i32
    return %arg0, %arg2 : i32, i32
  }
  func.func @transform_1(%arg0: i32, %arg1: i32, %arg2: i32) -> (i32, i32) {
    %c0_i32 = arith.constant 0 : i32
    return %arg2, %arg1 : i32, i32
  }
  func.func @transform_2(%arg0: i32, %arg1: i32, %arg2: i32) -> (i32, i32) {
    %c0_i32 = arith.constant 0 : i32
    %c0_i32_0 = arith.constant 0 : i32
    return %c0_i32, %arg1 : i32, i32
  }
  func.func @transform_3(%arg0: i32, %arg1: i32, %arg2: i32) -> (i32, i32) {
    %c0_i32 = arith.constant 0 : i32
    return %arg0, %arg1 : i32, i32
  }
}

module attributes {stable_mosaic.version = 11 : i64} {
  func.func @_layernorm_kernel(%arg0: i32, %arg1: memref<16x32xbf16, #tpu.memory_space<vmem>>, %arg2: memref<1x32xf32, #tpu.memory_space<vmem>>, %arg3: memref<1x32xf32, #tpu.memory_space<vmem>>, %arg4: memref<16x32xbf16, #tpu.memory_space<vmem>>) attributes {dimension_semantics = [#tpu.dimension_semantics<parallel>], iteration_bounds = array<i64: 1>, scalar_prefetch = 0 : i64, scratch_operands = 0 : i64, tpu.core_type = #tpu.core_type<tc>, window_params = [{transform_indices = @transform_0, window_bounds = array<i64: 16, 32>}, {pipeline_mode = #tpu.pipeline_mode<synchronous>, transform_indices = @transform_1, window_bounds = array<i64: 1, 32>}, {pipeline_mode = #tpu.pipeline_mode<synchronous>, transform_indices = @transform_2, window_bounds = array<i64: 1, 32>}, {transform_indices = @transform_3, window_bounds = array<i64: 16, 32>}]} {
    %c0 = arith.constant 0 : index
    %c0_0 = arith.constant 0 : index
    %0 = vector.load %arg1[%c0, %c0_0] : memref<16x32xbf16, #tpu.memory_space<vmem>>, vector<16x32xbf16>
    %1 = arith.extf %0 : vector<16x32xbf16> to vector<16x32xf32>
    %cst = arith.constant dense<0.000000e+00> : vector<16xf32>
    %2 = vector.multi_reduction <add>, %1, %cst [1] : vector<16x32xf32> to vector<16xf32>
    %3 = vector.shape_cast %2 : vector<16xf32> to vector<16x1xf32>
    %cst_1 = arith.constant 3.200000e+01 : f32
    %4 = vector.broadcast %cst_1 : f32 to vector<16x1xf32>
    %5 = arith.divf %3, %4 : vector<16x1xf32>
    %6 = vector.broadcast %5 : vector<16x1xf32> to vector<16x32xf32>
    %7 = arith.subf %1, %6 : vector<16x32xf32>
    %8 = arith.mulf %7, %7 : vector<16x32xf32>
    %cst_2 = arith.constant dense<0.000000e+00> : vector<16xf32>
    %9 = vector.multi_reduction <add>, %8, %cst_2 [1] : vector<16x32xf32> to vector<16xf32>
    %10 = vector.shape_cast %9 : vector<16xf32> to vector<16x1xf32>
    %cst_3 = arith.constant 3.200000e+01 : f32
    %11 = vector.broadcast %cst_3 : f32 to vector<16x1xf32>
    %12 = arith.divf %10, %11 : vector<16x1xf32>
    %cst_4 = arith.constant 9.99999974E-6 : f32
    %13 = vector.broadcast %cst_4 : f32 to vector<16x1xf32>
    %14 = arith.addf %12, %13 : vector<16x1xf32>
    %15 = math.rsqrt %14 : vector<16x1xf32>
    %16 = vector.broadcast %15 : vector<16x1xf32> to vector<16x32xf32>
    %17 = arith.mulf %7, %16 : vector<16x32xf32>
    %c0_5 = arith.constant 0 : index
    %c0_6 = arith.constant 0 : index
    %18 = vector.load %arg2[%c0_5, %c0_6] : memref<1x32xf32, #tpu.memory_space<vmem>>, vector<1x32xf32>
    %19 = vector.broadcast %18 : vector<1x32xf32> to vector<16x32xf32>
    %20 = arith.mulf %17, %19 : vector<16x32xf32>
    %c0_7 = arith.constant 0 : index
    %c0_8 = arith.constant 0 : index
    %21 = vector.load %arg3[%c0_7, %c0_8] : memref<1x32xf32, #tpu.memory_space<vmem>>, vector<1x32xf32>
    %22 = vector.broadcast %21 : vector<1x32xf32> to vector<16x32xf32>
    %23 = arith.addf %20, %22 : vector<16x32xf32>
    %24 = arith.truncf %23 : vector<16x32xf32> to vector<16x32xbf16>
    %c0_9 = arith.constant 0 : index
    %c0_10 = arith.constant 0 : index
    %25 = vector.load %arg4[%c0_9, %c0_10] : memref<16x32xbf16, #tpu.memory_space<vmem>>, vector<16x32xbf16>
    tpu.vector_store %arg4[%c0_9, %c0_10], %24 {strides = array<i32>} : memref<16x32xbf16, #tpu.memory_space<vmem>>, vector<16x32xbf16>,
    return
  }
  func.func @transform_0(%arg0: i32) -> (i32, i32) {
    %c0_i32 = arith.constant 0 : i32
    %c0_i32_0 = arith.constant 0 : i32
    return %arg0, %c0_i32 : i32, i32
  }
  func.func @transform_1(%arg0: i32) -> (i32, i32) {
    %c0_i32 = arith.constant 0 : i32
    %c0_i32_0 = arith.constant 0 : i32
    %c0_i32_1 = arith.constant 0 : i32
    return %c0_i32, %c0_i32_0 : i32, i32
  }
  func.func @transform_2(%arg0: i32) -> (i32, i32) {
    %c0_i32 = arith.constant 0 : i32
    %c0_i32_0 = arith.constant 0 : i32
    %c0_i32_1 = arith.constant 0 : i32
    return %c0_i32, %c0_i32_0 : i32, i32
  }
  func.func @transform_3(%arg0: i32) -> (i32, i32) {
    %c0_i32 = arith.constant 0 : i32
    %c0_i32_0 = arith.constant 0 : i32
    return %arg0, %c0_i32 : i32, i32
  }
}

module attributes {stable_mosaic.version = 11 : i64} {
  func.func @_flash_attn_kernel(%arg0: i32, %arg1: i32, %arg2: i32, %arg3: i32, %arg4: memref<1x1x8x8xbf16, #tpu.memory_space<vmem>>, %arg5: memref<1x1x8x8xbf16, #tpu.memory_space<vmem>>, %arg6: memref<1x1x8x8xbf16, #tpu.memory_space<vmem>>, %arg7: memref<1x1x8x8xbf16, #tpu.memory_space<vmem>>, %arg8: memref<8x1xf32, #tpu.memory_space<vmem>>, %arg9: memref<8x1xf32, #tpu.memory_space<vmem>>, %arg10: memref<8x8xf32, #tpu.memory_space<vmem>>) attributes {dimension_semantics = [#tpu.dimension_semantics<parallel>, #tpu.dimension_semantics<parallel>, #tpu.dimension_semantics<parallel>, #tpu.dimension_semantics<arbitrary>], iteration_bounds = array<i64: 2, 4, 1, 1>, scalar_prefetch = 0 : i64, scratch_operands = 3 : i64, tpu.core_type = #tpu.core_type<tc>, window_params = [{transform_indices = @transform_0, window_bounds = array<i64: 1, 1, 8, 8>}, {transform_indices = @transform_1, window_bounds = array<i64: 1, 1, 8, 8>}, {transform_indices = @transform_2, window_bounds = array<i64: 1, 1, 8, 8>}, {transform_indices = @transform_3, window_bounds = array<i64: 1, 1, 8, 8>}]} {
    %c0_i32 = arith.constant 0 : i32
    %0 = arith.cmpi eq, %arg3, %c0_i32 : i32
    %1 = arith.extui %0 : i1 to i32
    %c0_i32_0 = arith.constant 0 : i32
    %2 = arith.cmpi ne, %1, %c0_i32_0 : i32
    scf.if %2 {
      %cst = arith.constant -1.000000e+30 : f32
      %18 = vector.broadcast %cst : f32 to vector<8x1xf32>
      %c0 = arith.constant 0 : index
      %c0_7 = arith.constant 0 : index
      %19 = vector.load %arg8[%c0, %c0_7] : memref<8x1xf32, #tpu.memory_space<vmem>>, vector<8x1xf32>
      tpu.vector_store %arg8[%c0, %c0_7], %18 {strides = array<i32>} : memref<8x1xf32, #tpu.memory_space<vmem>>, vector<8x1xf32>,
      %cst_8 = arith.constant 0.000000e+00 : f32
      %20 = vector.broadcast %cst_8 : f32 to vector<8x1xf32>
      %c0_9 = arith.constant 0 : index
      %c0_10 = arith.constant 0 : index
      %21 = vector.load %arg9[%c0_9, %c0_10] : memref<8x1xf32, #tpu.memory_space<vmem>>, vector<8x1xf32>
      tpu.vector_store %arg9[%c0_9, %c0_10], %20 {strides = array<i32>} : memref<8x1xf32, #tpu.memory_space<vmem>>, vector<8x1xf32>,
      %cst_11 = arith.constant 0.000000e+00 : f32
      %22 = vector.broadcast %cst_11 : f32 to vector<8x8xf32>
      %c0_12 = arith.constant 0 : index
      %c0_13 = arith.constant 0 : index
      %23 = vector.load %arg10[%c0_12, %c0_13] : memref<8x8xf32, #tpu.memory_space<vmem>>, vector<8x8xf32>
      tpu.vector_store %arg10[%c0_12, %c0_13], %22 {strides = array<i32>} : memref<8x8xf32, #tpu.memory_space<vmem>>, vector<8x8xf32>,
    } else {
    }
    %c8_i32 = arith.constant 8 : i32
    %3 = arith.muli %arg2, %c8_i32 : i32
    %c7_i32 = arith.constant 7 : i32
    %4 = arith.addi %3, %c7_i32 : i32
    %c8_i32_1 = arith.constant 8 : i32
    %5 = arith.muli %arg3, %c8_i32_1 : i32
    %c7_i32_2 = arith.constant 7 : i32
    %6 = arith.addi %5, %c7_i32_2 : i32
    %7 = arith.cmpi sle, %6, %3 : i32
    %8 = arith.extui %7 : i1 to i32
    %c0_i32_3 = arith.constant 0 : i32
    %9 = arith.cmpi ne, %8, %c0_i32_3 : i32
    scf.if %9 {
      %c0 = arith.constant 0 : index
      %c0_7 = arith.constant 0 : index
      %c0_8 = arith.constant 0 : index
      %c0_9 = arith.constant 0 : index
      %18 = vector.load %arg4[%c0, %c0_7, %c0_8, %c0_9] : memref<1x1x8x8xbf16, #tpu.memory_space<vmem>>, vector<1x1x8x8xbf16>
      %19 = vector.shape_cast %18 : vector<1x1x8x8xbf16> to vector<8x8xbf16>
      %c0_10 = arith.constant 0 : index
      %c0_11 = arith.constant 0 : index
      %c0_12 = arith.constant 0 : index
      %c0_13 = arith.constant 0 : index
      %20 = vector.load %arg5[%c0_10, %c0_11, %c0_12, %c0_13] : memref<1x1x8x8xbf16, #tpu.memory_space<vmem>>, vector<1x1x8x8xbf16>
      %21 = vector.shape_cast %20 : vector<1x1x8x8xbf16> to vector<8x8xbf16>
      %c0_14 = arith.constant 0 : index
      %c0_15 = arith.constant 0 : index
      %c0_16 = arith.constant 0 : index
      %c0_17 = arith.constant 0 : index
      %22 = vector.load %arg6[%c0_14, %c0_15, %c0_16, %c0_17] : memref<1x1x8x8xbf16, #tpu.memory_space<vmem>>, vector<1x1x8x8xbf16>
      %23 = vector.shape_cast %22 : vector<1x1x8x8xbf16> to vector<8x8xbf16>
      %cst = arith.constant dense<0.000000e+00> : vector<8x8xf32>
      %24 = tpu.matmul %19, %21, %cst {dimension_numbers = #tpu.dot_dimension_numbers<[1], [1], [0], [0], [0, 0, 1, 0], [], []>} : vector<8x8xbf16>, vector<8x8xbf16>, vector<8x8xf32> -> vector<8x8xf32>
      %cst_18 = arith.constant 0.353553385 : f32
      %25 = vector.broadcast %cst_18 : f32 to vector<8x8xf32>
      %26 = arith.mulf %24, %25 : vector<8x8xf32>
      %c0_19 = arith.constant 0 : index
      %c0_20 = arith.constant 0 : index
      %27 = vector.load %arg8[%c0_19, %c0_20] : memref<8x1xf32, #tpu.memory_space<vmem>>, vector<8x1xf32>
      %cst_21 = arith.constant dense<0xFF800000> : vector<8xf32>
      %28 = vector.multi_reduction <maximumf>, %26, %cst_21 [1] : vector<8x8xf32> to vector<8xf32>
      %29 = vector.shape_cast %28 : vector<8xf32> to vector<8x1xf32>
      %30 = arith.maximumf %27, %29 : vector<8x1xf32>
      %31 = arith.subf %27, %30 : vector<8x1xf32>
      %32 = math.exp %31 : vector<8x1xf32>
      %33 = vector.broadcast %30 : vector<8x1xf32> to vector<8x8xf32>
      %34 = arith.subf %26, %33 : vector<8x8xf32>
      %35 = math.exp %34 : vector<8x8xf32>
      %c0_22 = arith.constant 0 : index
      %c0_23 = arith.constant 0 : index
      %36 = vector.load %arg9[%c0_22, %c0_23] : memref<8x1xf32, #tpu.memory_space<vmem>>, vector<8x1xf32>
      %37 = arith.mulf %32, %36 : vector<8x1xf32>
      %cst_24 = arith.constant dense<0.000000e+00> : vector<8xf32>
      %38 = vector.multi_reduction <add>, %35, %cst_24 [1] : vector<8x8xf32> to vector<8xf32>
      %39 = vector.shape_cast %38 : vector<8xf32> to vector<8x1xf32>
      %40 = arith.addf %37, %39 : vector<8x1xf32>
      %c0_25 = arith.constant 0 : index
      %c0_26 = arith.constant 0 : index
      %41 = vector.load %arg9[%c0_25, %c0_26] : memref<8x1xf32, #tpu.memory_space<vmem>>, vector<8x1xf32>
      tpu.vector_store %arg9[%c0_25, %c0_26], %40 {strides = array<i32>} : memref<8x1xf32, #tpu.memory_space<vmem>>, vector<8x1xf32>,
      %c0_27 = arith.constant 0 : index
      %c0_28 = arith.constant 0 : index
      %42 = vector.load %arg10[%c0_27, %c0_28] : memref<8x8xf32, #tpu.memory_space<vmem>>, vector<8x8xf32>
      %43 = vector.broadcast %32 : vector<8x1xf32> to vector<8x8xf32>
      %44 = arith.mulf %43, %42 : vector<8x8xf32>
      %45 = arith.truncf %35 : vector<8x8xf32> to vector<8x8xbf16>
      %cst_29 = arith.constant dense<0.000000e+00> : vector<8x8xf32>
      %46 = tpu.matmul %45, %23, %cst_29 {dimension_numbers = #tpu.dot_dimension_numbers<[1], [0], [0], [1], [0, 0, 1, 1], [], []>} : vector<8x8xbf16>, vector<8x8xbf16>, vector<8x8xf32> -> vector<8x8xf32>
      %47 = arith.addf %44, %46 : vector<8x8xf32>
      %c0_30 = arith.constant 0 : index
      %c0_31 = arith.constant 0 : index
      %48 = vector.load %arg10[%c0_30, %c0_31] : memref<8x8xf32, #tpu.memory_space<vmem>>, vector<8x8xf32>
      tpu.vector_store %arg10[%c0_30, %c0_31], %47 {strides = array<i32>} : memref<8x8xf32, #tpu.memory_space<vmem>>, vector<8x8xf32>,
      %c0_32 = arith.constant 0 : index
      %c0_33 = arith.constant 0 : index
      %49 = vector.load %arg8[%c0_32, %c0_33] : memref<8x1xf32, #tpu.memory_space<vmem>>, vector<8x1xf32>
      tpu.vector_store %arg8[%c0_32, %c0_33], %30 {strides = array<i32>} : memref<8x1xf32, #tpu.memory_space<vmem>>, vector<8x1xf32>,
    } else {
    }
    %10 = arith.cmpi sle, %5, %4 : i32
    %11 = arith.cmpi sgt, %6, %3 : i32
    %12 = arith.andi %10, %11 : i1
    %13 = arith.extui %12 : i1 to i32
    %c0_i32_4 = arith.constant 0 : i32
    %14 = arith.cmpi ne, %13, %c0_i32_4 : i32
    scf.if %14 {
      %c0 = arith.constant 0 : index
      %c0_7 = arith.constant 0 : index
      %c0_8 = arith.constant 0 : index
      %c0_9 = arith.constant 0 : index
      %18 = vector.load %arg4[%c0, %c0_7, %c0_8, %c0_9] : memref<1x1x8x8xbf16, #tpu.memory_space<vmem>>, vector<1x1x8x8xbf16>
      %19 = vector.shape_cast %18 : vector<1x1x8x8xbf16> to vector<8x8xbf16>
      %c0_10 = arith.constant 0 : index
      %c0_11 = arith.constant 0 : index
      %c0_12 = arith.constant 0 : index
      %c0_13 = arith.constant 0 : index
      %20 = vector.load %arg5[%c0_10, %c0_11, %c0_12, %c0_13] : memref<1x1x8x8xbf16, #tpu.memory_space<vmem>>, vector<1x1x8x8xbf16>
      %21 = vector.shape_cast %20 : vector<1x1x8x8xbf16> to vector<8x8xbf16>
      %c0_14 = arith.constant 0 : index
      %c0_15 = arith.constant 0 : index
      %c0_16 = arith.constant 0 : index
      %c0_17 = arith.constant 0 : index
      %22 = vector.load %arg6[%c0_14, %c0_15, %c0_16, %c0_17] : memref<1x1x8x8xbf16, #tpu.memory_space<vmem>>, vector<1x1x8x8xbf16>
      %23 = vector.shape_cast %22 : vector<1x1x8x8xbf16> to vector<8x8xbf16>
      %cst = arith.constant dense<0.000000e+00> : vector<8x8xf32>
      %24 = tpu.matmul %19, %21, %cst {dimension_numbers = #tpu.dot_dimension_numbers<[1], [1], [0], [0], [0, 0, 1, 0], [], []>} : vector<8x8xbf16>, vector<8x8xbf16>, vector<8x8xf32> -> vector<8x8xf32>
      %cst_18 = arith.constant 0.353553385 : f32
      %25 = vector.broadcast %cst_18 : f32 to vector<8x8xf32>
      %26 = arith.mulf %24, %25 : vector<8x8xf32>
      %27 = tpu.iota {dimensions = array<i32: 0>} : vector<8x8xi32>
      %28 = vector.broadcast %3 : i32 to vector<8x8xi32>
      %29 = arith.addi %28, %27 : vector<8x8xi32>
      %30 = tpu.iota {dimensions = array<i32: 1>} : vector<8x8xi32>
      %31 = vector.broadcast %5 : i32 to vector<8x8xi32>
      %32 = arith.addi %31, %30 : vector<8x8xi32>
      %33 = arith.cmpi sle, %32, %29 : vector<8x8xi32>
      %cst_19 = arith.constant -1.000000e+30 : f32
      %34 = vector.broadcast %cst_19 : f32 to vector<8x8xf32>
      %35 = arith.select %33, %26, %34 : vector<8x8xi1>, vector<8x8xf32>
      %c0_20 = arith.constant 0 : index
      %c0_21 = arith.constant 0 : index
      %36 = vector.load %arg8[%c0_20, %c0_21] : memref<8x1xf32, #tpu.memory_space<vmem>>, vector<8x1xf32>
      %cst_22 = arith.constant dense<0xFF800000> : vector<8xf32>
      %37 = vector.multi_reduction <maximumf>, %35, %cst_22 [1] : vector<8x8xf32> to vector<8xf32>
      %38 = vector.shape_cast %37 : vector<8xf32> to vector<8x1xf32>
      %39 = arith.maximumf %36, %38 : vector<8x1xf32>
      %40 = arith.subf %36, %39 : vector<8x1xf32>
      %41 = math.exp %40 : vector<8x1xf32>
      %42 = vector.broadcast %39 : vector<8x1xf32> to vector<8x8xf32>
      %43 = arith.subf %35, %42 : vector<8x8xf32>
      %44 = math.exp %43 : vector<8x8xf32>
      %c0_23 = arith.constant 0 : index
      %c0_24 = arith.constant 0 : index
      %45 = vector.load %arg9[%c0_23, %c0_24] : memref<8x1xf32, #tpu.memory_space<vmem>>, vector<8x1xf32>
      %46 = arith.mulf %41, %45 : vector<8x1xf32>
      %cst_25 = arith.constant dense<0.000000e+00> : vector<8xf32>
      %47 = vector.multi_reduction <add>, %44, %cst_25 [1] : vector<8x8xf32> to vector<8xf32>
      %48 = vector.shape_cast %47 : vector<8xf32> to vector<8x1xf32>
      %49 = arith.addf %46, %48 : vector<8x1xf32>
      %c0_26 = arith.constant 0 : index
      %c0_27 = arith.constant 0 : index
      %50 = vector.load %arg9[%c0_26, %c0_27] : memref<8x1xf32, #tpu.memory_space<vmem>>, vector<8x1xf32>
      tpu.vector_store %arg9[%c0_26, %c0_27], %49 {strides = array<i32>} : memref<8x1xf32, #tpu.memory_space<vmem>>, vector<8x1xf32>,
      %c0_28 = arith.constant 0 : index
      %c0_29 = arith.constant 0 : index
      %51 = vector.load %arg10[%c0_28, %c0_29] : memref<8x8xf32, #tpu.memory_space<vmem>>, vector<8x8xf32>
      %52 = vector.broadcast %41 : vector<8x1xf32> to vector<8x8xf32>
      %53 = arith.mulf %52, %51 : vector<8x8xf32>
      %54 = arith.truncf %44 : vector<8x8xf32> to vector<8x8xbf16>
      %cst_30 = arith.constant dense<0.000000e+00> : vector<8x8xf32>
      %55 = tpu.matmul %54, %23, %cst_30 {dimension_numbers = #tpu.dot_dimension_numbers<[1], [0], [0], [1], [0, 0, 1, 1], [], []>} : vector<8x8xbf16>, vector<8x8xbf16>, vector<8x8xf32> -> vector<8x8xf32>
      %56 = arith.addf %53, %55 : vector<8x8xf32>
      %c0_31 = arith.constant 0 : index
      %c0_32 = arith.constant 0 : index
      %57 = vector.load %arg10[%c0_31, %c0_32] : memref<8x8xf32, #tpu.memory_space<vmem>>, vector<8x8xf32>
      tpu.vector_store %arg10[%c0_31, %c0_32], %56 {strides = array<i32>} : memref<8x8xf32, #tpu.memory_space<vmem>>, vector<8x8xf32>,
      %c0_33 = arith.constant 0 : index
      %c0_34 = arith.constant 0 : index
      %58 = vector.load %arg8[%c0_33, %c0_34] : memref<8x1xf32, #tpu.memory_space<vmem>>, vector<8x1xf32>
      tpu.vector_store %arg8[%c0_33, %c0_34], %39 {strides = array<i32>} : memref<8x1xf32, #tpu.memory_space<vmem>>, vector<8x1xf32>,
    } else {
    }
    %c0_i32_5 = arith.constant 0 : i32
    %15 = arith.cmpi eq, %arg3, %c0_i32_5 : i32
    %16 = arith.extui %15 : i1 to i32
    %c0_i32_6 = arith.constant 0 : i32
    %17 = arith.cmpi ne, %16, %c0_i32_6 : i32
    scf.if %17 {
      %c0 = arith.constant 0 : index
      %c0_7 = arith.constant 0 : index
      %18 = vector.load %arg9[%c0, %c0_7] : memref<8x1xf32, #tpu.memory_space<vmem>>, vector<8x1xf32>
      %19 = tpu.reciprocal %18 {approx = true} : vector<8x1xf32> -> vector<8x1xf32>
      %c0_8 = arith.constant 0 : index
      %c0_9 = arith.constant 0 : index
      %20 = vector.load %arg10[%c0_8, %c0_9] : memref<8x8xf32, #tpu.memory_space<vmem>>, vector<8x8xf32>
      %21 = vector.broadcast %19 : vector<8x1xf32> to vector<8x8xf32>
      %22 = arith.mulf %20, %21 : vector<8x8xf32>
      %23 = arith.truncf %22 : vector<8x8xf32> to vector<8x8xbf16>
      %c0_10 = arith.constant 0 : index
      %c0_11 = arith.constant 0 : index
      %c0_12 = arith.constant 0 : index
      %c0_13 = arith.constant 0 : index
      %24 = vector.load %arg7[%c0_10, %c0_11, %c0_12, %c0_13] : memref<1x1x8x8xbf16, #tpu.memory_space<vmem>>, vector<1x1x8x8xbf16>
      %25 = vector.shape_cast %24 : vector<1x1x8x8xbf16> to vector<8x8xbf16>
      %26 = vector.shape_cast %23 : vector<8x8xbf16> to vector<1x1x8x8xbf16>
      tpu.vector_store %arg7[%c0_10, %c0_11, %c0_12, %c0_13], %26 {strides = array<i32>} : memref<1x1x8x8xbf16, #tpu.memory_space<vmem>>, vector<1x1x8x8xbf16>,
    } else {
    }
    return
  }
  func.func @transform_0(%arg0: i32, %arg1: i32, %arg2: i32, %arg3: i32) -> (i32, i32, i32, i32) {
    %c0_i32 = arith.constant 0 : i32
    %c0_i32_0 = arith.constant 0 : i32
    return %arg0, %arg1, %arg2, %c0_i32 : i32, i32, i32, i32
  }
  func.func @transform_1(%arg0: i32, %arg1: i32, %arg2: i32, %arg3: i32) -> (i32, i32, i32, i32) {
    %c0_i32 = arith.constant 0 : i32
    %c0_i32_0 = arith.constant 0 : i32
    return %arg0, %arg1, %arg3, %c0_i32 : i32, i32, i32, i32
  }
  func.func @transform_2(%arg0: i32, %arg1: i32, %arg2: i32, %arg3: i32) -> (i32, i32, i32, i32) {
    %c0_i32 = arith.constant 0 : i32
    %c0_i32_0 = arith.constant 0 : i32
    return %arg0, %arg1, %arg3, %c0_i32 : i32, i32, i32, i32
  }
  func.func @transform_3(%arg0: i32, %arg1: i32, %arg2: i32, %arg3: i32) -> (i32, i32, i32, i32) {
    %c0_i32 = arith.constant 0 : i32
    %c0_i32_0 = arith.constant 0 : i32
    return %arg0, %arg1, %arg2, %c0_i32 : i32, i32, i32, i32
  }
}

module attributes {stable_mosaic.version = 11 : i64} {
  func.func @_mm_res_kernel(%arg0: i32, %arg1: i32, %arg2: i32, %arg3: memref<16x32xbf16, #tpu.memory_space<vmem>>, %arg4: memref<32x32xbf16, #tpu.memory_space<vmem>>, %arg5: memref<1x32xf32, #tpu.memory_space<vmem>>, %arg6: memref<16x32xbf16, #tpu.memory_space<vmem>>, %arg7: memref<16x32xbf16, #tpu.memory_space<vmem>>, %arg8: memref<16x32xf32, #tpu.memory_space<vmem>>) attributes {dimension_semantics = [#tpu.dimension_semantics<parallel>, #tpu.dimension_semantics<parallel>, #tpu.dimension_semantics<arbitrary>], iteration_bounds = array<i64: 1, 1, 1>, scalar_prefetch = 0 : i64, scratch_operands = 1 : i64, tpu.core_type = #tpu.core_type<tc>, window_params = [{transform_indices = @transform_0, window_bounds = array<i64: 16, 32>}, {transform_indices = @transform_1, window_bounds = array<i64: 32, 32>}, {transform_indices = @transform_2, window_bounds = array<i64: 1, 32>}, {transform_indices = @transform_3, window_bounds = array<i64: 16, 32>}, {transform_indices = @transform_4, window_bounds = array<i64: 16, 32>}]} {
    %c0 = arith.constant 0 : index
    %c0_0 = arith.constant 0 : index
    %0 = vector.load %arg3[%c0, %c0_0] : memref<16x32xbf16, #tpu.memory_space<vmem>>, vector<16x32xbf16>
    %c0_1 = arith.constant 0 : index
    %c0_2 = arith.constant 0 : index
    %1 = vector.load %arg4[%c0_1, %c0_2] : memref<32x32xbf16, #tpu.memory_space<vmem>>, vector<32x32xbf16>
    %cst = arith.constant dense<0.000000e+00> : vector<16x32xf32>
    %2 = tpu.matmul %0, %1, %cst {dimension_numbers = #tpu.dot_dimension_numbers<[1], [0], [0], [1], [0, 0, 1, 1], [], []>} : vector<16x32xbf16>, vector<32x32xbf16>, vector<16x32xf32> -> vector<16x32xf32>
    %c0_i32 = arith.constant 0 : i32
    %3 = arith.cmpi eq, %arg2, %c0_i32 : i32
    %4 = arith.extui %3 : i1 to i32
    %c0_i32_3 = arith.constant 0 : i32
    %5 = arith.cmpi ne, %4, %c0_i32_3 : i32
    scf.if %5 {
      %c0_8 = arith.constant 0 : index
      %c0_9 = arith.constant 0 : index
      %12 = vector.load %arg8[%c0_8, %c0_9] : memref<16x32xf32, #tpu.memory_space<vmem>>, vector<16x32xf32>
      tpu.vector_store %arg8[%c0_8, %c0_9], %2 {strides = array<i32>} : memref<16x32xf32, #tpu.memory_space<vmem>>, vector<16x32xf32>,
    } else {
    }
    %c0_i32_4 = arith.constant 0 : i32
    %6 = arith.cmpi sgt, %arg2, %c0_i32_4 : i32
    %7 = arith.extui %6 : i1 to i32
    %c0_i32_5 = arith.constant 0 : i32
    %8 = arith.cmpi ne, %7, %c0_i32_5 : i32
    scf.if %8 {
      %c0_8 = arith.constant 0 : index
      %c0_9 = arith.constant 0 : index
      %12 = vector.load %arg8[%c0_8, %c0_9] : memref<16x32xf32, #tpu.memory_space<vmem>>, vector<16x32xf32>
      %13 = arith.addf %12, %2 : vector<16x32xf32>
      %c0_10 = arith.constant 0 : index
      %c0_11 = arith.constant 0 : index
      %14 = vector.load %arg8[%c0_10, %c0_11] : memref<16x32xf32, #tpu.memory_space<vmem>>, vector<16x32xf32>
      tpu.vector_store %arg8[%c0_10, %c0_11], %13 {strides = array<i32>} : memref<16x32xf32, #tpu.memory_space<vmem>>, vector<16x32xf32>,
    } else {
    }
    %c0_i32_6 = arith.constant 0 : i32
    %9 = arith.cmpi eq, %arg2, %c0_i32_6 : i32
    %10 = arith.extui %9 : i1 to i32
    %c0_i32_7 = arith.constant 0 : i32
    %11 = arith.cmpi ne, %10, %c0_i32_7 : i32
    scf.if %11 {
      %c0_8 = arith.constant 0 : index
      %c0_9 = arith.constant 0 : index
      %12 = vector.load %arg8[%c0_8, %c0_9] : memref<16x32xf32, #tpu.memory_space<vmem>>, vector<16x32xf32>
      %c0_10 = arith.constant 0 : index
      %c0_11 = arith.constant 0 : index
      %13 = vector.load %arg5[%c0_10, %c0_11] : memref<1x32xf32, #tpu.memory_space<vmem>>, vector<1x32xf32>
      %14 = vector.broadcast %13 : vector<1x32xf32> to vector<16x32xf32>
      %15 = arith.addf %12, %14 : vector<16x32xf32>
      %c0_12 = arith.constant 0 : index
      %c0_13 = arith.constant 0 : index
      %16 = vector.load %arg6[%c0_12, %c0_13] : memref<16x32xbf16, #tpu.memory_space<vmem>>, vector<16x32xbf16>
      %17 = arith.extf %16 : vector<16x32xbf16> to vector<16x32xf32>
      %18 = arith.addf %15, %17 : vector<16x32xf32>
      %19 = arith.truncf %18 : vector<16x32xf32> to vector<16x32xbf16>
      %c0_14 = arith.constant 0 : index
      %c0_15 = arith.constant 0 : index
      %20 = vector.load %arg7[%c0_14, %c0_15] : memref<16x32xbf16, #tpu.memory_space<vmem>>, vector<16x32xbf16>
      tpu.vector_store %arg7[%c0_14, %c0_15], %19 {strides = array<i32>} : memref<16x32xbf16, #tpu.memory_space<vmem>>, vector<16x32xbf16>,
    } else {
    }
    return
  }
  func.func @transform_0(%arg0: i32, %arg1: i32, %arg2: i32) -> (i32, i32) {
    %c0_i32 = arith.constant 0 : i32
    return %arg0, %arg2 : i32, i32
  }
  func.func @transform_1(%arg0: i32, %arg1: i32, %arg2: i32) -> (i32, i32) {
    %c0_i32 = arith.constant 0 : i32
    return %arg2, %arg1 : i32, i32
  }
  func.func @transform_2(%arg0: i32, %arg1: i32, %arg2: i32) -> (i32, i32) {
    %c0_i32 = arith.constant 0 : i32
    %c0_i32_0 = arith.constant 0 : i32
    return %c0_i32, %arg1 : i32, i32
  }
  func.func @transform_3(%arg0: i32, %arg1: i32, %arg2: i32) -> (i32, i32) {
    %c0_i32 = arith.constant 0 : i32
    return %arg0, %arg1 : i32, i32
  }
  func.func @transform_4(%arg0: i32, %arg1: i32, %arg2: i32) -> (i32, i32) {
    %c0_i32 = arith.constant 0 : i32
    return %arg0, %arg1 : i32, i32
  }
}

module attributes {stable_mosaic.version = 11 : i64} {
  func.func @_mm_kernel(%arg0: i32, %arg1: i32, %arg2: i32, %arg3: memref<16x32xbf16, #tpu.memory_space<vmem>>, %arg4: memref<32x128xbf16, #tpu.memory_space<vmem>>, %arg5: memref<1x128xf32, #tpu.memory_space<vmem>>, %arg6: memref<16x128xbf16, #tpu.memory_space<vmem>>, %arg7: memref<16x128xf32, #tpu.memory_space<vmem>>) attributes {dimension_semantics = [#tpu.dimension_semantics<parallel>, #tpu.dimension_semantics<parallel>, #tpu.dimension_semantics<arbitrary>], iteration_bounds = array<i64: 1, 1, 1>, scalar_prefetch = 0 : i64, scratch_operands = 1 : i64, tpu.core_type = #tpu.core_type<tc>, window_params = [{transform_indices = @transform_0, window_bounds = array<i64: 16, 32>}, {transform_indices = @transform_1, window_bounds = array<i64: 32, 128>}, {transform_indices = @transform_2, window_bounds = array<i64: 1, 128>}, {transform_indices = @transform_3, window_bounds = array<i64: 16, 128>}]} {
    %c0 = arith.constant 0 : index
    %c0_0 = arith.constant 0 : index
    %0 = vector.load %arg3[%c0, %c0_0] : memref<16x32xbf16, #tpu.memory_space<vmem>>, vector<16x32xbf16>
    %c0_1 = arith.constant 0 : index
    %c0_2 = arith.constant 0 : index
    %1 = vector.load %arg4[%c0_1, %c0_2] : memref<32x128xbf16, #tpu.memory_space<vmem>>, vector<32x128xbf16>
    %cst = arith.constant dense<0.000000e+00> : vector<16x128xf32>
    %2 = tpu.matmul %0, %1, %cst {dimension_numbers = #tpu.dot_dimension_numbers<[1], [0], [0], [1], [0, 0, 1, 1], [], []>} : vector<16x32xbf16>, vector<32x128xbf16>, vector<16x128xf32> -> vector<16x128xf32>
    %c0_i32 = arith.constant 0 : i32
    %3 = arith.cmpi eq, %arg2, %c0_i32 : i32
    %4 = arith.extui %3 : i1 to i32
    %c0_i32_3 = arith.constant 0 : i32
    %5 = arith.cmpi ne, %4, %c0_i32_3 : i32
    scf.if %5 {
      %c0_8 = arith.constant 0 : index
      %c0_9 = arith.constant 0 : index
      %12 = vector.load %arg7[%c0_8, %c0_9] : memref<16x128xf32, #tpu.memory_space<vmem>>, vector<16x128xf32>
      tpu.vector_store %arg7[%c0_8, %c0_9], %2 {strides = array<i32>} : memref<16x128xf32, #tpu.memory_space<vmem>>, vector<16x128xf32>,
    } else {
    }
    %c0_i32_4 = arith.constant 0 : i32
    %6 = arith.cmpi sgt, %arg2, %c0_i32_4 : i32
    %7 = arith.extui %6 : i1 to i32
    %c0_i32_5 = arith.constant 0 : i32
    %8 = arith.cmpi ne, %7, %c0_i32_5 : i32
    scf.if %8 {
      %c0_8 = arith.constant 0 : index
      %c0_9 = arith.constant 0 : index
      %12 = vector.load %arg7[%c0_8, %c0_9] : memref<16x128xf32, #tpu.memory_space<vmem>>, vector<16x128xf32>
      %13 = arith.addf %12, %2 : vector<16x128xf32>
      %c0_10 = arith.constant 0 : index
      %c0_11 = arith.constant 0 : index
      %14 = vector.load %arg7[%c0_10, %c0_11] : memref<16x128xf32, #tpu.memory_space<vmem>>, vector<16x128xf32>
      tpu.vector_store %arg7[%c0_10, %c0_11], %13 {strides = array<i32>} : memref<16x128xf32, #tpu.memory_space<vmem>>, vector<16x128xf32>,
    } else {
    }
    %c0_i32_6 = arith.constant 0 : i32
    %9 = arith.cmpi eq, %arg2, %c0_i32_6 : i32
    %10 = arith.extui %9 : i1 to i32
    %c0_i32_7 = arith.constant 0 : i32
    %11 = arith.cmpi ne, %10, %c0_i32_7 : i32
    scf.if %11 {
      %c0_8 = arith.constant 0 : index
      %c0_9 = arith.constant 0 : index
      %12 = vector.load %arg7[%c0_8, %c0_9] : memref<16x128xf32, #tpu.memory_space<vmem>>, vector<16x128xf32>
      %c0_10 = arith.constant 0 : index
      %c0_11 = arith.constant 0 : index
      %13 = vector.load %arg5[%c0_10, %c0_11] : memref<1x128xf32, #tpu.memory_space<vmem>>, vector<1x128xf32>
      %14 = vector.broadcast %13 : vector<1x128xf32> to vector<16x128xf32>
      %15 = arith.addf %12, %14 : vector<16x128xf32>
      %cst_12 = arith.constant 5.000000e-01 : f32
      %16 = vector.broadcast %cst_12 : f32 to vector<16x128xf32>
      %17 = arith.mulf %16, %15 : vector<16x128xf32>
      %cst_13 = arith.constant 4.471500e-02 : f32
      %18 = vector.broadcast %cst_13 : f32 to vector<16x128xf32>
      %19 = arith.mulf %18, %15 : vector<16x128xf32>
      %20 = arith.mulf %19, %15 : vector<16x128xf32>
      %21 = arith.mulf %20, %15 : vector<16x128xf32>
      %22 = arith.addf %15, %21 : vector<16x128xf32>
      %cst_14 = arith.constant 0.797884583 : f32
      %23 = vector.broadcast %cst_14 : f32 to vector<16x128xf32>
      %24 = arith.mulf %23, %22 : vector<16x128xf32>
      %25 = math.tanh %24 : vector<16x128xf32>
      %cst_15 = arith.constant 1.000000e+00 : f32
      %26 = vector.broadcast %cst_15 : f32 to vector<16x128xf32>
      %27 = arith.addf %26, %25 : vector<16x128xf32>
      %28 = arith.mulf %17, %27 : vector<16x128xf32>
      %29 = arith.truncf %28 : vector<16x128xf32> to vector<16x128xbf16>
      %c0_16 = arith.constant 0 : index
      %c0_17 = arith.constant 0 : index
      %30 = vector.load %arg6[%c0_16, %c0_17] : memref<16x128xbf16, #tpu.memory_space<vmem>>, vector<16x128xbf16>
      tpu.vector_store %arg6[%c0_16, %c0_17], %29 {strides = array<i32>} : memref<16x128xbf16, #tpu.memory_space<vmem>>, vector<16x128xbf16>,
    } else {
    }
    return
  }
  func.func @transform_0(%arg0: i32, %arg1: i32, %arg2: i32) -> (i32, i32) {
    %c0_i32 = arith.constant 0 : i32
    return %arg0, %arg2 : i32, i32
  }
  func.func @transform_1(%arg0: i32, %arg1: i32, %arg2: i32) -> (i32, i32) {
    %c0_i32 = arith.constant 0 : i32
    return %arg2, %arg1 : i32, i32
  }
  func.func @transform_2(%arg0: i32, %arg1: i32, %arg2: i32) -> (i32, i32) {
    %c0_i32 = arith.constant 0 : i32
    %c0_i32_0 = arith.constant 0 : i32
    return %c0_i32, %arg1 : i32, i32
  }
  func.func @transform_3(%arg0: i32, %arg1: i32, %arg2: i32) -> (i32, i32) {
    %c0_i32 = arith.constant 0 : i32
    return %arg0, %arg1 : i32, i32
  }
}

module attributes {stable_mosaic.version = 11 : i64} {
  func.func @_mm_res_kernel(%arg0: i32, %arg1: i32, %arg2: i32, %arg3: memref<16x128xbf16, #tpu.memory_space<vmem>>, %arg4: memref<128x32xbf16, #tpu.memory_space<vmem>>, %arg5: memref<1x32xf32, #tpu.memory_space<vmem>>, %arg6: memref<16x32xbf16, #tpu.memory_space<vmem>>, %arg7: memref<16x32xbf16, #tpu.memory_space<vmem>>, %arg8: memref<16x32xf32, #tpu.memory_space<vmem>>) attributes {dimension_semantics = [#tpu.dimension_semantics<parallel>, #tpu.dimension_semantics<parallel>, #tpu.dimension_semantics<arbitrary>], iteration_bounds = array<i64: 1, 1, 1>, scalar_prefetch = 0 : i64, scratch_operands = 1 : i64, tpu.core_type = #tpu.core_type<tc>, window_params = [{transform_indices = @transform_0, window_bounds = array<i64: 16, 128>}, {transform_indices = @transform_1, window_bounds = array<i64: 128, 32>}, {transform_indices = @transform_2, window_bounds = array<i64: 1, 32>}, {transform_indices = @transform_3, window_bounds = array<i64: 16, 32>}, {transform_indices = @transform_4, window_bounds = array<i64: 16, 32>}]} {
    %c0 = arith.constant 0 : index
    %c0_0 = arith.constant 0 : index
    %0 = vector.load %arg3[%c0, %c0_0] : memref<16x128xbf16, #tpu.memory_space<vmem>>, vector<16x128xbf16>
    %c0_1 = arith.constant 0 : index
    %c0_2 = arith.constant 0 : index
    %1 = vector.load %arg4[%c0_1, %c0_2] : memref<128x32xbf16, #tpu.memory_space<vmem>>, vector<128x32xbf16>
    %cst = arith.constant dense<0.000000e+00> : vector<16x32xf32>
    %2 = tpu.matmul %0, %1, %cst {dimension_numbers = #tpu.dot_dimension_numbers<[1], [0], [0], [1], [0, 0, 1, 1], [], []>} : vector<16x128xbf16>, vector<128x32xbf16>, vector<16x32xf32> -> vector<16x32xf32>
    %c0_i32 = arith.constant 0 : i32
    %3 = arith.cmpi eq, %arg2, %c0_i32 : i32
    %4 = arith.extui %3 : i1 to i32
    %c0_i32_3 = arith.constant 0 : i32
    %5 = arith.cmpi ne, %4, %c0_i32_3 : i32
    scf.if %5 {
      %c0_8 = arith.constant 0 : index
      %c0_9 = arith.constant 0 : index
      %12 = vector.load %arg8[%c0_8, %c0_9] : memref<16x32xf32, #tpu.memory_space<vmem>>, vector<16x32xf32>
      tpu.vector_store %arg8[%c0_8, %c0_9], %2 {strides = array<i32>} : memref<16x32xf32, #tpu.memory_space<vmem>>, vector<16x32xf32>,
    } else {
    }
    %c0_i32_4 = arith.constant 0 : i32
    %6 = arith.cmpi sgt, %arg2, %c0_i32_4 : i32
    %7 = arith.extui %6 : i1 to i32
    %c0_i32_5 = arith.constant 0 : i32
    %8 = arith.cmpi ne, %7, %c0_i32_5 : i32
    scf.if %8 {
      %c0_8 = arith.constant 0 : index
      %c0_9 = arith.constant 0 : index
      %12 = vector.load %arg8[%c0_8, %c0_9] : memref<16x32xf32, #tpu.memory_space<vmem>>, vector<16x32xf32>
      %13 = arith.addf %12, %2 : vector<16x32xf32>
      %c0_10 = arith.constant 0 : index
      %c0_11 = arith.constant 0 : index
      %14 = vector.load %arg8[%c0_10, %c0_11] : memref<16x32xf32, #tpu.memory_space<vmem>>, vector<16x32xf32>
      tpu.vector_store %arg8[%c0_10, %c0_11], %13 {strides = array<i32>} : memref<16x32xf32, #tpu.memory_space<vmem>>, vector<16x32xf32>,
    } else {
    }
    %c0_i32_6 = arith.constant 0 : i32
    %9 = arith.cmpi eq, %arg2, %c0_i32_6 : i32
    %10 = arith.extui %9 : i1 to i32
    %c0_i32_7 = arith.constant 0 : i32
    %11 = arith.cmpi ne, %10, %c0_i32_7 : i32
    scf.if %11 {
      %c0_8 = arith.constant 0 : index
      %c0_9 = arith.constant 0 : index
      %12 = vector.load %arg8[%c0_8, %c0_9] : memref<16x32xf32, #tpu.memory_space<vmem>>, vector<16x32xf32>
      %c0_10 = arith.constant 0 : index
      %c0_11 = arith.constant 0 : index
      %13 = vector.load %arg5[%c0_10, %c0_11] : memref<1x32xf32, #tpu.memory_space<vmem>>, vector<1x32xf32>
      %14 = vector.broadcast %13 : vector<1x32xf32> to vector<16x32xf32>
      %15 = arith.addf %12, %14 : vector<16x32xf32>
      %c0_12 = arith.constant 0 : index
      %c0_13 = arith.constant 0 : index
      %16 = vector.load %arg6[%c0_12, %c0_13] : memref<16x32xbf16, #tpu.memory_space<vmem>>, vector<16x32xbf16>
      %17 = arith.extf %16 : vector<16x32xbf16> to vector<16x32xf32>
      %18 = arith.addf %15, %17 : vector<16x32xf32>
      %19 = arith.truncf %18 : vector<16x32xf32> to vector<16x32xbf16>
      %c0_14 = arith.constant 0 : index
      %c0_15 = arith.constant 0 : index
      %20 = vector.load %arg7[%c0_14, %c0_15] : memref<16x32xbf16, #tpu.memory_space<vmem>>, vector<16x32xbf16>
      tpu.vector_store %arg7[%c0_14, %c0_15], %19 {strides = array<i32>} : memref<16x32xbf16, #tpu.memory_space<vmem>>, vector<16x32xbf16>,
    } else {
    }
    return
  }
  func.func @transform_0(%arg0: i32, %arg1: i32, %arg2: i32) -> (i32, i32) {
    %c0_i32 = arith.constant 0 : i32
    return %arg0, %arg2 : i32, i32
  }
  func.func @transform_1(%arg0: i32, %arg1: i32, %arg2: i32) -> (i32, i32) {
    %c0_i32 = arith.constant 0 : i32
    return %arg2, %arg1 : i32, i32
  }
  func.func @transform_2(%arg0: i32, %arg1: i32, %arg2: i32) -> (i32, i32) {
    %c0_i32 = arith.constant 0 : i32
    %c0_i32_0 = arith.constant 0 : i32
    return %c0_i32, %arg1 : i32, i32
  }
  func.func @transform_3(%arg0: i32, %arg1: i32, %arg2: i32) -> (i32, i32) {
    %c0_i32 = arith.constant 0 : i32
    return %arg0, %arg1 : i32, i32
  }
  func.func @transform_4(%arg0: i32, %arg1: i32, %arg2: i32) -> (i32, i32) {
    %c0_i32 = arith.constant 0 : i32
    return %arg0, %arg1 : i32, i32
  }
}

module attributes {stable_mosaic.version = 11 : i64} {
  func.func @_layernorm_kernel(%arg0: i32, %arg1: memref<2x32xbf16, #tpu.memory_space<vmem>>, %arg2: memref<1x32xf32, #tpu.memory_space<vmem>>, %arg3: memref<1x32xf32, #tpu.memory_space<vmem>>, %arg4: memref<2x32xbf16, #tpu.memory_space<vmem>>) attributes {dimension_semantics = [#tpu.dimension_semantics<parallel>], iteration_bounds = array<i64: 1>, scalar_prefetch = 0 : i64, scratch_operands = 0 : i64, tpu.core_type = #tpu.core_type<tc>, window_params = [{transform_indices = @transform_0, window_bounds = array<i64: 2, 32>}, {pipeline_mode = #tpu.pipeline_mode<synchronous>, transform_indices = @transform_1, window_bounds = array<i64: 1, 32>}, {pipeline_mode = #tpu.pipeline_mode<synchronous>, transform_indices = @transform_2, window_bounds = array<i64: 1, 32>}, {transform_indices = @transform_3, window_bounds = array<i64: 2, 32>}]} {
    %c0 = arith.constant 0 : index
    %c0_0 = arith.constant 0 : index
    %0 = vector.load %arg1[%c0, %c0_0] : memref<2x32xbf16, #tpu.memory_space<vmem>>, vector<2x32xbf16>
    %1 = arith.extf %0 : vector<2x32xbf16> to vector<2x32xf32>
    %cst = arith.constant dense<0.000000e+00> : vector<2xf32>
    %2 = vector.multi_reduction <add>, %1, %cst [1] : vector<2x32xf32> to vector<2xf32>
    %3 = vector.shape_cast %2 : vector<2xf32> to vector<2x1xf32>
    %cst_1 = arith.constant 3.200000e+01 : f32
    %4 = vector.broadcast %cst_1 : f32 to vector<2x1xf32>
    %5 = arith.divf %3, %4 : vector<2x1xf32>
    %6 = vector.broadcast %5 : vector<2x1xf32> to vector<2x32xf32>
    %7 = arith.subf %1, %6 : vector<2x32xf32>
    %8 = arith.mulf %7, %7 : vector<2x32xf32>
    %cst_2 = arith.constant dense<0.000000e+00> : vector<2xf32>
    %9 = vector.multi_reduction <add>, %8, %cst_2 [1] : vector<2x32xf32> to vector<2xf32>
    %10 = vector.shape_cast %9 : vector<2xf32> to vector<2x1xf32>
    %cst_3 = arith.constant 3.200000e+01 : f32
    %11 = vector.broadcast %cst_3 : f32 to vector<2x1xf32>
    %12 = arith.divf %10, %11 : vector<2x1xf32>
    %cst_4 = arith.constant 9.99999974E-6 : f32
    %13 = vector.broadcast %cst_4 : f32 to vector<2x1xf32>
    %14 = arith.addf %12, %13 : vector<2x1xf32>
    %15 = math.rsqrt %14 : vector<2x1xf32>
    %16 = vector.broadcast %15 : vector<2x1xf32> to vector<2x32xf32>
    %17 = arith.mulf %7, %16 : vector<2x32xf32>
    %c0_5 = arith.constant 0 : index
    %c0_6 = arith.constant 0 : index
    %18 = vector.load %arg2[%c0_5, %c0_6] : memref<1x32xf32, #tpu.memory_space<vmem>>, vector<1x32xf32>
    %19 = vector.broadcast %18 : vector<1x32xf32> to vector<2x32xf32>
    %20 = arith.mulf %17, %19 : vector<2x32xf32>
    %c0_7 = arith.constant 0 : index
    %c0_8 = arith.constant 0 : index
    %21 = vector.load %arg3[%c0_7, %c0_8] : memref<1x32xf32, #tpu.memory_space<vmem>>, vector<1x32xf32>
    %22 = vector.broadcast %21 : vector<1x32xf32> to vector<2x32xf32>
    %23 = arith.addf %20, %22 : vector<2x32xf32>
    %24 = arith.truncf %23 : vector<2x32xf32> to vector<2x32xbf16>
    %c0_9 = arith.constant 0 : index
    %c0_10 = arith.constant 0 : index
    %25 = vector.load %arg4[%c0_9, %c0_10] : memref<2x32xbf16, #tpu.memory_space<vmem>>, vector<2x32xbf16>
    tpu.vector_store %arg4[%c0_9, %c0_10], %24 {strides = array<i32>} : memref<2x32xbf16, #tpu.memory_space<vmem>>, vector<2x32xbf16>,
    return
  }
  func.func @transform_0(%arg0: i32) -> (i32, i32) {
    %c0_i32 = arith.constant 0 : i32
    %c0_i32_0 = arith.constant 0 : i32
    return %arg0, %c0_i32 : i32, i32
  }
  func.func @transform_1(%arg0: i32) -> (i32, i32) {
    %c0_i32 = arith.constant 0 : i32
    %c0_i32_0 = arith.constant 0 : i32
    %c0_i32_1 = arith.constant 0 : i32
    return %c0_i32, %c0_i32_0 : i32, i32
  }
  func.func @transform_2(%arg0: i32) -> (i32, i32) {
    %c0_i32 = arith.constant 0 : i32
    %c0_i32_0 = arith.constant 0 : i32
    %c0_i32_1 = arith.constant 0 : i32
    return %c0_i32, %c0_i32_0 : i32, i32
  }
  func.func @transform_3(%arg0: i32) -> (i32, i32) {
    %c0_i32 = arith.constant 0 : i32
    %c0_i32_0 = arith.constant 0 : i32
    return %arg0, %c0_i32 : i32, i32
  }
}

module attributes {stable_mosaic.version = 11 : i64} {
  func.func @_mm_nobias_kernel(%arg0: i32, %arg1: i32, %arg2: i32, %arg3: memref<2x32xbf16, #tpu.memory_space<vmem>>, %arg4: memref<32x128xbf16, #tpu.memory_space<vmem>>, %arg5: memref<2x128xf32, #tpu.memory_space<vmem>>, %arg6: memref<2x128xf32, #tpu.memory_space<vmem>>) attributes {dimension_semantics = [#tpu.dimension_semantics<parallel>, #tpu.dimension_semantics<parallel>, #tpu.dimension_semantics<arbitrary>], iteration_bounds = array<i64: 1, 1, 1>, scalar_prefetch = 0 : i64, scratch_operands = 1 : i64, tpu.core_type = #tpu.core_type<tc>, window_params = [{transform_indices = @transform_0, window_bounds = array<i64: 2, 32>}, {transform_indices = @transform_1, window_bounds = array<i64: 32, 128>}, {transform_indices = @transform_2, window_bounds = array<i64: 2, 128>}]} {
    %c0 = arith.constant 0 : index
    %c0_0 = arith.constant 0 : index
    %0 = vector.load %arg3[%c0, %c0_0] : memref<2x32xbf16, #tpu.memory_space<vmem>>, vector<2x32xbf16>
    %c0_1 = arith.constant 0 : index
    %c0_2 = arith.constant 0 : index
    %1 = vector.load %arg4[%c0_1, %c0_2] : memref<32x128xbf16, #tpu.memory_space<vmem>>, vector<32x128xbf16>
    %cst = arith.constant dense<0.000000e+00> : vector<2x128xf32>
    %2 = tpu.matmul %0, %1, %cst {dimension_numbers = #tpu.dot_dimension_numbers<[1], [0], [0], [1], [0, 0, 1, 1], [], []>} : vector<2x32xbf16>, vector<32x128xbf16>, vector<2x128xf32> -> vector<2x128xf32>
    %c0_i32 = arith.constant 0 : i32
    %3 = arith.cmpi eq, %arg2, %c0_i32 : i32
    %4 = arith.extui %3 : i1 to i32
    %c0_i32_3 = arith.constant 0 : i32
    %5 = arith.cmpi ne, %4, %c0_i32_3 : i32
    scf.if %5 {
      %c0_8 = arith.constant 0 : index
      %c0_9 = arith.constant 0 : index
      %12 = vector.load %arg6[%c0_8, %c0_9] : memref<2x128xf32, #tpu.memory_space<vmem>>, vector<2x128xf32>
      tpu.vector_store %arg6[%c0_8, %c0_9], %2 {strides = array<i32>} : memref<2x128xf32, #tpu.memory_space<vmem>>, vector<2x128xf32>,
    } else {
    }
    %c0_i32_4 = arith.constant 0 : i32
    %6 = arith.cmpi sgt, %arg2, %c0_i32_4 : i32
    %7 = arith.extui %6 : i1 to i32
    %c0_i32_5 = arith.constant 0 : i32
    %8 = arith.cmpi ne, %7, %c0_i32_5 : i32
    scf.if %8 {
      %c0_8 = arith.constant 0 : index
      %c0_9 = arith.constant 0 : index
      %12 = vector.load %arg6[%c0_8, %c0_9] : memref<2x128xf32, #tpu.memory_space<vmem>>, vector<2x128xf32>
      %13 = arith.addf %12, %2 : vector<2x128xf32>
      %c0_10 = arith.constant 0 : index
      %c0_11 = arith.constant 0 : index
      %14 = vector.load %arg6[%c0_10, %c0_11] : memref<2x128xf32, #tpu.memory_space<vmem>>, vector<2x128xf32>
      tpu.vector_store %arg6[%c0_10, %c0_11], %13 {strides = array<i32>} : memref<2x128xf32, #tpu.memory_space<vmem>>, vector<2x128xf32>,
    } else {
    }
    %c0_i32_6 = arith.constant 0 : i32
    %9 = arith.cmpi eq, %arg2, %c0_i32_6 : i32
    %10 = arith.extui %9 : i1 to i32
    %c0_i32_7 = arith.constant 0 : i32
    %11 = arith.cmpi ne, %10, %c0_i32_7 : i32
    scf.if %11 {
      %c0_8 = arith.constant 0 : index
      %c0_9 = arith.constant 0 : index
      %12 = vector.load %arg6[%c0_8, %c0_9] : memref<2x128xf32, #tpu.memory_space<vmem>>, vector<2x128xf32>
      %c0_10 = arith.constant 0 : index
      %c0_11 = arith.constant 0 : index
      %13 = vector.load %arg5[%c0_10, %c0_11] : memref<2x128xf32, #tpu.memory_space<vmem>>, vector<2x128xf32>
      tpu.vector_store %arg5[%c0_10, %c0_11], %12 {strides = array<i32>} : memref<2x128xf32, #tpu.memory_space<vmem>>, vector<2x128xf32>,
    } else {
    }
    return
  }
  func.func @transform_0(%arg0: i32, %arg1: i32, %arg2: i32) -> (i32, i32) {
    %c0_i32 = arith.constant 0 : i32
    return %arg0, %arg2 : i32, i32
  }
  func.func @transform_1(%arg0: i32, %arg1: i32, %arg2: i32) -> (i32, i32) {
    %c0_i32 = arith.constant 0 : i32
    return %arg2, %arg1 : i32, i32
  }
  func.func @transform_2(%arg0: i32, %arg1: i32, %arg2: i32) -> (i32, i32) {
    %c0_i32 = arith.constant 0 : i32
    return %arg0, %arg1 : i32, i32
  }
}

</mosaic_0001>

<llo_original>
// kernel: gpt_forward.16
$region0: #{gpt_forward.16}
  #allocation0 [shape = 'u32[]', space=smem, size = 0x4, offset = 0x4, fixed_abs, tag = 'smem constant byte address 0x4 - core index']
  #allocation1 [shape = 'u32[144,128]{1,0:T(1,128)}', space=vmem, size = 0x12000, scoped, tag = 'internal scratch']
  %s0 = inlined_call_operand.hbm [shape: bf16[16,32], index: 0, kind: input, shape index: {}]
  %s1 = inlined_call_operand.hbm [shape: f32[1,32], index: 1, kind: input, shape index: {}]
  %s2 = inlined_call_operand.hbm [shape: f32[1,32], index: 2, kind: input, shape index: {}]
  %s3 = inlined_call_operand.hbm [shape: bf16[16,32], index: 3, kind: output, shape index: {}]
  %s4 = sld [smem:[#allocation0]]
  $region34: #{gpt_forward.16} parent=0
    _
  %s6 = ssub.s32 1, %s4
  %s7 = scalar_select 0, %s6, %s4
  $region1: #{gpt_forward.16} parent=0
    #allocation2 [shape = 'u8[4096]{0}', space=vmem, size = 0x1000, scoped, tag = 'input window, operand 0, single buffered']
    #allocation3 [shape = 's32[1]{0}', space=sflag, size = 0x4, scoped, tag = 'scoped memory for gpt_forward.16']
    #allocation4 [shape = 's32[1]{0}', space=sflag, size = 0x4, scoped, tag = 'scoped memory for gpt_forward.16']
    #allocation5 [shape = 'u8[512]{0}', space=vmem, size = 0x400, scoped, tag = 'input window, operand 1, single buffered']
    #allocation6 [shape = 's32[1]{0}', space=sflag, size = 0x4, scoped, tag = 'scoped memory for gpt_forward.16']
    #allocation7 [shape = 'u8[512]{0}', space=vmem, size = 0x400, scoped, tag = 'input window, operand 2, single buffered']
    #allocation8 [shape = 'u8[4096]{0}', space=vmem, size = 0x1000, scoped, tag = 'output window, operand 0, single buffered']
    %8 = vsyncpa [#allocation3], 0
    %9 = vsyncpa [#allocation6], 0
    %10 = vsyncpa [#allocation4], 0
    // Predicated region
    $region2: #{gpt_forward.16} parent=1 // pred_check
      _
    $region3: #{gpt_forward.16} parent=1 // pred_check_branch
      %12 = sbr.rel (0) target = $region5
    $region4: #{gpt_forward.16} parent=1 // pred_region
      %s14 = ssub.s32 128, 128
      %15 = vsyncadd [#allocation3], %s14
      %s16 = sshll.u32 [#allocation2], 4
      %s17 = int_to_ptr.vmem [resolvable:$true] %s16
      %22 = dma.hbm_to_vmem [thread:$0]  %s0, 128, %s17, [#allocation3], 64, 64, 4
    $region5: #{gpt_forward.16} parent=1 // pred_fallthru
      _
    // Predicated region
    $region6: #{gpt_forward.16} parent=1 // pred_check
      _
    $region7: #{gpt_forward.16} parent=1 // pred_check_branch
      %24 = sbr.rel (0) target = $region9
    $region8: #{gpt_forward.16} parent=1 // pred_region
      %s26 = ssub.s32 16, 16
      %27 = vsyncadd [#allocation6], %s26
      %s29 = sshll.u32 [#allocation5], 4
      %s30 = int_to_ptr.vmem [resolvable:$true] %s29
      %32 = dma.hbm_to_vmem [thread:$0]  %s1, 16, %s30, [#allocation6]
    $region9: #{gpt_forward.16} parent=1 // pred_fallthru
      _
    // Predicated region
    $region10: #{gpt_forward.16} parent=1 // pred_check
      _
    $region11: #{gpt_forward.16} parent=1 // pred_check_branch
      %34 = sbr.rel (0) target = $region13
    $region12: #{gpt_forward.16} parent=1 // pred_region
      %s36 = ssub.s32 16, 16
      %37 = vsyncadd [#allocation6], %s36
      %s39 = sshll.u32 [#allocation7], 4
      %s40 = int_to_ptr.vmem [resolvable:$true] %s39
      %42 = dma.hbm_to_vmem [thread:$0]  %s2, 16, %s40, [#allocation6]
    $region13: #{gpt_forward.16} parent=1 // pred_fallthru
      _
    // Predicated region
    $region14: #{gpt_forward.16} parent=1 // pred_check
      _
    $region15: #{gpt_forward.16} parent=1 // pred_check_branch
      %44 = sbr.rel (0) target = $region17
    $region16: #{gpt_forward.16} parent=1 // pred_region
      %45 = dma.done [#allocation3], 128
    $region17: #{gpt_forward.16} parent=1 // pred_fallthru
      _
    // Predicated region
    $region18: #{gpt_forward.16} parent=1 // pred_check
      _
    $region19: #{gpt_forward.16} parent=1 // pred_check_branch
      %47 = sbr.rel (0) target = $region21
    $region20: #{gpt_forward.16} parent=1 // pred_region
      %48 = dma.done [#allocation6], 16
    $region21: #{gpt_forward.16} parent=1 // pred_fallthru
      _
    // Predicated region
    $region22: #{gpt_forward.16} parent=1 // pred_check
      _
    $region23: #{gpt_forward.16} parent=1 // pred_check_branch
      %50 = sbr.rel (0) target = $region25
    $region24: #{gpt_forward.16} parent=1 // pred_region
      %51 = dma.done [#allocation6], 16
    $region25: #{gpt_forward.16} parent=1 // pred_fallthru
      _
    %v52 = vld [vmem:[#allocation2] sm:$0xf]
    %v53 = vld [vmem:[#allocation2 + $0x4] sm:$0xf]
    %v54 = vunpack.c.l.bf16 %v52
    %v55 = vunpack.c.l.bf16 %v53
    %vm56 = vcmask 261120
    %v57 = vsel %vm56, %v54, 0.0
    %58 = vadd.xlane.f32.xlu0 %v57
    %v59 = vpop.xlane.xlu0 %58
    %v60 = vsel %vm56, %v55, 0.0
    %61 = vadd.xlane.f32.xlu0 %v60
    %v62 = vpop.xlane.xlu0 %61
    %v63 = vrcp.pop 32.0
    %v64 = vmul.f32 %v59, %v63
    %v65 = vmul.f32 %v62, %v63
    %v66 = vsub.f32 %v54, %v64
    %v67 = vsub.f32 %v55, %v65
    %v68 = vmul.f32 %v66, %v66
    %v69 = vmul.f32 %v67, %v67
    %v70 = vsel %vm56, %v68, 0.0
    %71 = vadd.xlane.f32.xlu0 %v70
    %v72 = vpop.xlane.xlu0 %71
    %v73 = vsel %vm56, %v69, 0.0
    %74 = vadd.xlane.f32.xlu0 %v73
    %v75 = vpop.xlane.xlu0 %74
    %v76 = vmul.f32 %v72, %v63
    %v77 = vmul.f32 %v75, %v63
    %v78 = vadd.f32 %v76, 1e-05
    %v79 = vadd.f32 %v77, 1e-05
    %v80 = vrsqrt.pop %v78
    %v81 = vrsqrt.pop %v79
    %v82 = vmul.f32 %v66, %v80
    %v83 = vmul.f32 %v67, %v81
    %v84 = vld [vmem:[#allocation5] sm:$0x1]
    %v86 = vlaneseq
    %v87 = vshrl.u32 %v86, 7
    %v88 = vsub.s32 0, %v87
    %v89 = vrot.slane %v84, %v88
    %v91 = vmul.f32 %v82, %v89
    %v92 = vmul.f32 %v83, %v89
    %v93 = vld [vmem:[#allocation7] sm:$0x1]
    %v95 = vlaneseq
    %v96 = vshrl.u32 %v95, 7
    %v97 = vsub.s32 0, %v96
    %v98 = vrot.slane %v93, %v97
    %v100 = vadd.f32 %v91, %v98
    %v101 = vadd.f32 %v92, %v98
    %v102 = vpack.c.bf16 %v101, %v100
    %v104 = vunpack.c.l.b16 %v102
    %v105 = vunpack.c.h.b16 %v102
    %v106 = vpack.c.b16 %v104, %v104
    %v107 = vpack.c.b16 %v105, %v105
    %vm110 = vcmask 257024
    %111 = vst.msk [vmem:[#allocation8] sm:$0xf] %vm110, %v106
    %112 = vst.msk [vmem:[#allocation8 + $0x4] sm:$0xf] %vm110, %v107
    // Predicated region
    $region26: #{gpt_forward.16} parent=1 // pred_check
      _
    $region27: #{gpt_forward.16} parent=1 // pred_check_branch
      %114 = sbr.rel (0) target = $region29
    $region28: #{gpt_forward.16} parent=1 // pred_region
      %s116 = ssub.s32 128, 128
      %117 = vsyncadd [#allocation4], %s116
      %s118 = sshll.u32 [#allocation8], 4
      %s119 = int_to_ptr.vmem [resolvable:$true] %s118
      %124 = dma.vmem_to_hbm [thread:$0]  %s119, 128, %s3, [#allocation4], 64, 64, 4
    $region29: #{gpt_forward.16} parent=1 // pred_fallthru
      _
    // Predicated region
    $region30: #{gpt_forward.16} parent=1 // pred_check
      _
    $region31: #{gpt_forward.16} parent=1 // pred_check_branch
      %126 = sbr.rel (0) target = $region33
    $region32: #{gpt_forward.16} parent=1 // pred_region
      %127 = dma.done [#allocation4], 128
    $region33: #{gpt_forward.16} parent=1 // pred_fallthru
      _
    %128 = vsyncpa [#allocation3], 1
    %129 = vsyncpa [#allocation6], 1
    %130 = vsyncpa [#allocation4], 1

// kernel: gpt_forward.17
$region0: #{gpt_forward.17}
  #allocation0 [shape = 'u32[]', space=smem, size = 0x4, offset = 0x4, fixed_abs, tag = 'smem constant byte address 0x4 - core index']
  #allocation1 [shape = 'u32[144,128]{1,0:T(1,128)}', space=vmem, size = 0x12000, scoped, tag = 'internal scratch']
  #allocation2 [shape = 'f32[16,96]{1,0:T(8,128)}', space=vmem, size = 0x2000, scoped, tag = 'scratch operand']
  %s0 = inlined_call_operand.hbm [shape: bf16[16,32], index: 0, kind: input, shape index: {}]
  %s1 = inlined_call_operand.hbm [shape: bf16[32,96], index: 1, kind: input, shape index: {}]
  %s2 = inlined_call_operand.hbm [shape: f32[1,96], index: 2, kind: input, shape index: {}]
  %s3 = inlined_call_operand.hbm [shape: bf16[16,96], index: 3, kind: output, shape index: {}]
  %s4 = sld [smem:[#allocation0]]
  $region46: #{gpt_forward.17} parent=0
    _
  %s6 = ssub.s32 1, %s4
  %s7 = scalar_select 0, %s6, %s4
  $region1: #{gpt_forward.17} parent=0
    #allocation3 [shape = 'u8[4096]{0}', space=vmem, size = 0x1000, scoped, tag = 'input window, operand 0, single buffered']
    #allocation4 [shape = 's32[1]{0}', space=sflag, size = 0x4, scoped, tag = 'scoped memory for gpt_forward.17']
    #allocation5 [shape = 's32[1]{0}', space=sflag, size = 0x4, scoped, tag = 'scoped memory for gpt_forward.17']
    #allocation6 [shape = 'u8[8192]{0}', space=vmem, size = 0x2000, scoped, tag = 'input window, operand 1, single buffered']
    #allocation7 [shape = 's32[1]{0}', space=sflag, size = 0x4, scoped, tag = 'scoped memory for gpt_forward.17']
    #allocation8 [shape = 'u8[512]{0}', space=vmem, size = 0x400, scoped, tag = 'input window, operand 2, single buffered']
    #allocation9 [shape = 'u8[4096]{0}', space=vmem, size = 0x1000, scoped, tag = 'output window, operand 0, single buffered']
    %8 = vsyncpa [#allocation4], 0
    %9 = vsyncpa [#allocation7], 0
    %10 = vsyncpa [#allocation5], 0
    // Predicated region
    $region2: #{gpt_forward.17} parent=1 // pred_check
      _
    $region3: #{gpt_forward.17} parent=1 // pred_check_branch
      %12 = sbr.rel (0) target = $region5
    $region4: #{gpt_forward.17} parent=1 // pred_region
      %s14 = ssub.s32 128, 128
      %15 = vsyncadd [#allocation4], %s14
      %s16 = sshll.u32 [#allocation3], 4
      %s17 = int_to_ptr.vmem [resolvable:$true] %s16
      %22 = dma.hbm_to_vmem [thread:$0]  %s0, 128, %s17, [#allocation4], 64, 64, 4
    $region5: #{gpt_forward.17} parent=1 // pred_fallthru
      _
    // Predicated region
    $region6: #{gpt_forward.17} parent=1 // pred_check
      _
    $region7: #{gpt_forward.17} parent=1 // pred_check_branch
      %24 = sbr.rel (0) target = $region9
    $region8: #{gpt_forward.17} parent=1 // pred_region
      %s26 = ssub.s32 256, 256
      %27 = vsyncadd [#allocation7], %s26
      %s28 = sshll.u32 [#allocation6], 4
      %s29 = int_to_ptr.vmem [resolvable:$true] %s28
      %34 = dma.hbm_to_vmem [thread:$0]  %s1, 256, %s29, [#allocation7], 64, 64, 4
    $region9: #{gpt_forward.17} parent=1 // pred_fallthru
      _
    // Predicated region
    $region10: #{gpt_forward.17} parent=1 // pred_check
      _
    $region11: #{gpt_forward.17} parent=1 // pred_check_branch
      %36 = sbr.rel (0) target = $region13
    $region12: #{gpt_forward.17} parent=1 // pred_region
      %s38 = ssub.s32 16, 16
      %39 = vsyncadd [#allocation7], %s38
      %s41 = sshll.u32 [#allocation8], 4
      %s42 = int_to_ptr.vmem [resolvable:$true] %s41
      %44 = dma.hbm_to_vmem [thread:$0]  %s2, 16, %s42, [#allocation7]
    $region13: #{gpt_forward.17} parent=1 // pred_fallthru
      _
    // Predicated region
    $region14: #{gpt_forward.17} parent=1 // pred_check
      _
    $region15: #{gpt_forward.17} parent=1 // pred_check_branch
      %46 = sbr.rel (0) target = $region17
    $region16: #{gpt_forward.17} parent=1 // pred_region
      %47 = dma.done [#allocation4], 128
    $region17: #{gpt_forward.17} parent=1 // pred_fallthru
      _
    // Predicated region
    $region18: #{gpt_forward.17} parent=1 // pred_check
      _
    $region19: #{gpt_forward.17} parent=1 // pred_check_branch
      %49 = sbr.rel (0) target = $region21
    $region20: #{gpt_forward.17} parent=1 // pred_region
      %50 = dma.done [#allocation7], 256
    $region21: #{gpt_forward.17} parent=1 // pred_fallthru
      _
    // Predicated region
    $region22: #{gpt_forward.17} parent=1 // pred_check
      _
    $region23: #{gpt_forward.17} parent=1 // pred_check_branch
      %52 = sbr.rel (0) target = $region25
    $region24: #{gpt_forward.17} parent=1 // pred_region
      %53 = dma.done [#allocation7], 16
    $region25: #{gpt_forward.17} parent=1 // pred_fallthru
      _
    %v55 = vld [vmem:[#allocation3] sm:$0xf]
    %v56 = vld [vmem:[#allocation3 + $0x4] sm:$0xf]
    %v57 = vld [vmem:[#allocation6] sm:$0xf]
    %v58 = vld [vmem:[#allocation6 + $0x4] sm:$0xf]
    %v59 = vld [vmem:[#allocation6 + $0x8] sm:$0xf]
    %v60 = vld [vmem:[#allocation6 + $0xc] sm:$0xf]
    %v63 = vunpack.c.l.b16 %v55
    %v64 = vunpack.c.l.b16 %v56
    %v65 = vpack.c.b16 %v64, %v63
    %v70 = vunpack.c.l.b16 %v57
    %v71 = vunpack.c.l.b16 %v58
    %v72 = vunpack.c.l.b16 %v59
    %v73 = vunpack.c.l.b16 %v60
    %v74 = vpack.c.b16 %v71, %v70
    %v75 = vpack.c.b16 %v73, %v72
    %vm78 = vcmask 261120
    %v80 = vsel %vm78, %v65, 0
    %82 = vmatprep.subr.bf16.mxu0 0
    %83 = vmatpush1.bf16.msra.mxu0 %v74
    %84 = vmatprep.subr.bf16.mxu0 0
    %85 = vmatpush1.bf16.msra.mxu0 %v75
    %86 = vmatprep.subr.bf16.mxu0 0
    %87 = vmatpush1.bf16.msra.mxu0 0
    %88 = vmatprep.subr.bf16.mxu0 0
    %89 = vmatpush1.bf16.msra.mxu0 0
    %90 = vmatprep.subr.bf16.mxu0 0
    %91 = vmatpush1.bf16.msra.mxu0 0
    %92 = vmatprep.subr.bf16.mxu0 0
    %93 = vmatpush1.bf16.msra.mxu0 0
    %94 = vmatprep.subr.bf16.mxu0 0
    %95 = vmatpush1.bf16.msra.mxu0 0
    %96 = vmatprep.subr.bf16.mxu0 0
    %97 = vmatpush1.bf16.msra.mxu0 0
    %98 = vmatprep.subr.bf16.mxu0 0
    %99 = vmatpush1.bf16.msra.mxu0 0
    %100 = vmatprep.subr.bf16.mxu0 0
    %101 = vmatpush1.bf16.msra.mxu0 0
    %102 = vmatprep.subr.bf16.mxu0 0
    %103 = vmatpush1.bf16.msra.mxu0 0
    %104 = vmatprep.subr.bf16.mxu0 0
    %105 = vmatpush1.bf16.msra.mxu0 0
    %106 = vmatprep.subr.bf16.mxu0 0
    %107 = vmatpush1.bf16.msra.mxu0 0
    %108 = vmatprep.subr.bf16.mxu0 0
    %109 = vmatpush1.bf16.msra.mxu0 0
    %110 = vmatprep.subr.bf16.mxu0 0
    %111 = vmatpush1.bf16.msra.mxu0 0
    %112 = vmatprep.subr.bf16.mxu0 0
    %113 = vmatpush1.bf16.msra.mxu0 0
    %114 = vmatprep.mubr.bf16.mxu0 0
    %115 = vmatmul.mubr.bf16.gmra.mrb[0].mxu0 %v80
    %v116 = vpop.f32.mrb[0].mxu0
    %v117 = vadd.f32 0.0, %v116
    %v118 = vpop.f32.mrb[0].mxu0
    %v119 = vpop.f32.mrb[0].mxu0
    %v120 = vadd.f32 0.0, %v119
    %v121 = vpop.f32.mrb[0].mxu0
    %122 = vdwg.mxu0
    %p123 = scmp.eq.s32.totalorder 0, 0
    // Predicated region
    $region26: #{gpt_forward.17} parent=1 // pred_check
      %p124 = pneg %p123
    $region27: #{gpt_forward.17} parent=1 // pred_check_branch
      %126 = sbr.rel (%p124) target = $region29
    $region28: #{gpt_forward.17} parent=1 // pred_region
      %vm127 = vcmask 785408
      %128 = vst.msk [vmem:[#allocation2] sm:$0xff] %vm127, %v117
      %129 = vst.msk [vmem:[#allocation2 + $0x8] sm:$0xff] %vm127, %v120
    $region29: #{gpt_forward.17} parent=1 // pred_fallthru
      _
    %p130 = scmp.gt.s32.totalorder 0, 0
    // Predicated region
    $region30: #{gpt_forward.17} parent=1 // pred_check
      %p131 = pneg %p130
    $region31: #{gpt_forward.17} parent=1 // pred_check_branch
      %133 = sbr.rel (%p131) target = $region33
    $region32: #{gpt_forward.17} parent=1 // pred_region
      %v134 = vld [vmem:[#allocation2] sm:$0xff]
      %v135 = vld [vmem:[#allocation2 + $0x8] sm:$0xff]
      %v136 = vadd.f32 %v134, %v117
      %v137 = vadd.f32 %v135, %v120
      %vm138 = vcmask 785408
      %139 = vst.msk [vmem:[#allocation2] sm:$0xff] %vm138, %v136
      %140 = vst.msk [vmem:[#allocation2 + $0x8] sm:$0xff] %vm138, %v137
    $region33: #{gpt_forward.17} parent=1 // pred_fallthru
      _
    // Predicated region
    $region34: #{gpt_forward.17} parent=1 // pred_check
      %p141 = pneg %p123
    $region35: #{gpt_forward.17} parent=1 // pred_check_branch
      %143 = sbr.rel (%p141) target = $region37
    $region36: #{gpt_forward.17} parent=1 // pred_region
      %v144 = vld [vmem:[#allocation2] sm:$0xff]
      %v145 = vld [vmem:[#allocation2 + $0x8] sm:$0xff]
      %v146 = vld [vmem:[#allocation8] sm:$0x1]
      %v148 = vlaneseq
      %v149 = vshrl.u32 %v148, 7
      %v150 = vsub.s32 0, %v149
      %v151 = vrot.slane %v146, %v150
      %v153 = vadd.f32 %v144, %v151
      %v154 = vadd.f32 %v145, %v151
      %v155 = vpack.c.bf16 %v154, %v153
      %v157 = vunpack.c.l.b16 %v155
      %v158 = vunpack.c.h.b16 %v155
      %v159 = vpack.c.b16 %v157, %v157
      %v160 = vpack.c.b16 %v158, %v158
      %vm163 = vcmask 781312
      %164 = vst.msk [vmem:[#allocation9] sm:$0xf] %vm163, %v159
      %165 = vst.msk [vmem:[#allocation9 + $0x4] sm:$0xf] %vm163, %v160
    $region37: #{gpt_forward.17} parent=1 // pred_fallthru
      _
    // Predicated region
    $region38: #{gpt_forward.17} parent=1 // pred_check
      _
    $region39: #{gpt_forward.17} parent=1 // pred_check_branch
      %167 = sbr.rel (0) target = $region41
    $region40: #{gpt_forward.17} parent=1 // pred_region
      %s169 = ssub.s32 128, 128
      %170 = vsyncadd [#allocation5], %s169
      %s171 = sshll.u32 [#allocation9], 4
      %s172 = int_to_ptr.vmem [resolvable:$true] %s171
      %177 = dma.vmem_to_hbm [thread:$0]  %s172, 128, %s3, [#allocation5], 64, 64, 4
    $region41: #{gpt_forward.17} parent=1 // pred_fallthru
      _
    // Predicated region
    $region42: #{gpt_forward.17} parent=1 // pred_check
      _
    $region43: #{gpt_forward.17} parent=1 // pred_check_branch
      %179 = sbr.rel (0) target = $region45
    $region44: #{gpt_forward.17} parent=1 // pred_region
      %180 = dma.done [#allocation5], 128
    $region45: #{gpt_forward.17} parent=1 // pred_fallthru
      _
    %181 = vsyncpa [#allocation4], 1
    %182 = vsyncpa [#allocation7], 1
    %183 = vsyncpa [#allocation5], 1

// kernel: gpt_forward.19
$region0: #{gpt_forward.19}
  #allocation0 [shape = 'u32[]', space=smem, size = 0x4, offset = 0x4, fixed_abs, tag = 'smem constant byte address 0x4 - core index']
  #allocation1 [shape = 'u32[144,128]{1,0:T(1,128)}', space=vmem, size = 0x12000, scoped, tag = 'internal scratch']
  #allocation2 [shape = 'f32[16,32]{1,0:T(8,128)}', space=vmem, size = 0x2000, scoped, tag = 'scratch operand']
  %s0 = inlined_call_operand.hbm [shape: bf16[16,32], index: 0, kind: input, shape index: {}]
  %s1 = inlined_call_operand.hbm [shape: bf16[32,32], index: 1, kind: input, shape index: {}]
  %s2 = inlined_call_operand.hbm [shape: f32[1,32], index: 2, kind: input, shape index: {}]
  %s3 = inlined_call_operand.hbm [shape: bf16[16,32], index: 3, kind: input, shape index: {}, may-alias: {3,4}]
  %s4 = inlined_call_operand.hbm [shape: bf16[16,32], index: 4, kind: output, shape index: {}, may-alias: {3,4}]
  %s5 = sld [smem:[#allocation0]]
  $region54: #{gpt_forward.19} parent=0
    _
  %s7 = ssub.s32 1, %s5
  %s8 = scalar_select 0, %s7, %s5
  $region1: #{gpt_forward.19} parent=0
    #allocation3 [shape = 'u8[4096]{0}', space=vmem, size = 0x1000, scoped, tag = 'input window, operand 0, single buffered']
    #allocation4 [shape = 's32[1]{0}', space=sflag, size = 0x4, scoped, tag = 'scoped memory for gpt_forward.19']
    #allocation5 [shape = 's32[1]{0}', space=sflag, size = 0x4, scoped, tag = 'scoped memory for gpt_forward.19']
    #allocation6 [shape = 'u8[8192]{0}', space=vmem, size = 0x2000, scoped, tag = 'input window, operand 1, single buffered']
    #allocation7 [shape = 's32[1]{0}', space=sflag, size = 0x4, scoped, tag = 'scoped memory for gpt_forward.19']
    #allocation8 [shape = 'u8[512]{0}', space=vmem, size = 0x400, scoped, tag = 'input window, operand 2, single buffered']
    #allocation9 [shape = 'u8[4096]{0}', space=vmem, size = 0x1000, scoped, tag = 'input window, operand 3, single buffered']
    #allocation10 [shape = 's32[1]{0}', space=sflag, size = 0x4, scoped, tag = 'scoped memory for gpt_forward.19']
    #allocation11 [shape = 'u8[4096]{0}', space=vmem, size = 0x1000, scoped, tag = 'output window, operand 0, single buffered']
    %9 = vsyncpa [#allocation4], 0
    %10 = vsyncpa [#allocation7], 0
    %11 = vsyncpa [#allocation10], 0
    %12 = vsyncpa [#allocation5], 0
    // Predicated region
    $region2: #{gpt_forward.19} parent=1 // pred_check
      _
    $region3: #{gpt_forward.19} parent=1 // pred_check_branch
      %14 = sbr.rel (0) target = $region5
    $region4: #{gpt_forward.19} parent=1 // pred_region
      %s16 = ssub.s32 128, 128
      %17 = vsyncadd [#allocation4], %s16
      %s18 = sshll.u32 [#allocation3], 4
      %s19 = int_to_ptr.vmem [resolvable:$true] %s18
      %24 = dma.hbm_to_vmem [thread:$0]  %s0, 128, %s19, [#allocation4], 64, 64, 4
    $region5: #{gpt_forward.19} parent=1 // pred_fallthru
      _
    // Predicated region
    $region6: #{gpt_forward.19} parent=1 // pred_check
      _
    $region7: #{gpt_forward.19} parent=1 // pred_check_branch
      %26 = sbr.rel (0) target = $region9
    $region8: #{gpt_forward.19} parent=1 // pred_region
      %s28 = ssub.s32 256, 256
      %29 = vsyncadd [#allocation7], %s28
      %s30 = sshll.u32 [#allocation6], 4
      %s31 = int_to_ptr.vmem [resolvable:$true] %s30
      %36 = dma.hbm_to_vmem [thread:$0]  %s1, 256, %s31, [#allocation7], 64, 64, 4
    $region9: #{gpt_forward.19} parent=1 // pred_fallthru
      _
    // Predicated region
    $region10: #{gpt_forward.19} parent=1 // pred_check
      _
    $region11: #{gpt_forward.19} parent=1 // pred_check_branch
      %38 = sbr.rel (0) target = $region13
    $region12: #{gpt_forward.19} parent=1 // pred_region
      %s40 = ssub.s32 16, 16
      %41 = vsyncadd [#allocation7], %s40
      %s43 = sshll.u32 [#allocation8], 4
      %s44 = int_to_ptr.vmem [resolvable:$true] %s43
      %46 = dma.hbm_to_vmem [thread:$0]  %s2, 16, %s44, [#allocation7]
    $region13: #{gpt_forward.19} parent=1 // pred_fallthru
      _
    // Predicated region
    $region14: #{gpt_forward.19} parent=1 // pred_check
      _
    $region15: #{gpt_forward.19} parent=1 // pred_check_branch
      %48 = sbr.rel (0) target = $region17
    $region16: #{gpt_forward.19} parent=1 // pred_region
      %s50 = ssub.s32 128, 128
      %51 = vsyncadd [#allocation10], %s50
      %s52 = sshll.u32 [#allocation9], 4
      %s53 = int_to_ptr.vmem [resolvable:$true] %s52
      %58 = dma.hbm_to_vmem [thread:$0]  %s3, 128, %s53, [#allocation10], 64, 64, 4
    $region17: #{gpt_forward.19} parent=1 // pred_fallthru
      _
    // Predicated region
    $region18: #{gpt_forward.19} parent=1 // pred_check
      _
    $region19: #{gpt_forward.19} parent=1 // pred_check_branch
      %60 = sbr.rel (0) target = $region21
    $region20: #{gpt_forward.19} parent=1 // pred_region
      %61 = dma.done [#allocation4], 128
    $region21: #{gpt_forward.19} parent=1 // pred_fallthru
      _
    // Predicated region
    $region22: #{gpt_forward.19} parent=1 // pred_check
      _
    $region23: #{gpt_forward.19} parent=1 // pred_check_branch
      %63 = sbr.rel (0) target = $region25
    $region24: #{gpt_forward.19} parent=1 // pred_region
      %64 = dma.done [#allocation7], 256
    $region25: #{gpt_forward.19} parent=1 // pred_fallthru
      _
    // Predicated region
    $region26: #{gpt_forward.19} parent=1 // pred_check
      _
    $region27: #{gpt_forward.19} parent=1 // pred_check_branch
      %66 = sbr.rel (0) target = $region29
    $region28: #{gpt_forward.19} parent=1 // pred_region
      %67 = dma.done [#allocation7], 16
    $region29: #{gpt_forward.19} parent=1 // pred_fallthru
      _
    // Predicated region
    $region30: #{gpt_forward.19} parent=1 // pred_check
      _
    $region31: #{gpt_forward.19} parent=1 // pred_check_branch
      %69 = sbr.rel (0) target = $region33
    $region32: #{gpt_forward.19} parent=1 // pred_region
      %70 = dma.done [#allocation10], 128
    $region33: #{gpt_forward.19} parent=1 // pred_fallthru
      _
    %v72 = vld [vmem:[#allocation3] sm:$0xf]
    %v73 = vld [vmem:[#allocation3 + $0x4] sm:$0xf]
    %v74 = vld [vmem:[#allocation6] sm:$0xf]
    %v75 = vld [vmem:[#allocation6 + $0x4] sm:$0xf]
    %v76 = vld [vmem:[#allocation6 + $0x8] sm:$0xf]
    %v77 = vld [vmem:[#allocation6 + $0xc] sm:$0xf]
    %v80 = vunpack.c.l.b16 %v72
    %v81 = vunpack.c.l.b16 %v73
    %v82 = vpack.c.b16 %v81, %v80
    %v87 = vunpack.c.l.b16 %v74
    %v88 = vunpack.c.l.b16 %v75
    %v89 = vunpack.c.l.b16 %v76
    %v90 = vunpack.c.l.b16 %v77
    %v91 = vpack.c.b16 %v88, %v87
    %v92 = vpack.c.b16 %v90, %v89
    %vm95 = vcmask 261120
    %v97 = vsel %vm95, %v82, 0
    %99 = vmatprep.subr.bf16.mxu0 0
    %100 = vmatpush1.bf16.msra.mxu0 %v91
    %101 = vmatprep.subr.bf16.mxu0 0
    %102 = vmatpush1.bf16.msra.mxu0 %v92
    %103 = vmatprep.subr.bf16.mxu0 0
    %104 = vmatpush1.bf16.msra.mxu0 0
    %105 = vmatprep.subr.bf16.mxu0 0
    %106 = vmatpush1.bf16.msra.mxu0 0
    %107 = vmatprep.subr.bf16.mxu0 0
    %108 = vmatpush1.bf16.msra.mxu0 0
    %109 = vmatprep.subr.bf16.mxu0 0
    %110 = vmatpush1.bf16.msra.mxu0 0
    %111 = vmatprep.subr.bf16.mxu0 0
    %112 = vmatpush1.bf16.msra.mxu0 0
    %113 = vmatprep.subr.bf16.mxu0 0
    %114 = vmatpush1.bf16.msra.mxu0 0
    %115 = vmatprep.subr.bf16.mxu0 0
    %116 = vmatpush1.bf16.msra.mxu0 0
    %117 = vmatprep.subr.bf16.mxu0 0
    %118 = vmatpush1.bf16.msra.mxu0 0
    %119 = vmatprep.subr.bf16.mxu0 0
    %120 = vmatpush1.bf16.msra.mxu0 0
    %121 = vmatprep.subr.bf16.mxu0 0
    %122 = vmatpush1.bf16.msra.mxu0 0
    %123 = vmatprep.subr.bf16.mxu0 0
    %124 = vmatpush1.bf16.msra.mxu0 0
    %125 = vmatprep.subr.bf16.mxu0 0
    %126 = vmatpush1.bf16.msra.mxu0 0
    %127 = vmatprep.subr.bf16.mxu0 0
    %128 = vmatpush1.bf16.msra.mxu0 0
    %129 = vmatprep.subr.bf16.mxu0 0
    %130 = vmatpush1.bf16.msra.mxu0 0
    %131 = vmatprep.mubr.bf16.mxu0 0
    %132 = vmatmul.mubr.bf16.gmra.mrb[0].mxu0 %v97
    %v133 = vpop.f32.mrb[0].mxu0
    %v134 = vadd.f32 0.0, %v133
    %v135 = vpop.f32.mrb[0].mxu0
    %v136 = vpop.f32.mrb[0].mxu0
    %v137 = vadd.f32 0.0, %v136
    %v138 = vpop.f32.mrb[0].mxu0
    %139 = vdwg.mxu0
    %p140 = scmp.eq.s32.totalorder 0, 0
    // Predicated region
    $region34: #{gpt_forward.19} parent=1 // pred_check
      %p141 = pneg %p140
    $region35: #{gpt_forward.19} parent=1 // pred_check_branch
      %143 = sbr.rel (%p141) target = $region37
    $region36: #{gpt_forward.19} parent=1 // pred_region
      %144 = vst.msk [vmem:[#allocation2] sm:$0xff] %vm95, %v134
      %145 = vst.msk [vmem:[#allocation2 + $0x8] sm:$0xff] %vm95, %v137
    $region37: #{gpt_forward.19} parent=1 // pred_fallthru
      _
    %p146 = scmp.gt.s32.totalorder 0, 0
    // Predicated region
    $region38: #{gpt_forward.19} parent=1 // pred_check
      %p147 = pneg %p146
    $region39: #{gpt_forward.19} parent=1 // pred_check_branch
      %149 = sbr.rel (%p147) target = $region41
    $region40: #{gpt_forward.19} parent=1 // pred_region
      %v150 = vld [vmem:[#allocation2] sm:$0xff]
      %v151 = vld [vmem:[#allocation2 + $0x8] sm:$0xff]
      %v152 = vadd.f32 %v150, %v134
      %v153 = vadd.f32 %v151, %v137
      %154 = vst.msk [vmem:[#allocation2] sm:$0xff] %vm95, %v152
      %155 = vst.msk [vmem:[#allocation2 + $0x8] sm:$0xff] %vm95, %v153
    $region41: #{gpt_forward.19} parent=1 // pred_fallthru
      _
    // Predicated region
    $region42: #{gpt_forward.19} parent=1 // pred_check
      %p156 = pneg %p140
    $region43: #{gpt_forward.19} parent=1 // pred_check_branch
      %158 = sbr.rel (%p156) target = $region45
    $region44: #{gpt_forward.19} parent=1 // pred_region
      %v159 = vld [vmem:[#allocation2] sm:$0xff]
      %v160 = vld [vmem:[#allocation2 + $0x8] sm:$0xff]
      %v161 = vld [vmem:[#allocation8] sm:$0x1]
      %v163 = vlaneseq
      %v164 = vshrl.u32 %v163, 7
      %v165 = vsub.s32 0, %v164
      %v166 = vrot.slane %v161, %v165
      %v168 = vadd.f32 %v159, %v166
      %v169 = vadd.f32 %v160, %v166
      %v170 = vld [vmem:[#allocation9] sm:$0xf]
      %v171 = vld [vmem:[#allocation9 + $0x4] sm:$0xf]
      %v172 = vunpack.c.l.bf16 %v170
      %v173 = vunpack.c.l.bf16 %v171
      %v174 = vadd.f32 %v168, %v172
      %v175 = vadd.f32 %v169, %v173
      %v176 = vpack.c.bf16 %v175, %v174
      %v178 = vunpack.c.l.b16 %v176
      %v179 = vunpack.c.h.b16 %v176
      %v180 = vpack.c.b16 %v178, %v178
      %v181 = vpack.c.b16 %v179, %v179
      %vm184 = vcmask 257024
      %185 = vst.msk [vmem:[#allocation11] sm:$0xf] %vm184, %v180
      %186 = vst.msk [vmem:[#allocation11 + $0x4] sm:$0xf] %vm184, %v181
    $region45: #{gpt_forward.19} parent=1 // pred_fallthru
      _
    // Predicated region
    $region46: #{gpt_forward.19} parent=1 // pred_check
      _
    $region47: #{gpt_forward.19} parent=1 // pred_check_branch
      %188 = sbr.rel (0) target = $region49
    $region48: #{gpt_forward.19} parent=1 // pred_region
      %s190 = ssub.s32 128, 128
      %191 = vsyncadd [#allocation5], %s190
      %s192 = sshll.u32 [#allocation11], 4
      %s193 = int_to_ptr.vmem [resolvable:$true] %s192
      %198 = dma.vmem_to_hbm [thread:$0]  %s193, 128, %s4, [#allocation5], 64, 64, 4
    $region49: #{gpt_forward.19} parent=1 // pred_fallthru
      _
    // Predicated region
    $region50: #{gpt_forward.19} parent=1 // pred_check
      _
    $region51: #{gpt_forward.19} parent=1 // pred_check_branch
      %200 = sbr.rel (0) target = $region53
    $region52: #{gpt_forward.19} parent=1 // pred_region
      %201 = dma.done [#allocation5], 128
    $region53: #{gpt_forward.19} parent=1 // pred_fallthru
      _
    %202 = vsyncpa [#allocation4], 1
    %203 = vsyncpa [#allocation7], 1
    %204 = vsyncpa [#allocation10], 1
    %205 = vsyncpa [#allocation5], 1

// kernel: gpt_forward.18
$region0: #{gpt_forward.18}
  #allocation0 [shape = 'u32[]', space=smem, size = 0x4, offset = 0x4, fixed_abs, tag = 'smem constant byte address 0x4 - core index']
  #allocation1 [shape = 'u32[144,128]{1,0:T(1,128)}', space=vmem, size = 0x12000, scoped, tag = 'internal scratch']
  #allocation2 [shape = 'f32[8,1]{1,0:T(8,128)}', space=vmem, size = 0x1000, scoped, tag = 'scratch operand']
  #allocation3 [shape = 'f32[8,1]{1,0:T(8,128)}', space=vmem, size = 0x1000, scoped, tag = 'scratch operand']
  #allocation4 [shape = 'f32[8,8]{1,0:T(8,128)}', space=vmem, size = 0x1000, scoped, tag = 'scratch operand']
  %s0 = inlined_call_operand.hbm [shape: bf16[2,4,8,8], index: 0, kind: input, shape index: {}]
  %s1 = inlined_call_operand.hbm [shape: bf16[2,4,8,8], index: 1, kind: input, shape index: {}]
  %s2 = inlined_call_operand.hbm [shape: bf16[2,4,8,8], index: 2, kind: input, shape index: {}]
  %s3 = inlined_call_operand.hbm [shape: bf16[2,4,8,8], index: 3, kind: output, shape index: {}]
  %s4 = sld [smem:[#allocation0]]
  $region73: #{gpt_forward.18} parent=0
    _
  %s6 = ssub.s32 1, %s4
  %s7 = scalar_select 0, %s6, %s4
  $region1: #{gpt_forward.18} parent=0
    #allocation5 [shape = 'u8[4096]{0}', space=vmem, size = 0x1000, scoped, tag = 'input window, operand 0']
    #allocation6 [shape = 's32[2]{0}', space=sflag, size = 0x8, scoped, tag = 'scoped memory for gpt_forward.18']
    #allocation7 [shape = 's32[2]{0}', space=sflag, size = 0x8, scoped, tag = 'scoped memory for gpt_forward.18']
    #allocation8 [shape = 'u8[4096]{0}', space=vmem, size = 0x1000, scoped, tag = 'input window, operand 1']
    #allocation9 [shape = 's32[2]{0}', space=sflag, size = 0x8, scoped, tag = 'scoped memory for gpt_forward.18']
    #allocation10 [shape = 'u8[4096]{0}', space=vmem, size = 0x1000, scoped, tag = 'input window, operand 2']
    #allocation11 [shape = 'u8[4096]{0}', space=vmem, size = 0x1000, scoped, tag = 'output window, operand 0']
    %8 = vsyncpa [#allocation6], 0
    %s9 = scalar_lea.sflag [#allocation6], 1
    %10 = vsyncpa %s9, 0
    %11 = vsyncpa [#allocation9], 0
    %s12 = scalar_lea.sflag [#allocation9], 1
    %13 = vsyncpa %s12, 0
    %14 = vsyncpa [#allocation7], 0
    %s15 = scalar_lea.sflag [#allocation7], 1
    %16 = vsyncpa %s15, 0
    loop: start=0, step=1, limit=10
    $region2: #{gpt_forward.18} parent=1 // loop_pre_header
      _
    $region3: #{gpt_forward.18} parent=1 // loop_header
      %s18 = sphi 0, %s22
      %p19 = scmp.ge.s32.totalorder %s18, 10
      %s25 = sphi 0, %s51
      %s26 = sphi 0, %s47
      %s27 = sphi 0, %s43
      %s28 = sphi 0, %s39
      %s29 = sphi 0, %s25
      %s30 = sphi 0, %s26
      %s31 = sphi 0, %s27
      %s32 = sphi 0, %s28
      %s33 = sphi 0, %s29
      %s34 = sphi 0, %s30
      %s35 = sphi 0, %s31
      %s36 = sphi 0, %s32
      %s58 = sphi 0, %s60
      %s61 = sphi 0, %s58
      %s62 = sphi 0, %s61
      %s78 = sphi 0, %s62
      %s88 = sphi 0, %s90
      %s91 = sphi 0, %s88
      %s92 = sphi 0, %s91
      %s108 = sphi 0, %s92
      %s118 = sphi 0, %s120
      %s121 = sphi 0, %s118
      %s122 = sphi 0, %s121
      %s138 = sphi 0, %s122
      %s148 = sphi 0, %s150
      %s151 = sphi 0, %s148
      %s152 = sphi 0, %s151
      %s168 = sphi 0, %s152
    $region4: #{gpt_forward.18} parent=1 // loop_header_branch
      %21 = sbr.rel (%p19) target = $region8
    $region5: #{gpt_forward.18} parent=1 // loop_body
      %s23 = ssub.s32 %s18, 1
      %s24 = ssub.s32 %s18, 2
      %s37 = sadd.s32 1, %s28
      %p38 = scmp.ge.s32.totalorder %s37, 1
      %s39 = scalar_select %p38, 0, %s37
      %s40 = sadd.s32 1, %s27
      %s41 = scalar_select %p38, %s40, %s27
      %p42 = scmp.ge.s32.totalorder %s41, 1
      %s43 = scalar_select %p42, 0, %s41
      %s44 = sadd.s32 1, %s26
      %s45 = scalar_select %p42, %s44, %s26
      %p46 = scmp.ge.s32.totalorder %s45, 4
      %s47 = scalar_select %p46, 0, %s45
      %s48 = sadd.s32 1, %s25
      %s49 = scalar_select %p46, %s48, %s25
      %p50 = scmp.ge.s32.totalorder %s49, 2
      %s51 = scalar_select %p50, 0, %s49
      %s52 = ssub.s32 %s25, %s51
      %s53 = ssub.s32 %s26, %s47
      %s54 = sor.u32 %s52, %s53
      %s55 = ssub.s32 %s27, %s43
      %s56 = sor.u32 %s54, %s55
      %p57 = scmp.eq.s32.totalorder %s56, 0
      %s59 = sadd.s32 %s58, 1
      %s60 = scalar_select %p57, %s58, %s59
      %p63 = pneg %p57
      %p64 = scmp.eq.s32.totalorder %s18, 7
      %p65 = por %p63, %p64
      %p66 = scmp.ne.s32.totalorder %s58, %s61
      %p67 = scmp.eq.s32.totalorder %s18, 0
      %p68 = por %p66, %p67
      %p69 = scmp.ne.s32.totalorder %s58, %s61
      %p70 = scmp.eq.s32.totalorder %s23, 7
      %p71 = por %p69, %p70
      %p72 = scmp.ne.s32.totalorder %s61, %s62
      %p73 = scmp.eq.s32.totalorder %s23, 0
      %p74 = por %p72, %p73
      %p75 = scmp.ne.s32.totalorder %s61, %s62
      %p76 = scmp.eq.s32.totalorder %s24, 7
      %p77 = por %p75, %p76
      %p79 = scmp.ne.s32.totalorder %s62, %s78
      %p80 = scmp.eq.s32.totalorder %s24, 0
      %p81 = por %p79, %p80
      %s82 = ssub.s32 %s25, %s51
      %s83 = ssub.s32 %s26, %s47
      %s84 = sor.u32 %s82, %s83
      %s85 = ssub.s32 %s28, %s39
      %s86 = sor.u32 %s84, %s85
      %p87 = scmp.eq.s32.totalorder %s86, 0
      %s89 = sadd.s32 %s88, 1
      %s90 = scalar_select %p87, %s88, %s89
      %p93 = pneg %p87
      %p94 = scmp.eq.s32.totalorder %s18, 7
      %p95 = por %p93, %p94
      %p96 = scmp.ne.s32.totalorder %s88, %s91
      %p97 = scmp.eq.s32.totalorder %s18, 0
      %p98 = por %p96, %p97
      %p99 = scmp.ne.s32.totalorder %s88, %s91
      %p100 = scmp.eq.s32.totalorder %s23, 7
      %p101 = por %p99, %p100
      %p102 = scmp.ne.s32.totalorder %s91, %s92
      %p103 = scmp.eq.s32.totalorder %s23, 0
      %p104 = por %p102, %p103
      %p105 = scmp.ne.s32.totalorder %s91, %s92
      %p106 = scmp.eq.s32.totalorder %s24, 7
      %p107 = por %p105, %p106
      %p109 = scmp.ne.s32.totalorder %s92, %s108
      %p110 = scmp.eq.s32.totalorder %s24, 0
      %p111 = por %p109, %p110
      %s112 = ssub.s32 %s25, %s51
      %s113 = ssub.s32 %s26, %s47
      %s114 = sor.u32 %s112, %s113
      %s115 = ssub.s32 %s28, %s39
      %s116 = sor.u32 %s114, %s115
      %p117 = scmp.eq.s32.totalorder %s116, 0
      %s119 = sadd.s32 %s118, 1
      %s120 = scalar_select %p117, %s118, %s119
      %p123 = pneg %p117
      %p124 = scmp.eq.s32.totalorder %s18, 7
      %p125 = por %p123, %p124
      %p126 = scmp.ne.s32.totalorder %s118, %s121
      %p127 = scmp.eq.s32.totalorder %s18, 0
      %p128 = por %p126, %p127
      %p129 = scmp.ne.s32.totalorder %s118, %s121
      %p130 = scmp.eq.s32.totalorder %s23, 7
      %p131 = por %p129, %p130
      %p132 = scmp.ne.s32.totalorder %s121, %s122
      %p133 = scmp.eq.s32.totalorder %s23, 0
      %p134 = por %p132, %p133
      %p135 = scmp.ne.s32.totalorder %s121, %s122
      %p136 = scmp.eq.s32.totalorder %s24, 7
      %p137 = por %p135, %p136
      %p139 = scmp.ne.s32.totalorder %s122, %s138
      %p140 = scmp.eq.s32.totalorder %s24, 0
      %p141 = por %p139, %p140
      %s142 = ssub.s32 %s25, %s51
      %s143 = ssub.s32 %s26, %s47
      %s144 = sor.u32 %s142, %s143
      %s145 = ssub.s32 %s27, %s43
      %s146 = sor.u32 %s144, %s145
      %p147 = scmp.eq.s32.totalorder %s146, 0
      %s149 = sadd.s32 %s148, 1
      %s150 = scalar_select %p147, %s148, %s149
      %p153 = pneg %p147
      %p154 = scmp.eq.s32.totalorder %s18, 7
      %p155 = por %p153, %p154
      %p156 = scmp.ne.s32.totalorder %s148, %s151
      %p157 = scmp.eq.s32.totalorder %s18, 0
      %p158 = por %p156, %p157
      %p159 = scmp.ne.s32.totalorder %s148, %s151
      %p160 = scmp.eq.s32.totalorder %s23, 7
      %p161 = por %p159, %p160
      %p162 = scmp.ne.s32.totalorder %s151, %s152
      %p163 = scmp.eq.s32.totalorder %s23, 0
      %p164 = por %p162, %p163
      %p165 = scmp.ne.s32.totalorder %s151, %s152
      %p166 = scmp.eq.s32.totalorder %s24, 7
      %p167 = por %p165, %p166
      %p169 = scmp.ne.s32.totalorder %s152, %s168
      %p170 = scmp.eq.s32.totalorder %s24, 0
      %p171 = por %p169, %p170
      %p172 = scmp.le.s32.totalorder 1, %s18
      %p173 = scmp.lt.s32.totalorder %s18, 9
      %p174 = pnand %p172, %p173
      %p175 = pneg %p174
      // Predicated region
      $region9: #{gpt_forward.18} parent=5 // pred_check
        _
      $region10: #{gpt_forward.18} parent=5 // pred_check_branch
        %177 = sbr.rel (%p174) target = $region12
      $region11: #{gpt_forward.18} parent=5 // pred_region
        %s178 = ssub.s32 %s18, 1
      $region12: #{gpt_forward.18} parent=5 // pred_fallthru
        _
      %p179 = scmp.lt.s32.totalorder %s18, 8
      // Predicated region
      $region13: #{gpt_forward.18} parent=5 // pred_check
        %p180 = pneg %p179
      $region14: #{gpt_forward.18} parent=5 // pred_check_branch
        %182 = sbr.rel (%p180) target = $region16
      $region15: #{gpt_forward.18} parent=5 // pred_region
        // Predicated region
        $region17: #{gpt_forward.18} parent=15 // pred_check
          %p183 = pneg %p68
        $region18: #{gpt_forward.18} parent=15 // pred_check_branch
          %185 = sbr.rel (%p183) target = $region20
        $region19: #{gpt_forward.18} parent=15 // pred_region
          %s186 = sand.u32 %s58, 1
          %s187 = scalar_lea.sflag [#allocation6], %s186
          %s188 = sand.u32 %s58, 1
          %s189 = smul.addr %s188, 4
          %s190 = scalar_lea.vmem [#allocation5], %s189
          %s192 = ssub.s32 64, 64
          %193 = vsyncadd %s187, %s192
          %s194 = sadd.s32 %s27, %s26
          %s195 = smul.addr %s25, 4
          %s196 = sadd.s32 %s194, %s195
          %s197 = smul.addr %s196, 64
          %s198 = scalar_lea.hbm %s0, %s197
          %s200 = sshll.u32 %s190, 4
          %s201 = int_to_ptr.vmem [resolvable:$true] %s200
          %203 = dma.hbm_to_vmem [thread:$0]  %s198, 64, %s201, %s187
        $region20: #{gpt_forward.18} parent=15 // pred_fallthru
          _
        // Predicated region
        $region21: #{gpt_forward.18} parent=15 // pred_check
          %p204 = pneg %p98
        $region22: #{gpt_forward.18} parent=15 // pred_check_branch
          %206 = sbr.rel (%p204) target = $region24
        $region23: #{gpt_forward.18} parent=15 // pred_region
          %s207 = sand.u32 %s18, 1
          %s208 = scalar_lea.sflag [#allocation9], %s207
          %s209 = sand.u32 %s88, 1
          %s210 = smul.addr %s209, 4
          %s211 = scalar_lea.vmem [#allocation8], %s210
          %s213 = ssub.s32 64, 64
          %214 = vsyncadd %s208, %s213
          %s215 = sadd.s32 %s28, %s26
          %s216 = smul.addr %s25, 4
          %s217 = sadd.s32 %s215, %s216
          %s218 = smul.addr %s217, 64
          %s219 = scalar_lea.hbm %s1, %s218
          %s221 = sshll.u32 %s211, 4
          %s222 = int_to_ptr.vmem [resolvable:$true] %s221
          %224 = dma.hbm_to_vmem [thread:$0]  %s219, 64, %s222, %s208
        $region24: #{gpt_forward.18} parent=15 // pred_fallthru
          _
        // Predicated region
        $region25: #{gpt_forward.18} parent=15 // pred_check
          %p225 = pneg %p128
        $region26: #{gpt_forward.18} parent=15 // pred_check_branch
          %227 = sbr.rel (%p225) target = $region28
        $region27: #{gpt_forward.18} parent=15 // pred_region
          %s228 = sand.u32 %s18, 1
          %s229 = scalar_lea.sflag [#allocation9], %s228
          %s230 = sand.u32 %s118, 1
          %s231 = smul.addr %s230, 4
          %s232 = scalar_lea.vmem [#allocation10], %s231
          %s234 = ssub.s32 64, 64
          %235 = vsyncadd %s229, %s234
          %s236 = sadd.s32 %s28, %s26
          %s237 = smul.addr %s25, 4
          %s238 = sadd.s32 %s236, %s237
          %s239 = smul.addr %s238, 64
          %s240 = scalar_lea.hbm %s2, %s239
          %s242 = sshll.u32 %s232, 4
          %s243 = int_to_ptr.vmem [resolvable:$true] %s242
          %245 = dma.hbm_to_vmem [thread:$0]  %s240, 64, %s243, %s229
        $region28: #{gpt_forward.18} parent=15 // pred_fallthru
          _
      $region16: #{gpt_forward.18} parent=5 // pred_fallthru
        _
      %p246 = scmp.le.s32.totalorder 1, %s18
      %p247 = scmp.lt.s32.totalorder %s18, 9
      %p248 = pnand %p246, %p247
      %p249 = pneg %p248
      // Predicated region
      $region29: #{gpt_forward.18} parent=5 // pred_check
        _
      $region30: #{gpt_forward.18} parent=5 // pred_check_branch
        %251 = sbr.rel (%p248) target = $region32
      $region31: #{gpt_forward.18} parent=5 // pred_region
        %s252 = ssub.s32 %s18, 1
        %s253 = sand.u32 %s61, 1
        %s254 = scalar_lea.sflag [#allocation6], %s253
        %s255 = sand.u32 %s61, 1
        %s256 = smul.addr %s255, 4
        %s257 = scalar_lea.vmem [#allocation5], %s256
        // Predicated region
        $region33: #{gpt_forward.18} parent=31 // pred_check
          %p258 = pneg %p74
        $region34: #{gpt_forward.18} parent=31 // pred_check_branch
          %260 = sbr.rel (%p258) target = $region36
        $region35: #{gpt_forward.18} parent=31 // pred_region
          %261 = dma.done %s254, 64
        $region36: #{gpt_forward.18} parent=31 // pred_fallthru
          _
        %s262 = sand.u32 %s23, 1
        %s263 = scalar_lea.sflag [#allocation9], %s262
        %s264 = sand.u32 %s91, 1
        %s265 = smul.addr %s264, 4
        %s266 = scalar_lea.vmem [#allocation8], %s265
        // Predicated region
        $region37: #{gpt_forward.18} parent=31 // pred_check
          %p267 = pneg %p104
        $region38: #{gpt_forward.18} parent=31 // pred_check_branch
          %269 = sbr.rel (%p267) target = $region40
        $region39: #{gpt_forward.18} parent=31 // pred_region
          %270 = dma.done %s263, 64
        $region40: #{gpt_forward.18} parent=31 // pred_fallthru
          _
        %s271 = sand.u32 %s23, 1
        %s272 = scalar_lea.sflag [#allocation9], %s271
        %s273 = sand.u32 %s121, 1
        %s274 = smul.addr %s273, 4
        %s275 = scalar_lea.vmem [#allocation10], %s274
        // Predicated region
        $region41: #{gpt_forward.18} parent=31 // pred_check
          %p276 = pneg %p134
        $region42: #{gpt_forward.18} parent=31 // pred_check_branch
          %278 = sbr.rel (%p276) target = $region44
        $region43: #{gpt_forward.18} parent=31 // pred_region
          %279 = dma.done %s272, 64
        $region44: #{gpt_forward.18} parent=31 // pred_fallthru
          _
        %s280 = sand.u32 %s61, 1
        %s281 = scalar_lea.sflag [#allocation6], %s280
        %s282 = sand.u32 %s61, 1
        %s283 = smul.addr %s282, 4
        %s284 = scalar_lea.vmem [#allocation5], %s283
        %p285 = pneg %p74
        %p286 = pneg %p71
        %s287 = sand.u32 %s23, 1
        %s288 = scalar_lea.sflag [#allocation9], %s287
        %s289 = sand.u32 %s91, 1
        %s290 = smul.addr %s289, 4
        %s291 = scalar_lea.vmem [#allocation8], %s290
        %p292 = pneg %p104
        %p293 = pneg %p101
        %s294 = sand.u32 %s23, 1
        %s295 = scalar_lea.sflag [#allocation9], %s294
        %s296 = sand.u32 %s121, 1
        %s297 = smul.addr %s296, 4
        %s298 = scalar_lea.vmem [#allocation10], %s297
        %p299 = pneg %p134
        %p300 = pneg %p131
        %p301 = pneg %p164
        %p302 = pneg %p161
        %s303 = sand.u32 %s151, 1
        %s304 = scalar_lea.sflag [#allocation7], %s303
        %s305 = sand.u32 %s151, 1
        %s306 = smul.addr %s305, 4
        %s307 = scalar_lea.vmem [#allocation11], %s306
        %p309 = scmp.eq.s32.totalorder %s32, 0
        // Predicated region
        $region45: #{gpt_forward.18} parent=31 // pred_check
          %p310 = pneg %p309
        $region46: #{gpt_forward.18} parent=31 // pred_check_branch
          %312 = sbr.rel (%p310) target = $region48
        $region47: #{gpt_forward.18} parent=31 // pred_region
          %vm313 = vcmask 7168
          %314 = vst.msk [vmem:[#allocation2] sm:$0xff] %vm313, -1e+30
          %315 = vst.msk [vmem:[#allocation3] sm:$0xff] %vm313, 0.0
          %vm316 = vcmask 64512
          %317 = vst.msk [vmem:[#allocation4] sm:$0xff] %vm316, 0.0
        $region48: #{gpt_forward.18} parent=31 // pred_fallthru
          _
        %s318 = smul.u32 %s31, 8
        %s319 = sadd.s32 %s318, 7
        %s320 = smul.u32 %s32, 8
        %s321 = sadd.s32 %s320, 7
        %p322 = scmp.le.s32.totalorder %s321, %s318
        // Predicated region
        $region49: #{gpt_forward.18} parent=31 // pred_check
          %p323 = pneg %p322
        $region50: #{gpt_forward.18} parent=31 // pred_check_branch
          %325 = sbr.rel (%p323) target = $region52
        $region51: #{gpt_forward.18} parent=31 // pred_region
          %v326 = vld [vmem:[%s257] sm:$0xf]
          %v327 = vld [vmem:[%s266] sm:$0xf]
          %v328 = vld [vmem:[%s275] sm:$0xf]
          %vm329 = vcmask 64512
          %v331 = vsel %vm329, %v326, 0
          %v334 = vsel %vm329, %v327, 0
          %336 = vmatprep.subr.bf16.mxu0 0
          %337 = vmatpush1.bf16.xpose.msra.mxu0 %v334
          %338 = vmatprep.subr.bf16.mxu0 0
          %339 = vmatpush1.bf16.xpose.msra.mxu0 0
          %340 = vmatprep.subr.bf16.mxu0 0
          %341 = vmatpush1.bf16.xpose.msra.mxu0 0
          %342 = vmatprep.subr.bf16.mxu0 0
          %343 = vmatpush1.bf16.xpose.msra.mxu0 0
          %344 = vmatprep.subr.bf16.mxu0 0
          %345 = vmatpush1.bf16.xpose.msra.mxu0 0
          %346 = vmatprep.subr.bf16.mxu0 0
          %347 = vmatpush1.bf16.xpose.msra.mxu0 0
          %348 = vmatprep.subr.bf16.mxu0 0
          %349 = vmatpush1.bf16.xpose.msra.mxu0 0
          %350 = vmatprep.subr.bf16.mxu0 0
          %351 = vmatpush1.bf16.xpose.msra.mxu0 0
          %352 = vmatprep.subr.bf16.mxu0 0
          %353 = vmatpush1.bf16.xpose.msra.mxu0 0
          %354 = vmatprep.subr.bf16.mxu0 0
          %355 = vmatpush1.bf16.xpose.msra.mxu0 0
          %356 = vmatprep.subr.bf16.mxu0 0
          %357 = vmatpush1.bf16.xpose.msra.mxu0 0
          %358 = vmatprep.subr.bf16.mxu0 0
          %359 = vmatpush1.bf16.xpose.msra.mxu0 0
          %360 = vmatprep.subr.bf16.mxu0 0
          %361 = vmatpush1.bf16.xpose.msra.mxu0 0
          %362 = vmatprep.subr.bf16.mxu0 0
          %363 = vmatpush1.bf16.xpose.msra.mxu0 0
          %364 = vmatprep.subr.bf16.mxu0 0
          %365 = vmatpush1.bf16.xpose.msra.mxu0 0
          %366 = vmatprep.subr.bf16.mxu0 0
          %367 = vmatpush1.bf16.xpose.msra.mxu0 0
          %368 = vmatprep.mubr.bf16.mxu0 0
          %369 = vmatmul.mubr.bf16.gmra.mrb[0].mxu0 %v331
          %v370 = vpop.f32.mrb[0].mxu0
          %v371 = vadd.f32 0.0, %v370
          %v372 = vpop.f32.mrb[0].mxu0
          %v373 = vpop.f32.mrb[0].mxu0
          %v374 = vpop.f32.mrb[0].mxu0
          %375 = vdwg.mxu0
          %v376 = vmul.f32 %v371, 0.35355338
          %v377 = vld [vmem:[#allocation2] sm:$0xff]
          %v378 = vsel %vm329, %v376, -inf
          %379 = vmax.xlane.f32.xlu0 %v378
          %v380 = vpop.xlane.xlu0 %379
          %v381 = vmax.f32 %v377, %v380
          %v382 = vsub.f32 %v377, %v381
          %v383 = vmul.f32 %v382, 1.442695
          %v384 = vpow.pop %v383
          %386 = vset.pattern.permute.xlu0 0
          %387 = vperm.xlu0 %386, %v381
          %v388 = vpop.permute.xlu0 %387
          %v390 = vsub.f32 %v376, %v388
          %v391 = vmul.f32 %v390, 1.442695
          %v392 = vpow.pop %v391
          %v393 = vld [vmem:[#allocation3] sm:$0xff]
          %v394 = vmul.f32 %v384, %v393
          %v395 = vsel %vm329, %v392, 0.0
          %396 = vadd.xlane.f32.xlu0 %v395
          %v397 = vpop.xlane.xlu0 %396
          %v398 = vadd.f32 %v394, %v397
          %vm399 = vcmask 7168
          %400 = vst.msk [vmem:[#allocation3] sm:$0xff] %vm399, %v398
          %v401 = vld [vmem:[#allocation4] sm:$0xff]
          %403 = vset.pattern.permute.xlu0 0
          %404 = vperm.xlu0 %403, %v384
          %v405 = vpop.permute.xlu0 %404
          %v407 = vmul.f32 %v405, %v401
          %v408 = vpack.c.bf16 %v392, %v392
          %v410 = vsel %vm329, %v408, 0
          %vm412 = vcmask 1043456
          %v414 = vsel %vm412, %v328, 0
          %416 = vmatprep.subr.bf16.mxu0 0
          %417 = vmatpush1.bf16.msra.mxu0 %v414
          %418 = vmatprep.subr.bf16.mxu0 0
          %419 = vmatpush1.bf16.msra.mxu0 0
          %420 = vmatprep.subr.bf16.mxu0 0
          %421 = vmatpush1.bf16.msra.mxu0 0
          %422 = vmatprep.subr.bf16.mxu0 0
          %423 = vmatpush1.bf16.msra.mxu0 0
          %424 = vmatprep.subr.bf16.mxu0 0
          %425 = vmatpush1.bf16.msra.mxu0 0
          %426 = vmatprep.subr.bf16.mxu0 0
          %427 = vmatpush1.bf16.msra.mxu0 0
          %428 = vmatprep.subr.bf16.mxu0 0
          %429 = vmatpush1.bf16.msra.mxu0 0
          %430 = vmatprep.subr.bf16.mxu0 0
          %431 = vmatpush1.bf16.msra.mxu0 0
          %432 = vmatprep.subr.bf16.mxu0 0
          %433 = vmatpush1.bf16.msra.mxu0 0
          %434 = vmatprep.subr.bf16.mxu0 0
          %435 = vmatpush1.bf16.msra.mxu0 0
          %436 = vmatprep.subr.bf16.mxu0 0
          %437 = vmatpush1.bf16.msra.mxu0 0
          %438 = vmatprep.subr.bf16.mxu0 0
          %439 = vmatpush1.bf16.msra.mxu0 0
          %440 = vmatprep.subr.bf16.mxu0 0
          %441 = vmatpush1.bf16.msra.mxu0 0
          %442 = vmatprep.subr.bf16.mxu0 0
          %443 = vmatpush1.bf16.msra.mxu0 0
          %444 = vmatprep.subr.bf16.mxu0 0
          %445 = vmatpush1.bf16.msra.mxu0 0
          %446 = vmatprep.subr.bf16.mxu0 0
          %447 = vmatpush1.bf16.msra.mxu0 0
          %448 = vmatprep.mubr.bf16.mxu0 0
          %449 = vmatmul.mubr.bf16.gmra.mrb[0].mxu0 %v410
          %v450 = vpop.f32.mrb[0].mxu0
          %v451 = vadd.f32 0.0, %v450
          %v452 = vpop.f32.mrb[0].mxu0
          %v453 = vpop.f32.mrb[0].mxu0
          %v454 = vpop.f32.mrb[0].mxu0
          %455 = vdwg.mxu0
          %v456 = vadd.f32 %v407, %v451
          %457 = vst.msk [vmem:[#allocation4] sm:$0xff] %vm329, %v456
          %458 = vst.msk [vmem:[#allocation2] sm:$0xff] %vm399, %v381
        $region52: #{gpt_forward.18} parent=31 // pred_fallthru
          _
        %p459 = scmp.le.s32.totalorder %s320, %s319
        %p460 = scmp.gt.s32.totalorder %s321, %s318
        %p461 = pnand %p459, %p460
        %p462 = pneg %p461
        // Predicated region
        $region53: #{gpt_forward.18} parent=31 // pred_check
          _
        $region54: #{gpt_forward.18} parent=31 // pred_check_branch
          %464 = sbr.rel (%p461) target = $region56
        $region55: #{gpt_forward.18} parent=31 // pred_region
          %v465 = vld [vmem:[%s257] sm:$0xf]
          %v466 = vld [vmem:[%s266] sm:$0xf]
          %v467 = vld [vmem:[%s275] sm:$0xf]
          %vm468 = vcmask 64512
          %v470 = vsel %vm468, %v465, 0
          %v473 = vsel %vm468, %v466, 0
          %475 = vmatprep.subr.bf16.mxu0 0
          %476 = vmatpush1.bf16.xpose.msra.mxu0 %v473
          %477 = vmatprep.subr.bf16.mxu0 0
          %478 = vmatpush1.bf16.xpose.msra.mxu0 0
          %479 = vmatprep.subr.bf16.mxu0 0
          %480 = vmatpush1.bf16.xpose.msra.mxu0 0
          %481 = vmatprep.subr.bf16.mxu0 0
          %482 = vmatpush1.bf16.xpose.msra.mxu0 0
          %483 = vmatprep.subr.bf16.mxu0 0
          %484 = vmatpush1.bf16.xpose.msra.mxu0 0
          %485 = vmatprep.subr.bf16.mxu0 0
          %486 = vmatpush1.bf16.xpose.msra.mxu0 0
          %487 = vmatprep.subr.bf16.mxu0 0
          %488 = vmatpush1.bf16.xpose.msra.mxu0 0
          %489 = vmatprep.subr.bf16.mxu0 0
          %490 = vmatpush1.bf16.xpose.msra.mxu0 0
          %491 = vmatprep.subr.bf16.mxu0 0
          %492 = vmatpush1.bf16.xpose.msra.mxu0 0
          %493 = vmatprep.subr.bf16.mxu0 0
          %494 = vmatpush1.bf16.xpose.msra.mxu0 0
          %495 = vmatprep.subr.bf16.mxu0 0
          %496 = vmatpush1.bf16.xpose.msra.mxu0 0
          %497 = vmatprep.subr.bf16.mxu0 0
          %498 = vmatpush1.bf16.xpose.msra.mxu0 0
          %499 = vmatprep.subr.bf16.mxu0 0
          %500 = vmatpush1.bf16.xpose.msra.mxu0 0
          %501 = vmatprep.subr.bf16.mxu0 0
          %502 = vmatpush1.bf16.xpose.msra.mxu0 0
          %503 = vmatprep.subr.bf16.mxu0 0
          %504 = vmatpush1.bf16.xpose.msra.mxu0 0
          %505 = vmatprep.subr.bf16.mxu0 0
          %506 = vmatpush1.bf16.xpose.msra.mxu0 0
          %507 = vmatprep.mubr.bf16.mxu0 0
          %508 = vmatmul.mubr.bf16.gmra.mrb[0].mxu0 %v470
          %v509 = vpop.f32.mrb[0].mxu0
          %v510 = vadd.f32 0.0, %v509
          %v511 = vpop.f32.mrb[0].mxu0
          %v512 = vpop.f32.mrb[0].mxu0
          %v513 = vpop.f32.mrb[0].mxu0
          %514 = vdwg.mxu0
          %v515 = vmul.f32 %v510, 0.35355338
          %v516 = vlaneseq
          %v517 = vshrl.u32 %v516, 7
          %v518 = vstv %s318
          %v519 = vadd.s32 %v518, %v517
          %v520 = vlaneseq
          %v521 = vand.u32 %v520, 127
          %v522 = vstv %s320
          %v523 = vadd.s32 %v522, %v521
          %vm524 = vcmp.le.s32.totalorder %v523, %v519
          %v525 = vsel %vm524, %v515, -1e+30
          %v526 = vld [vmem:[#allocation2] sm:$0xff]
          %v527 = vsel %vm468, %v525, -inf
          %528 = vmax.xlane.f32.xlu0 %v527
          %v529 = vpop.xlane.xlu0 %528
          %v530 = vmax.f32 %v526, %v529
          %v531 = vsub.f32 %v526, %v530
          %v532 = vmul.f32 %v531, 1.442695
          %v533 = vpow.pop %v532
          %535 = vset.pattern.permute.xlu0 0
          %536 = vperm.xlu0 %535, %v530
          %v537 = vpop.permute.xlu0 %536
          %v539 = vsub.f32 %v525, %v537
          %v540 = vmul.f32 %v539, 1.442695
          %v541 = vpow.pop %v540
          %v542 = vld [vmem:[#allocation3] sm:$0xff]
          %v543 = vmul.f32 %v533, %v542
          %v544 = vsel %vm468, %v541, 0.0
          %545 = vadd.xlane.f32.xlu0 %v544
          %v546 = vpop.xlane.xlu0 %545
          %v547 = vadd.f32 %v543, %v546
          %vm548 = vcmask 7168
          %549 = vst.msk [vmem:[#allocation3] sm:$0xff] %vm548, %v547
          %v550 = vld [vmem:[#allocation4] sm:$0xff]
          %552 = vset.pattern.permute.xlu0 0
          %553 = vperm.xlu0 %552, %v533
          %v554 = vpop.permute.xlu0 %553
          %v556 = vmul.f32 %v554, %v550
          %v557 = vpack.c.bf16 %v541, %v541
          %v559 = vsel %vm468, %v557, 0
          %vm561 = vcmask 1043456
          %v563 = vsel %vm561, %v467, 0
          %565 = vmatprep.subr.bf16.mxu0 0
          %566 = vmatpush1.bf16.msra.mxu0 %v563
          %567 = vmatprep.subr.bf16.mxu0 0
          %568 = vmatpush1.bf16.msra.mxu0 0
          %569 = vmatprep.subr.bf16.mxu0 0
          %570 = vmatpush1.bf16.msra.mxu0 0
          %571 = vmatprep.subr.bf16.mxu0 0
          %572 = vmatpush1.bf16.msra.mxu0 0
          %573 = vmatprep.subr.bf16.mxu0 0
          %574 = vmatpush1.bf16.msra.mxu0 0
          %575 = vmatprep.subr.bf16.mxu0 0
          %576 = vmatpush1.bf16.msra.mxu0 0
          %577 = vmatprep.subr.bf16.mxu0 0
          %578 = vmatpush1.bf16.msra.mxu0 0
          %579 = vmatprep.subr.bf16.mxu0 0
          %580 = vmatpush1.bf16.msra.mxu0 0
          %581 = vmatprep.subr.bf16.mxu0 0
          %582 = vmatpush1.bf16.msra.mxu0 0
          %583 = vmatprep.subr.bf16.mxu0 0
          %584 = vmatpush1.bf16.msra.mxu0 0
          %585 = vmatprep.subr.bf16.mxu0 0
          %586 = vmatpush1.bf16.msra.mxu0 0
          %587 = vmatprep.subr.bf16.mxu0 0
          %588 = vmatpush1.bf16.msra.mxu0 0
          %589 = vmatprep.subr.bf16.mxu0 0
          %590 = vmatpush1.bf16.msra.mxu0 0
          %591 = vmatprep.subr.bf16.mxu0 0
          %592 = vmatpush1.bf16.msra.mxu0 0
          %593 = vmatprep.subr.bf16.mxu0 0
          %594 = vmatpush1.bf16.msra.mxu0 0
          %595 = vmatprep.subr.bf16.mxu0 0
          %596 = vmatpush1.bf16.msra.mxu0 0
          %597 = vmatprep.mubr.bf16.mxu0 0
          %598 = vmatmul.mubr.bf16.gmra.mrb[0].mxu0 %v559
          %v599 = vpop.f32.mrb[0].mxu0
          %v600 = vadd.f32 0.0, %v599
          %v601 = vpop.f32.mrb[0].mxu0
          %v602 = vpop.f32.mrb[0].mxu0
          %v603 = vpop.f32.mrb[0].mxu0
          %604 = vdwg.mxu0
          %v605 = vadd.f32 %v556, %v600
          %606 = vst.msk [vmem:[#allocation4] sm:$0xff] %vm468, %v605
          %607 = vst.msk [vmem:[#allocation2] sm:$0xff] %vm548, %v530
        $region56: #{gpt_forward.18} parent=31 // pred_fallthru
          _
        // Predicated region
        $region57: #{gpt_forward.18} parent=31 // pred_check
          %p608 = pneg %p309
        $region58: #{gpt_forward.18} parent=31 // pred_check_branch
          %610 = sbr.rel (%p608) target = $region60
        $region59: #{gpt_forward.18} parent=31 // pred_region
          %v611 = vld [vmem:[#allocation3] sm:$0xff]
          %v612 = vrcp.pop %v611
          %v613 = vld [vmem:[#allocation4] sm:$0xff]
          %615 = vset.pattern.permute.xlu0 0
          %616 = vperm.xlu0 %615, %v612
          %v617 = vpop.permute.xlu0 %616
          %v619 = vmul.f32 %v613, %v617
          %v620 = vpack.c.bf16 %v619, %v619
          %vm621 = vcmask 60416
          %622 = vst.msk [vmem:[%s307] sm:$0xf] %vm621, %v620
        $region60: #{gpt_forward.18} parent=31 // pred_fallthru
          _
        %s623 = sand.u32 %s151, 1
        %s624 = scalar_lea.sflag [#allocation7], %s623
        %s625 = sand.u32 %s151, 1
        %s626 = smul.addr %s625, 4
        %s627 = scalar_lea.vmem [#allocation11], %s626
        // Predicated region
        $region61: #{gpt_forward.18} parent=31 // pred_check
          %p628 = pneg %p161
        $region62: #{gpt_forward.18} parent=31 // pred_check_branch
          %630 = sbr.rel (%p628) target = $region64
        $region63: #{gpt_forward.18} parent=31 // pred_region
          %s632 = ssub.s32 64, 64
          %633 = vsyncadd %s624, %s632
          %s634 = sadd.s32 %s31, %s30
          %s635 = smul.addr %s29, 4
          %s636 = sadd.s32 %s634, %s635
          %s637 = smul.addr %s636, 64
          %s638 = scalar_lea.hbm %s3, %s637
          %s640 = sshll.u32 %s627, 4
          %s641 = int_to_ptr.vmem [resolvable:$true] %s640
          %643 = dma.vmem_to_hbm [thread:$0]  %s641, 64, %s638, %s624
        $region64: #{gpt_forward.18} parent=31 // pred_fallthru
          _
      $region32: #{gpt_forward.18} parent=5 // pred_fallthru
        _
      %p644 = scmp.le.s32.totalorder 2, %s18
      // Predicated region
      $region65: #{gpt_forward.18} parent=5 // pred_check
        %p645 = pneg %p644
      $region66: #{gpt_forward.18} parent=5 // pred_check_branch
        %647 = sbr.rel (%p645) target = $region68
      $region67: #{gpt_forward.18} parent=5 // pred_region
        %s648 = ssub.s32 %s18, 2
        // Predicated region
        $region69: #{gpt_forward.18} parent=67 // pred_check
          %p649 = pneg %p167
        $region70: #{gpt_forward.18} parent=67 // pred_check_branch
          %651 = sbr.rel (%p649) target = $region72
        $region71: #{gpt_forward.18} parent=67 // pred_region
          %s652 = sand.u32 %s152, 1
          %s653 = scalar_lea.sflag [#allocation7], %s652
          %s654 = sand.u32 %s152, 1
          %s655 = smul.addr %s654, 4
          %s656 = scalar_lea.vmem [#allocation11], %s655
          %657 = dma.done %s653, 64
        $region72: #{gpt_forward.18} parent=67 // pred_fallthru
          _
      $region68: #{gpt_forward.18} parent=5 // pred_fallthru
        _
    $region6: #{gpt_forward.18} parent=1 // loop_footer
      %s22 = sadd.s32 1, %s18
    $region7: #{gpt_forward.18} parent=1 // loop_footer_branch
      %17 = sbr.rel target = $region3
    $region8: #{gpt_forward.18} parent=1 // loop_exit
      _
    %658 = vsyncpa [#allocation6], 1
    %s659 = scalar_lea.sflag [#allocation6], 1
    %660 = vsyncpa %s659, 1
    %661 = vsyncpa [#allocation9], 1
    %s662 = scalar_lea.sflag [#allocation9], 1
    %663 = vsyncpa %s662, 1
    %664 = vsyncpa [#allocation7], 1
    %s665 = scalar_lea.sflag [#allocation7], 1
    %666 = vsyncpa %s665, 1

// kernel: gpt_forward.21
$region0: #{gpt_forward.21}
  #allocation0 [shape = 'u32[]', space=smem, size = 0x4, offset = 0x4, fixed_abs, tag = 'smem constant byte address 0x4 - core index']
  #allocation1 [shape = 'u32[144,128]{1,0:T(1,128)}', space=vmem, size = 0x12000, scoped, tag = 'internal scratch']
  #allocation2 [shape = 'f32[16,128]{1,0:T(8,128)}', space=vmem, size = 0x2000, scoped, tag = 'scratch operand']
  %s0 = inlined_call_operand.hbm [shape: bf16[16,32], index: 0, kind: input, shape index: {}]
  %s1 = inlined_call_operand.hbm [shape: bf16[32,128], index: 1, kind: input, shape index: {}]
  %s2 = inlined_call_operand.hbm [shape: f32[1,128], index: 2, kind: input, shape index: {}]
  %s3 = inlined_call_operand.hbm [shape: bf16[16,128], index: 3, kind: output, shape index: {}]
  %s4 = sld [smem:[#allocation0]]
  $region46: #{gpt_forward.21} parent=0
    _
  %s6 = ssub.s32 1, %s4
  %s7 = scalar_select 0, %s6, %s4
  $region1: #{gpt_forward.21} parent=0
    #allocation3 [shape = 'u8[4096]{0}', space=vmem, size = 0x1000, scoped, tag = 'input window, operand 0, single buffered']
    #allocation4 [shape = 's32[1]{0}', space=sflag, size = 0x4, scoped, tag = 'scoped memory for gpt_forward.21']
    #allocation5 [shape = 's32[1]{0}', space=sflag, size = 0x4, scoped, tag = 'scoped memory for gpt_forward.21']
    #allocation6 [shape = 'u8[8192]{0}', space=vmem, size = 0x2000, scoped, tag = 'input window, operand 1, single buffered']
    #allocation7 [shape = 's32[1]{0}', space=sflag, size = 0x4, scoped, tag = 'scoped memory for gpt_forward.21']
    #allocation8 [shape = 'u8[512]{0}', space=vmem, size = 0x400, scoped, tag = 'input window, operand 2, single buffered']
    #allocation9 [shape = 'u8[4096]{0}', space=vmem, size = 0x1000, scoped, tag = 'output window, operand 0, single buffered']
    %8 = vsyncpa [#allocation4], 0
    %9 = vsyncpa [#allocation7], 0
    %10 = vsyncpa [#allocation5], 0
    // Predicated region
    $region2: #{gpt_forward.21} parent=1 // pred_check
      _
    $region3: #{gpt_forward.21} parent=1 // pred_check_branch
      %12 = sbr.rel (0) target = $region5
    $region4: #{gpt_forward.21} parent=1 // pred_region
      %s14 = ssub.s32 128, 128
      %15 = vsyncadd [#allocation4], %s14
      %s16 = sshll.u32 [#allocation3], 4
      %s17 = int_to_ptr.vmem [resolvable:$true] %s16
      %22 = dma.hbm_to_vmem [thread:$0]  %s0, 128, %s17, [#allocation4], 64, 64, 4
    $region5: #{gpt_forward.21} parent=1 // pred_fallthru
      _
    // Predicated region
    $region6: #{gpt_forward.21} parent=1 // pred_check
      _
    $region7: #{gpt_forward.21} parent=1 // pred_check_branch
      %24 = sbr.rel (0) target = $region9
    $region8: #{gpt_forward.21} parent=1 // pred_region
      %s26 = ssub.s32 256, 256
      %27 = vsyncadd [#allocation7], %s26
      %s28 = sshll.u32 [#allocation6], 4
      %s29 = int_to_ptr.vmem [resolvable:$true] %s28
      %34 = dma.hbm_to_vmem [thread:$0]  %s1, 256, %s29, [#allocation7], 64, 64, 4
    $region9: #{gpt_forward.21} parent=1 // pred_fallthru
      _
    // Predicated region
    $region10: #{gpt_forward.21} parent=1 // pred_check
      _
    $region11: #{gpt_forward.21} parent=1 // pred_check_branch
      %36 = sbr.rel (0) target = $region13
    $region12: #{gpt_forward.21} parent=1 // pred_region
      %s38 = ssub.s32 16, 16
      %39 = vsyncadd [#allocation7], %s38
      %s41 = sshll.u32 [#allocation8], 4
      %s42 = int_to_ptr.vmem [resolvable:$true] %s41
      %44 = dma.hbm_to_vmem [thread:$0]  %s2, 16, %s42, [#allocation7]
    $region13: #{gpt_forward.21} parent=1 // pred_fallthru
      _
    // Predicated region
    $region14: #{gpt_forward.21} parent=1 // pred_check
      _
    $region15: #{gpt_forward.21} parent=1 // pred_check_branch
      %46 = sbr.rel (0) target = $region17
    $region16: #{gpt_forward.21} parent=1 // pred_region
      %47 = dma.done [#allocation4], 128
    $region17: #{gpt_forward.21} parent=1 // pred_fallthru
      _
    // Predicated region
    $region18: #{gpt_forward.21} parent=1 // pred_check
      _
    $region19: #{gpt_forward.21} parent=1 // pred_check_branch
      %49 = sbr.rel (0) target = $region21
    $region20: #{gpt_forward.21} parent=1 // pred_region
      %50 = dma.done [#allocation7], 256
    $region21: #{gpt_forward.21} parent=1 // pred_fallthru
      _
    // Predicated region
    $region22: #{gpt_forward.21} parent=1 // pred_check
      _
    $region23: #{gpt_forward.21} parent=1 // pred_check_branch
      %52 = sbr.rel (0) target = $region25
    $region24: #{gpt_forward.21} parent=1 // pred_region
      %53 = dma.done [#allocation7], 16
    $region25: #{gpt_forward.21} parent=1 // pred_fallthru
      _
    %v55 = vld [vmem:[#allocation3] sm:$0xf]
    %v56 = vld [vmem:[#allocation3 + $0x4] sm:$0xf]
    %v57 = vld [vmem:[#allocation6] sm:$0xf]
    %v58 = vld [vmem:[#allocation6 + $0x4] sm:$0xf]
    %v59 = vld [vmem:[#allocation6 + $0x8] sm:$0xf]
    %v60 = vld [vmem:[#allocation6 + $0xc] sm:$0xf]
    %v63 = vunpack.c.l.b16 %v55
    %v64 = vunpack.c.l.b16 %v56
    %v65 = vpack.c.b16 %v64, %v63
    %v70 = vunpack.c.l.b16 %v57
    %v71 = vunpack.c.l.b16 %v58
    %v72 = vunpack.c.l.b16 %v59
    %v73 = vunpack.c.l.b16 %v60
    %v74 = vpack.c.b16 %v71, %v70
    %v75 = vpack.c.b16 %v73, %v72
    %vm78 = vcmask 261120
    %v80 = vsel %vm78, %v65, 0
    %82 = vmatprep.subr.bf16.mxu0 0
    %83 = vmatpush1.bf16.msra.mxu0 %v74
    %84 = vmatprep.subr.bf16.mxu0 0
    %85 = vmatpush1.bf16.msra.mxu0 %v75
    %86 = vmatprep.subr.bf16.mxu0 0
    %87 = vmatpush1.bf16.msra.mxu0 0
    %88 = vmatprep.subr.bf16.mxu0 0
    %89 = vmatpush1.bf16.msra.mxu0 0
    %90 = vmatprep.subr.bf16.mxu0 0
    %91 = vmatpush1.bf16.msra.mxu0 0
    %92 = vmatprep.subr.bf16.mxu0 0
    %93 = vmatpush1.bf16.msra.mxu0 0
    %94 = vmatprep.subr.bf16.mxu0 0
    %95 = vmatpush1.bf16.msra.mxu0 0
    %96 = vmatprep.subr.bf16.mxu0 0
    %97 = vmatpush1.bf16.msra.mxu0 0
    %98 = vmatprep.subr.bf16.mxu0 0
    %99 = vmatpush1.bf16.msra.mxu0 0
    %100 = vmatprep.subr.bf16.mxu0 0
    %101 = vmatpush1.bf16.msra.mxu0 0
    %102 = vmatprep.subr.bf16.mxu0 0
    %103 = vmatpush1.bf16.msra.mxu0 0
    %104 = vmatprep.subr.bf16.mxu0 0
    %105 = vmatpush1.bf16.msra.mxu0 0
    %106 = vmatprep.subr.bf16.mxu0 0
    %107 = vmatpush1.bf16.msra.mxu0 0
    %108 = vmatprep.subr.bf16.mxu0 0
    %109 = vmatpush1.bf16.msra.mxu0 0
    %110 = vmatprep.subr.bf16.mxu0 0
    %111 = vmatpush1.bf16.msra.mxu0 0
    %112 = vmatprep.subr.bf16.mxu0 0
    %113 = vmatpush1.bf16.msra.mxu0 0
    %114 = vmatprep.mubr.bf16.mxu0 0
    %115 = vmatmul.mubr.bf16.gmra.mrb[0].mxu0 %v80
    %v116 = vpop.f32.mrb[0].mxu0
    %v117 = vadd.f32 0.0, %v116
    %v118 = vpop.f32.mrb[0].mxu0
    %v119 = vpop.f32.mrb[0].mxu0
    %v120 = vadd.f32 0.0, %v119
    %v121 = vpop.f32.mrb[0].mxu0
    %122 = vdwg.mxu0
    %p123 = scmp.eq.s32.totalorder 0, 0
    // Predicated region
    $region26: #{gpt_forward.21} parent=1 // pred_check
      %p124 = pneg %p123
    $region27: #{gpt_forward.21} parent=1 // pred_check_branch
      %126 = sbr.rel (%p124) target = $region29
    $region28: #{gpt_forward.21} parent=1 // pred_region
      %127 = vst [vmem:[#allocation2] sm:$0xff] %v117
      %128 = vst [vmem:[#allocation2 + $0x8] sm:$0xff] %v120
    $region29: #{gpt_forward.21} parent=1 // pred_fallthru
      _
    %p129 = scmp.gt.s32.totalorder 0, 0
    // Predicated region
    $region30: #{gpt_forward.21} parent=1 // pred_check
      %p130 = pneg %p129
    $region31: #{gpt_forward.21} parent=1 // pred_check_branch
      %132 = sbr.rel (%p130) target = $region33
    $region32: #{gpt_forward.21} parent=1 // pred_region
      %v133 = vld [vmem:[#allocation2] sm:$0xff]
      %v134 = vld [vmem:[#allocation2 + $0x8] sm:$0xff]
      %v135 = vadd.f32 %v133, %v117
      %v136 = vadd.f32 %v134, %v120
      %137 = vst [vmem:[#allocation2] sm:$0xff] %v135
      %138 = vst [vmem:[#allocation2 + $0x8] sm:$0xff] %v136
    $region33: #{gpt_forward.21} parent=1 // pred_fallthru
      _
    // Predicated region
    $region34: #{gpt_forward.21} parent=1 // pred_check
      %p139 = pneg %p123
    $region35: #{gpt_forward.21} parent=1 // pred_check_branch
      %141 = sbr.rel (%p139) target = $region37
    $region36: #{gpt_forward.21} parent=1 // pred_region
      %v142 = vld [vmem:[#allocation2] sm:$0xff]
      %v143 = vld [vmem:[#allocation2 + $0x8] sm:$0xff]
      %v144 = vld [vmem:[#allocation8] sm:$0x1]
      %v146 = vlaneseq
      %v147 = vshrl.u32 %v146, 7
      %v148 = vsub.s32 0, %v147
      %v149 = vrot.slane %v144, %v148
      %v151 = vadd.f32 %v142, %v149
      %v152 = vadd.f32 %v143, %v149
      %v153 = vmul.f32 %v151, 0.5
      %v154 = vmul.f32 %v152, 0.5
      %v155 = vmul.f32 %v151, 0.044715
      %v156 = vmul.f32 %v152, 0.044715
      %v157 = vmul.f32 %v155, %v151
      %v158 = vmul.f32 %v156, %v152
      %v159 = vmul.f32 %v157, %v151
      %v160 = vmul.f32 %v158, %v152
      %v161 = vadd.f32 %v151, %v159
      %v162 = vadd.f32 %v152, %v160
      %v163 = vmul.f32 %v161, 0.7978846
      %v164 = vmul.f32 %v162, 0.7978846
      %v165 = vtanh.pop %v163
      %v166 = vtanh.pop %v164
      %v167 = vadd.f32 %v165, 1.0
      %v168 = vadd.f32 %v166, 1.0
      %v169 = vmul.f32 %v153, %v167
      %v170 = vmul.f32 %v154, %v168
      %v171 = vpack.c.bf16 %v170, %v169
      %v173 = vunpack.c.l.b16 %v171
      %v174 = vunpack.c.h.b16 %v171
      %v175 = vpack.c.b16 %v173, %v173
      %v176 = vpack.c.b16 %v174, %v174
      %179 = vst [vmem:[#allocation9] sm:$0xf] %v175
      %180 = vst [vmem:[#allocation9 + $0x4] sm:$0xf] %v176
    $region37: #{gpt_forward.21} parent=1 // pred_fallthru
      _
    // Predicated region
    $region38: #{gpt_forward.21} parent=1 // pred_check
      _
    $region39: #{gpt_forward.21} parent=1 // pred_check_branch
      %182 = sbr.rel (0) target = $region41
    $region40: #{gpt_forward.21} parent=1 // pred_region
      %s184 = ssub.s32 128, 128
      %185 = vsyncadd [#allocation5], %s184
      %s186 = sshll.u32 [#allocation9], 4
      %s187 = int_to_ptr.vmem [resolvable:$true] %s186
      %192 = dma.vmem_to_hbm [thread:$0]  %s187, 128, %s3, [#allocation5], 64, 64, 4
    $region41: #{gpt_forward.21} parent=1 // pred_fallthru
      _
    // Predicated region
    $region42: #{gpt_forward.21} parent=1 // pred_check
      _
    $region43: #{gpt_forward.21} parent=1 // pred_check_branch
      %194 = sbr.rel (0) target = $region45
    $region44: #{gpt_forward.21} parent=1 // pred_region
      %195 = dma.done [#allocation5], 128
    $region45: #{gpt_forward.21} parent=1 // pred_fallthru
      _
    %196 = vsyncpa [#allocation4], 1
    %197 = vsyncpa [#allocation7], 1
    %198 = vsyncpa [#allocation5], 1

// kernel: gpt_forward.22
$region0: #{gpt_forward.22}
  #allocation0 [shape = 'u32[]', space=smem, size = 0x4, offset = 0x4, fixed_abs, tag = 'smem constant byte address 0x4 - core index']
  #allocation1 [shape = 'u32[144,128]{1,0:T(1,128)}', space=vmem, size = 0x12000, scoped, tag = 'internal scratch']
  #allocation2 [shape = 'f32[16,32]{1,0:T(8,128)}', space=vmem, size = 0x2000, scoped, tag = 'scratch operand']
  %s0 = inlined_call_operand.hbm [shape: bf16[16,128], index: 0, kind: input, shape index: {}]
  %s1 = inlined_call_operand.hbm [shape: bf16[128,32], index: 1, kind: input, shape index: {}]
  %s2 = inlined_call_operand.hbm [shape: f32[1,32], index: 2, kind: input, shape index: {}]
  %s3 = inlined_call_operand.hbm [shape: bf16[16,32], index: 3, kind: input, shape index: {}, may-alias: {3,4}]
  %s4 = inlined_call_operand.hbm [shape: bf16[16,32], index: 4, kind: output, shape index: {}, may-alias: {3,4}]
  %s5 = sld [smem:[#allocation0]]
  $region54: #{gpt_forward.22} parent=0
    _
  %s7 = ssub.s32 1, %s5
  %s8 = scalar_select 0, %s7, %s5
  $region1: #{gpt_forward.22} parent=0
    #allocation3 [shape = 'u8[4096]{0}', space=vmem, size = 0x1000, scoped, tag = 'input window, operand 0, single buffered']
    #allocation4 [shape = 's32[1]{0}', space=sflag, size = 0x4, scoped, tag = 'scoped memory for gpt_forward.22']
    #allocation5 [shape = 's32[1]{0}', space=sflag, size = 0x4, scoped, tag = 'scoped memory for gpt_forward.22']
    #allocation6 [shape = 'u8[32768]{0}', space=vmem, size = 0x8000, scoped, tag = 'input window, operand 1, single buffered']
    #allocation7 [shape = 's32[1]{0}', space=sflag, size = 0x4, scoped, tag = 'scoped memory for gpt_forward.22']
    #allocation8 [shape = 'u8[512]{0}', space=vmem, size = 0x400, scoped, tag = 'input window, operand 2, single buffered']
    #allocation9 [shape = 'u8[4096]{0}', space=vmem, size = 0x1000, scoped, tag = 'input window, operand 3, single buffered']
    #allocation10 [shape = 's32[1]{0}', space=sflag, size = 0x4, scoped, tag = 'scoped memory for gpt_forward.22']
    #allocation11 [shape = 'u8[4096]{0}', space=vmem, size = 0x1000, scoped, tag = 'output window, operand 0, single buffered']
    %9 = vsyncpa [#allocation4], 0
    %10 = vsyncpa [#allocation7], 0
    %11 = vsyncpa [#allocation10], 0
    %12 = vsyncpa [#allocation5], 0
    // Predicated region
    $region2: #{gpt_forward.22} parent=1 // pred_check
      _
    $region3: #{gpt_forward.22} parent=1 // pred_check_branch
      %14 = sbr.rel (0) target = $region5
    $region4: #{gpt_forward.22} parent=1 // pred_region
      %s16 = ssub.s32 128, 128
      %17 = vsyncadd [#allocation4], %s16
      %s18 = sshll.u32 [#allocation3], 4
      %s19 = int_to_ptr.vmem [resolvable:$true] %s18
      %24 = dma.hbm_to_vmem [thread:$0]  %s0, 128, %s19, [#allocation4], 64, 64, 4
    $region5: #{gpt_forward.22} parent=1 // pred_fallthru
      _
    // Predicated region
    $region6: #{gpt_forward.22} parent=1 // pred_check
      _
    $region7: #{gpt_forward.22} parent=1 // pred_check_branch
      %26 = sbr.rel (0) target = $region9
    $region8: #{gpt_forward.22} parent=1 // pred_region
      %s28 = ssub.s32 1024, 1024
      %29 = vsyncadd [#allocation7], %s28
      %s30 = sshll.u32 [#allocation6], 4
      %s31 = int_to_ptr.vmem [resolvable:$true] %s30
      %36 = dma.hbm_to_vmem [thread:$0]  %s1, 1024, %s31, [#allocation7], 64, 64, 4
    $region9: #{gpt_forward.22} parent=1 // pred_fallthru
      _
    // Predicated region
    $region10: #{gpt_forward.22} parent=1 // pred_check
      _
    $region11: #{gpt_forward.22} parent=1 // pred_check_branch
      %38 = sbr.rel (0) target = $region13
    $region12: #{gpt_forward.22} parent=1 // pred_region
      %s40 = ssub.s32 16, 16
      %41 = vsyncadd [#allocation7], %s40
      %s43 = sshll.u32 [#allocation8], 4
      %s44 = int_to_ptr.vmem [resolvable:$true] %s43
      %46 = dma.hbm_to_vmem [thread:$0]  %s2, 16, %s44, [#allocation7]
    $region13: #{gpt_forward.22} parent=1 // pred_fallthru
      _
    // Predicated region
    $region14: #{gpt_forward.22} parent=1 // pred_check
      _
    $region15: #{gpt_forward.22} parent=1 // pred_check_branch
      %48 = sbr.rel (0) target = $region17
    $region16: #{gpt_forward.22} parent=1 // pred_region
      %s50 = ssub.s32 128, 128
      %51 = vsyncadd [#allocation10], %s50
      %s52 = sshll.u32 [#allocation9], 4
      %s53 = int_to_ptr.vmem [resolvable:$true] %s52
      %58 = dma.hbm_to_vmem [thread:$0]  %s3, 128, %s53, [#allocation10], 64, 64, 4
    $region17: #{gpt_forward.22} parent=1 // pred_fallthru
      _
    // Predicated region
    $region18: #{gpt_forward.22} parent=1 // pred_check
      _
    $region19: #{gpt_forward.22} parent=1 // pred_check_branch
      %60 = sbr.rel (0) target = $region21
    $region20: #{gpt_forward.22} parent=1 // pred_region
      %61 = dma.done [#allocation4], 128
    $region21: #{gpt_forward.22} parent=1 // pred_fallthru
      _
    // Predicated region
    $region22: #{gpt_forward.22} parent=1 // pred_check
      _
    $region23: #{gpt_forward.22} parent=1 // pred_check_branch
      %63 = sbr.rel (0) target = $region25
    $region24: #{gpt_forward.22} parent=1 // pred_region
      %64 = dma.done [#allocation7], 1024
    $region25: #{gpt_forward.22} parent=1 // pred_fallthru
      _
    // Predicated region
    $region26: #{gpt_forward.22} parent=1 // pred_check
      _
    $region27: #{gpt_forward.22} parent=1 // pred_check_branch
      %66 = sbr.rel (0) target = $region29
    $region28: #{gpt_forward.22} parent=1 // pred_region
      %67 = dma.done [#allocation7], 16
    $region29: #{gpt_forward.22} parent=1 // pred_fallthru
      _
    // Predicated region
    $region30: #{gpt_forward.22} parent=1 // pred_check
      _
    $region31: #{gpt_forward.22} parent=1 // pred_check_branch
      %69 = sbr.rel (0) target = $region33
    $region32: #{gpt_forward.22} parent=1 // pred_region
      %70 = dma.done [#allocation10], 128
    $region33: #{gpt_forward.22} parent=1 // pred_fallthru
      _
    %v72 = vld [vmem:[#allocation3] sm:$0xf]
    %v73 = vld [vmem:[#allocation3 + $0x4] sm:$0xf]
    %v74 = vld [vmem:[#allocation6] sm:$0xf]
    %v75 = vld [vmem:[#allocation6 + $0x4] sm:$0xf]
    %v76 = vld [vmem:[#allocation6 + $0x8] sm:$0xf]
    %v77 = vld [vmem:[#allocation6 + $0xc] sm:$0xf]
    %v78 = vld [vmem:[#allocation6 + $0x10] sm:$0xf]
    %v79 = vld [vmem:[#allocation6 + $0x14] sm:$0xf]
    %v80 = vld [vmem:[#allocation6 + $0x18] sm:$0xf]
    %v81 = vld [vmem:[#allocation6 + $0x1c] sm:$0xf]
    %v82 = vld [vmem:[#allocation6 + $0x20] sm:$0xf]
    %v83 = vld [vmem:[#allocation6 + $0x24] sm:$0xf]
    %v84 = vld [vmem:[#allocation6 + $0x28] sm:$0xf]
    %v85 = vld [vmem:[#allocation6 + $0x2c] sm:$0xf]
    %v86 = vld [vmem:[#allocation6 + $0x30] sm:$0xf]
    %v87 = vld [vmem:[#allocation6 + $0x34] sm:$0xf]
    %v88 = vld [vmem:[#allocation6 + $0x38] sm:$0xf]
    %v89 = vld [vmem:[#allocation6 + $0x3c] sm:$0xf]
    %v92 = vunpack.c.l.b16 %v72
    %v93 = vunpack.c.l.b16 %v73
    %v94 = vpack.c.b16 %v93, %v92
    %v112 = vunpack.c.l.b16 %v74
    %v113 = vunpack.c.l.b16 %v75
    %v114 = vunpack.c.l.b16 %v76
    %v115 = vunpack.c.l.b16 %v77
    %v116 = vunpack.c.l.b16 %v78
    %v117 = vunpack.c.l.b16 %v79
    %v118 = vunpack.c.l.b16 %v80
    %v119 = vunpack.c.l.b16 %v81
    %v120 = vunpack.c.l.b16 %v82
    %v121 = vunpack.c.l.b16 %v83
    %v122 = vunpack.c.l.b16 %v84
    %v123 = vunpack.c.l.b16 %v85
    %v124 = vunpack.c.l.b16 %v86
    %v125 = vunpack.c.l.b16 %v87
    %v126 = vunpack.c.l.b16 %v88
    %v127 = vunpack.c.l.b16 %v89
    %v128 = vpack.c.b16 %v113, %v112
    %v129 = vpack.c.b16 %v115, %v114
    %v130 = vpack.c.b16 %v117, %v116
    %v131 = vpack.c.b16 %v119, %v118
    %v132 = vpack.c.b16 %v121, %v120
    %v133 = vpack.c.b16 %v123, %v122
    %v134 = vpack.c.b16 %v125, %v124
    %v135 = vpack.c.b16 %v127, %v126
    %144 = vmatprep.subr.bf16.mxu0 0
    %145 = vmatpush1.bf16.msra.mxu0 %v128
    %146 = vmatprep.subr.bf16.mxu0 0
    %147 = vmatpush1.bf16.msra.mxu0 %v129
    %148 = vmatprep.subr.bf16.mxu0 0
    %149 = vmatpush1.bf16.msra.mxu0 %v130
    %150 = vmatprep.subr.bf16.mxu0 0
    %151 = vmatpush1.bf16.msra.mxu0 %v131
    %152 = vmatprep.subr.bf16.mxu0 0
    %153 = vmatpush1.bf16.msra.mxu0 %v132
    %154 = vmatprep.subr.bf16.mxu0 0
    %155 = vmatpush1.bf16.msra.mxu0 %v133
    %156 = vmatprep.subr.bf16.mxu0 0
    %157 = vmatpush1.bf16.msra.mxu0 %v134
    %158 = vmatprep.subr.bf16.mxu0 0
    %159 = vmatpush1.bf16.msra.mxu0 %v135
    %160 = vmatprep.subr.bf16.mxu0 0
    %161 = vmatpush1.bf16.msra.mxu0 0
    %162 = vmatprep.subr.bf16.mxu0 0
    %163 = vmatpush1.bf16.msra.mxu0 0
    %164 = vmatprep.subr.bf16.mxu0 0
    %165 = vmatpush1.bf16.msra.mxu0 0
    %166 = vmatprep.subr.bf16.mxu0 0
    %167 = vmatpush1.bf16.msra.mxu0 0
    %168 = vmatprep.subr.bf16.mxu0 0
    %169 = vmatpush1.bf16.msra.mxu0 0
    %170 = vmatprep.subr.bf16.mxu0 0
    %171 = vmatpush1.bf16.msra.mxu0 0
    %172 = vmatprep.subr.bf16.mxu0 0
    %173 = vmatpush1.bf16.msra.mxu0 0
    %174 = vmatprep.subr.bf16.mxu0 0
    %175 = vmatpush1.bf16.msra.mxu0 0
    %176 = vmatprep.mubr.bf16.mxu0 0
    %177 = vmatmul.mubr.bf16.gmra.mrb[0].mxu0 %v94
    %v178 = vpop.f32.mrb[0].mxu0
    %v179 = vadd.f32 0.0, %v178
    %v180 = vpop.f32.mrb[0].mxu0
    %v181 = vpop.f32.mrb[0].mxu0
    %v182 = vadd.f32 0.0, %v181
    %v183 = vpop.f32.mrb[0].mxu0
    %184 = vdwg.mxu0
    %p185 = scmp.eq.s32.totalorder 0, 0
    // Predicated region
    $region34: #{gpt_forward.22} parent=1 // pred_check
      %p186 = pneg %p185
    $region35: #{gpt_forward.22} parent=1 // pred_check_branch
      %188 = sbr.rel (%p186) target = $region37
    $region36: #{gpt_forward.22} parent=1 // pred_region
      %vm189 = vcmask 261120
      %190 = vst.msk [vmem:[#allocation2] sm:$0xff] %vm189, %v179
      %191 = vst.msk [vmem:[#allocation2 + $0x8] sm:$0xff] %vm189, %v182
    $region37: #{gpt_forward.22} parent=1 // pred_fallthru
      _
    %p192 = scmp.gt.s32.totalorder 0, 0
    // Predicated region
    $region38: #{gpt_forward.22} parent=1 // pred_check
      %p193 = pneg %p192
    $region39: #{gpt_forward.22} parent=1 // pred_check_branch
      %195 = sbr.rel (%p193) target = $region41
    $region40: #{gpt_forward.22} parent=1 // pred_region
      %v196 = vld [vmem:[#allocation2] sm:$0xff]
      %v197 = vld [vmem:[#allocation2 + $0x8] sm:$0xff]
      %v198 = vadd.f32 %v196, %v179
      %v199 = vadd.f32 %v197, %v182
      %vm200 = vcmask 261120
      %201 = vst.msk [vmem:[#allocation2] sm:$0xff] %vm200, %v198
      %202 = vst.msk [vmem:[#allocation2 + $0x8] sm:$0xff] %vm200, %v199
    $region41: #{gpt_forward.22} parent=1 // pred_fallthru
      _
    // Predicated region
    $region42: #{gpt_forward.22} parent=1 // pred_check
      %p203 = pneg %p185
    $region43: #{gpt_forward.22} parent=1 // pred_check_branch
      %205 = sbr.rel (%p203) target = $region45
    $region44: #{gpt_forward.22} parent=1 // pred_region
      %v206 = vld [vmem:[#allocation2] sm:$0xff]
      %v207 = vld [vmem:[#allocation2 + $0x8] sm:$0xff]
      %v208 = vld [vmem:[#allocation8] sm:$0x1]
      %v210 = vlaneseq
      %v211 = vshrl.u32 %v210, 7
      %v212 = vsub.s32 0, %v211
      %v213 = vrot.slane %v208, %v212
      %v215 = vadd.f32 %v206, %v213
      %v216 = vadd.f32 %v207, %v213
      %v217 = vld [vmem:[#allocation9] sm:$0xf]
      %v218 = vld [vmem:[#allocation9 + $0x4] sm:$0xf]
      %v219 = vunpack.c.l.bf16 %v217
      %v220 = vunpack.c.l.bf16 %v218
      %v221 = vadd.f32 %v215, %v219
      %v222 = vadd.f32 %v216, %v220
      %v223 = vpack.c.bf16 %v222, %v221
      %v225 = vunpack.c.l.b16 %v223
      %v226 = vunpack.c.h.b16 %v223
      %v227 = vpack.c.b16 %v225, %v225
      %v228 = vpack.c.b16 %v226, %v226
      %vm231 = vcmask 257024
      %232 = vst.msk [vmem:[#allocation11] sm:$0xf] %vm231, %v227
      %233 = vst.msk [vmem:[#allocation11 + $0x4] sm:$0xf] %vm231, %v228
    $region45: #{gpt_forward.22} parent=1 // pred_fallthru
      _
    // Predicated region
    $region46: #{gpt_forward.22} parent=1 // pred_check
      _
    $region47: #{gpt_forward.22} parent=1 // pred_check_branch
      %235 = sbr.rel (0) target = $region49
    $region48: #{gpt_forward.22} parent=1 // pred_region
      %s237 = ssub.s32 128, 128
      %238 = vsyncadd [#allocation5], %s237
      %s239 = sshll.u32 [#allocation11], 4
      %s240 = int_to_ptr.vmem [resolvable:$true] %s239
      %245 = dma.vmem_to_hbm [thread:$0]  %s240, 128, %s4, [#allocation5], 64, 64, 4
    $region49: #{gpt_forward.22} parent=1 // pred_fallthru
      _
    // Predicated region
    $region50: #{gpt_forward.22} parent=1 // pred_check
      _
    $region51: #{gpt_forward.22} parent=1 // pred_check_branch
      %247 = sbr.rel (0) target = $region53
    $region52: #{gpt_forward.22} parent=1 // pred_region
      %248 = dma.done [#allocation5], 128
    $region53: #{gpt_forward.22} parent=1 // pred_fallthru
      _
    %249 = vsyncpa [#allocation4], 1
    %250 = vsyncpa [#allocation7], 1
    %251 = vsyncpa [#allocation10], 1
    %252 = vsyncpa [#allocation5], 1

// kernel: gpt_forward.30
$region0: #{gpt_forward.30}
  #allocation0 [shape = 'u32[]', space=smem, size = 0x4, offset = 0x4, fixed_abs, tag = 'smem constant byte address 0x4 - core index']
  #allocation1 [shape = 'u32[144,128]{1,0:T(1,128)}', space=vmem, size = 0x12000, scoped, tag = 'internal scratch']
  %s0 = inlined_call_operand.hbm [shape: bf16[2,32], index: 0, kind: input, shape index: {}]
  %s1 = inlined_call_operand.hbm [shape: f32[1,32], index: 1, kind: input, shape index: {}]
  %s2 = inlined_call_operand.hbm [shape: f32[1,32], index: 2, kind: input, shape index: {}]
  %s3 = inlined_call_operand.hbm [shape: bf16[2,32], index: 3, kind: output, shape index: {}]
  %s4 = sld [smem:[#allocation0]]
  $region34: #{gpt_forward.30} parent=0
    _
  %s6 = ssub.s32 1, %s4
  %s7 = scalar_select 0, %s6, %s4
  $region1: #{gpt_forward.30} parent=0
    #allocation2 [shape = 'u8[512]{0}', space=vmem, size = 0x400, scoped, tag = 'input window, operand 0, single buffered']
    #allocation3 [shape = 's32[1]{0}', space=sflag, size = 0x4, scoped, tag = 'scoped memory for gpt_forward.30']
    #allocation4 [shape = 's32[1]{0}', space=sflag, size = 0x4, scoped, tag = 'scoped memory for gpt_forward.30']
    #allocation5 [shape = 'u8[512]{0}', space=vmem, size = 0x400, scoped, tag = 'input window, operand 1, single buffered']
    #allocation6 [shape = 's32[1]{0}', space=sflag, size = 0x4, scoped, tag = 'scoped memory for gpt_forward.30']
    #allocation7 [shape = 'u8[512]{0}', space=vmem, size = 0x400, scoped, tag = 'input window, operand 2, single buffered']
    #allocation8 [shape = 'u8[512]{0}', space=vmem, size = 0x400, scoped, tag = 'output window, operand 0, single buffered']
    %8 = vsyncpa [#allocation3], 0
    %9 = vsyncpa [#allocation6], 0
    %10 = vsyncpa [#allocation4], 0
    // Predicated region
    $region2: #{gpt_forward.30} parent=1 // pred_check
      _
    $region3: #{gpt_forward.30} parent=1 // pred_check_branch
      %12 = sbr.rel (0) target = $region5
    $region4: #{gpt_forward.30} parent=1 // pred_region
      %s14 = ssub.s32 16, 16
      %15 = vsyncadd [#allocation3], %s14
      %s17 = sshll.u32 [#allocation2], 4
      %s18 = int_to_ptr.vmem [resolvable:$true] %s17
      %20 = dma.hbm_to_vmem [thread:$0]  %s0, 16, %s18, [#allocation3]
    $region5: #{gpt_forward.30} parent=1 // pred_fallthru
      _
    // Predicated region
    $region6: #{gpt_forward.30} parent=1 // pred_check
      _
    $region7: #{gpt_forward.30} parent=1 // pred_check_branch
      %22 = sbr.rel (0) target = $region9
    $region8: #{gpt_forward.30} parent=1 // pred_region
      %s24 = ssub.s32 16, 16
      %25 = vsyncadd [#allocation6], %s24
      %s27 = sshll.u32 [#allocation5], 4
      %s28 = int_to_ptr.vmem [resolvable:$true] %s27
      %30 = dma.hbm_to_vmem [thread:$0]  %s1, 16, %s28, [#allocation6]
    $region9: #{gpt_forward.30} parent=1 // pred_fallthru
      _
    // Predicated region
    $region10: #{gpt_forward.30} parent=1 // pred_check
      _
    $region11: #{gpt_forward.30} parent=1 // pred_check_branch
      %32 = sbr.rel (0) target = $region13
    $region12: #{gpt_forward.30} parent=1 // pred_region
      %s34 = ssub.s32 16, 16
      %35 = vsyncadd [#allocation6], %s34
      %s37 = sshll.u32 [#allocation7], 4
      %s38 = int_to_ptr.vmem [resolvable:$true] %s37
      %40 = dma.hbm_to_vmem [thread:$0]  %s2, 16, %s38, [#allocation6]
    $region13: #{gpt_forward.30} parent=1 // pred_fallthru
      _
    // Predicated region
    $region14: #{gpt_forward.30} parent=1 // pred_check
      _
    $region15: #{gpt_forward.30} parent=1 // pred_check_branch
      %42 = sbr.rel (0) target = $region17
    $region16: #{gpt_forward.30} parent=1 // pred_region
      %43 = dma.done [#allocation3], 16
    $region17: #{gpt_forward.30} parent=1 // pred_fallthru
      _
    // Predicated region
    $region18: #{gpt_forward.30} parent=1 // pred_check
      _
    $region19: #{gpt_forward.30} parent=1 // pred_check_branch
      %45 = sbr.rel (0) target = $region21
    $region20: #{gpt_forward.30} parent=1 // pred_region
      %46 = dma.done [#allocation6], 16
    $region21: #{gpt_forward.30} parent=1 // pred_fallthru
      _
    // Predicated region
    $region22: #{gpt_forward.30} parent=1 // pred_check
      _
    $region23: #{gpt_forward.30} parent=1 // pred_check_branch
      %48 = sbr.rel (0) target = $region25
    $region24: #{gpt_forward.30} parent=1 // pred_region
      %49 = dma.done [#allocation6], 16
    $region25: #{gpt_forward.30} parent=1 // pred_fallthru
      _
    %v50 = vld [vmem:[#allocation2] sm:$0x1]
    %v51 = vunpack.c.l.bf16 %v50
    %vm52 = vcmask 254976
    %v53 = vsel %vm52, %v51, 0.0
    %54 = vadd.xlane.f32.xlu0 %v53
    %v55 = vpop.xlane.xlu0 %54
    %v56 = vrcp.pop 32.0
    %v57 = vmul.f32 %v55, %v56
    %v58 = vsub.f32 %v51, %v57
    %v59 = vmul.f32 %v58, %v58
    %v60 = vsel %vm52, %v59, 0.0
    %61 = vadd.xlane.f32.xlu0 %v60
    %v62 = vpop.xlane.xlu0 %61
    %v63 = vmul.f32 %v62, %v56
    %v64 = vadd.f32 %v63, 1e-05
    %v65 = vrsqrt.pop %v64
    %v66 = vmul.f32 %v58, %v65
    %v67 = vld [vmem:[#allocation5] sm:$0x1]
    %v69 = vlaneseq
    %v70 = vshrl.u32 %v69, 7
    %v71 = vsub.s32 0, %v70
    %v72 = vrot.slane %v67, %v71
    %v74 = vmul.f32 %v66, %v72
    %v75 = vld [vmem:[#allocation7] sm:$0x1]
    %v77 = vlaneseq
    %v78 = vshrl.u32 %v77, 7
    %v79 = vsub.s32 0, %v78
    %v80 = vrot.slane %v75, %v79
    %v82 = vadd.f32 %v74, %v80
    %v83 = vpack.c.bf16 %v82, %v82
    %vm84 = vcmask 253952
    %85 = vst.msk [vmem:[#allocation8] sm:$0x1] %vm84, %v83
    // Predicated region
    $region26: #{gpt_forward.30} parent=1 // pred_check
      _
    $region27: #{gpt_forward.30} parent=1 // pred_check_branch
      %87 = sbr.rel (0) target = $region29
    $region28: #{gpt_forward.30} parent=1 // pred_region
      %s89 = ssub.s32 16, 16
      %90 = vsyncadd [#allocation4], %s89
      %s92 = sshll.u32 [#allocation8], 4
      %s93 = int_to_ptr.vmem [resolvable:$true] %s92
      %95 = dma.vmem_to_hbm [thread:$0]  %s93, 16, %s3, [#allocation4]
    $region29: #{gpt_forward.30} parent=1 // pred_fallthru
      _
    // Predicated region
    $region30: #{gpt_forward.30} parent=1 // pred_check
      _
    $region31: #{gpt_forward.30} parent=1 // pred_check_branch
      %97 = sbr.rel (0) target = $region33
    $region32: #{gpt_forward.30} parent=1 // pred_region
      %98 = dma.done [#allocation4], 16
    $region33: #{gpt_forward.30} parent=1 // pred_fallthru
      _
    %99 = vsyncpa [#allocation3], 1
    %100 = vsyncpa [#allocation6], 1
    %101 = vsyncpa [#allocation4], 1

// kernel: gpt_forward.31
$region0: #{gpt_forward.31}
  #allocation0 [shape = 'u32[]', space=smem, size = 0x4, offset = 0x4, fixed_abs, tag = 'smem constant byte address 0x4 - core index']
  #allocation1 [shape = 'u32[144,128]{1,0:T(1,128)}', space=vmem, size = 0x12000, scoped, tag = 'internal scratch']
  #allocation2 [shape = 'f32[2,128]{1,0:T(2,128)}', space=vmem, size = 0x400, scoped, tag = 'scratch operand']
  %s0 = inlined_call_operand.hbm [shape: bf16[2,32], index: 0, kind: input, shape index: {}]
  %s1 = inlined_call_operand.hbm [shape: bf16[32,128], index: 1, kind: input, shape index: {}]
  %s2 = inlined_call_operand.hbm [shape: f32[2,128], index: 2, kind: output, shape index: {}]
  %s3 = sld [smem:[#allocation0]]
  $region38: #{gpt_forward.31} parent=0
    _
  %s5 = ssub.s32 1, %s3
  %s6 = scalar_select 0, %s5, %s3
  $region1: #{gpt_forward.31} parent=0
    #allocation3 [shape = 'u8[512]{0}', space=vmem, size = 0x400, scoped, tag = 'input window, operand 0, single buffered']
    #allocation4 [shape = 's32[1]{0}', space=sflag, size = 0x4, scoped, tag = 'scoped memory for gpt_forward.31']
    #allocation5 [shape = 's32[1]{0}', space=sflag, size = 0x4, scoped, tag = 'scoped memory for gpt_forward.31']
    #allocation6 [shape = 'u8[8192]{0}', space=vmem, size = 0x2000, scoped, tag = 'input window, operand 1, single buffered']
    #allocation7 [shape = 's32[1]{0}', space=sflag, size = 0x4, scoped, tag = 'scoped memory for gpt_forward.31']
    #allocation8 [shape = 'u8[1024]{0}', space=vmem, size = 0x400, scoped, tag = 'output window, operand 0, single buffered']
    %7 = vsyncpa [#allocation4], 0
    %8 = vsyncpa [#allocation7], 0
    %9 = vsyncpa [#allocation5], 0
    // Predicated region
    $region2: #{gpt_forward.31} parent=1 // pred_check
      _
    $region3: #{gpt_forward.31} parent=1 // pred_check_branch
      %11 = sbr.rel (0) target = $region5
    $region4: #{gpt_forward.31} parent=1 // pred_region
      %s13 = ssub.s32 16, 16
      %14 = vsyncadd [#allocation4], %s13
      %s16 = sshll.u32 [#allocation3], 4
      %s17 = int_to_ptr.vmem [resolvable:$true] %s16
      %19 = dma.hbm_to_vmem [thread:$0]  %s0, 16, %s17, [#allocation4]
    $region5: #{gpt_forward.31} parent=1 // pred_fallthru
      _
    // Predicated region
    $region6: #{gpt_forward.31} parent=1 // pred_check
      _
    $region7: #{gpt_forward.31} parent=1 // pred_check_branch
      %21 = sbr.rel (0) target = $region9
    $region8: #{gpt_forward.31} parent=1 // pred_region
      %s23 = ssub.s32 256, 256
      %24 = vsyncadd [#allocation7], %s23
      %s25 = sshll.u32 [#allocation6], 4
      %s26 = int_to_ptr.vmem [resolvable:$true] %s25
      %31 = dma.hbm_to_vmem [thread:$0]  %s1, 256, %s26, [#allocation7], 64, 64, 4
    $region9: #{gpt_forward.31} parent=1 // pred_fallthru
      _
    // Predicated region
    $region10: #{gpt_forward.31} parent=1 // pred_check
      _
    $region11: #{gpt_forward.31} parent=1 // pred_check_branch
      %33 = sbr.rel (0) target = $region13
    $region12: #{gpt_forward.31} parent=1 // pred_region
      %34 = dma.done [#allocation4], 16
    $region13: #{gpt_forward.31} parent=1 // pred_fallthru
      _
    // Predicated region
    $region14: #{gpt_forward.31} parent=1 // pred_check
      _
    $region15: #{gpt_forward.31} parent=1 // pred_check_branch
      %36 = sbr.rel (0) target = $region17
    $region16: #{gpt_forward.31} parent=1 // pred_region
      %37 = dma.done [#allocation7], 256
    $region17: #{gpt_forward.31} parent=1 // pred_fallthru
      _
    %v39 = vld [vmem:[#allocation3] sm:$0x1]
    %v40 = vld [vmem:[#allocation6] sm:$0xf]
    %v41 = vld [vmem:[#allocation6 + $0x4] sm:$0xf]
    %v42 = vld [vmem:[#allocation6 + $0x8] sm:$0xf]
    %v43 = vld [vmem:[#allocation6 + $0xc] sm:$0xf]
    %v48 = vunpack.c.l.b16 %v40
    %v49 = vunpack.c.l.b16 %v41
    %v50 = vunpack.c.l.b16 %v42
    %v51 = vunpack.c.l.b16 %v43
    %v52 = vpack.c.b16 %v49, %v48
    %v53 = vpack.c.b16 %v51, %v50
    %vm56 = vcmask 261120
    %v58 = vsel %vm56, %v39, 0
    %60 = vmatprep.subr.bf16.mxu0 0
    %61 = vmatpush1.bf16.msra.mxu0 %v52
    %62 = vmatprep.subr.bf16.mxu0 0
    %63 = vmatpush1.bf16.msra.mxu0 %v53
    %64 = vmatprep.subr.bf16.mxu0 0
    %65 = vmatpush1.bf16.msra.mxu0 0
    %66 = vmatprep.subr.bf16.mxu0 0
    %67 = vmatpush1.bf16.msra.mxu0 0
    %68 = vmatprep.subr.bf16.mxu0 0
    %69 = vmatpush1.bf16.msra.mxu0 0
    %70 = vmatprep.subr.bf16.mxu0 0
    %71 = vmatpush1.bf16.msra.mxu0 0
    %72 = vmatprep.subr.bf16.mxu0 0
    %73 = vmatpush1.bf16.msra.mxu0 0
    %74 = vmatprep.subr.bf16.mxu0 0
    %75 = vmatpush1.bf16.msra.mxu0 0
    %76 = vmatprep.subr.bf16.mxu0 0
    %77 = vmatpush1.bf16.msra.mxu0 0
    %78 = vmatprep.subr.bf16.mxu0 0
    %79 = vmatpush1.bf16.msra.mxu0 0
    %80 = vmatprep.subr.bf16.mxu0 0
    %81 = vmatpush1.bf16.msra.mxu0 0
    %82 = vmatprep.subr.bf16.mxu0 0
    %83 = vmatpush1.bf16.msra.mxu0 0
    %84 = vmatprep.subr.bf16.mxu0 0
    %85 = vmatpush1.bf16.msra.mxu0 0
    %86 = vmatprep.subr.bf16.mxu0 0
    %87 = vmatpush1.bf16.msra.mxu0 0
    %88 = vmatprep.subr.bf16.mxu0 0
    %89 = vmatpush1.bf16.msra.mxu0 0
    %90 = vmatprep.subr.bf16.mxu0 0
    %91 = vmatpush1.bf16.msra.mxu0 0
    %92 = vmatprep.mubr.bf16.mxu0 0
    %93 = vmatmul.mubr.bf16.gmra.mrb[0].mxu0 %v58
    %v94 = vpop.f32.mrb[0].mxu0
    %v95 = vadd.f32 0.0, %v94
    %v96 = vpop.f32.mrb[0].mxu0
    %v97 = vpop.f32.mrb[0].mxu0
    %v98 = vpop.f32.mrb[0].mxu0
    %99 = vdwg.mxu0
    %p100 = scmp.eq.s32.totalorder 0, 0
    // Predicated region
    $region18: #{gpt_forward.31} parent=1 // pred_check
      %p101 = pneg %p100
    $region19: #{gpt_forward.31} parent=1 // pred_check_branch
      %103 = sbr.rel (%p101) target = $region21
    $region20: #{gpt_forward.31} parent=1 // pred_region
      %104 = vst [vmem:[#allocation2] sm:$0x3] %v95
    $region21: #{gpt_forward.31} parent=1 // pred_fallthru
      _
    %p105 = scmp.gt.s32.totalorder 0, 0
    // Predicated region
    $region22: #{gpt_forward.31} parent=1 // pred_check
      %p106 = pneg %p105
    $region23: #{gpt_forward.31} parent=1 // pred_check_branch
      %108 = sbr.rel (%p106) target = $region25
    $region24: #{gpt_forward.31} parent=1 // pred_region
      %v109 = vld [vmem:[#allocation2] sm:$0x3]
      %v110 = vadd.f32 %v109, %v95
      %111 = vst [vmem:[#allocation2] sm:$0x3] %v110
    $region25: #{gpt_forward.31} parent=1 // pred_fallthru
      _
    // Predicated region
    $region26: #{gpt_forward.31} parent=1 // pred_check
      %p112 = pneg %p100
    $region27: #{gpt_forward.31} parent=1 // pred_check_branch
      %114 = sbr.rel (%p112) target = $region29
    $region28: #{gpt_forward.31} parent=1 // pred_region
      %v115 = vld [vmem:[#allocation2] sm:$0x3]
      %116 = vst [vmem:[#allocation8] sm:$0x3] %v115
    $region29: #{gpt_forward.31} parent=1 // pred_fallthru
      _
    // Predicated region
    $region30: #{gpt_forward.31} parent=1 // pred_check
      _
    $region31: #{gpt_forward.31} parent=1 // pred_check_branch
      %118 = sbr.rel (0) target = $region33
    $region32: #{gpt_forward.31} parent=1 // pred_region
      %s120 = ssub.s32 32, 32
      %121 = vsyncadd [#allocation5], %s120
      %s123 = sshll.u32 [#allocation8], 4
      %s124 = int_to_ptr.vmem [resolvable:$true] %s123
      %126 = dma.vmem_to_hbm [thread:$0]  %s124, 32, %s2, [#allocation5]
    $region33: #{gpt_forward.31} parent=1 // pred_fallthru
      _
    // Predicated region
    $region34: #{gpt_forward.31} parent=1 // pred_check
      _
    $region35: #{gpt_forward.31} parent=1 // pred_check_branch
      %128 = sbr.rel (0) target = $region37
    $region36: #{gpt_forward.31} parent=1 // pred_region
      %129 = dma.done [#allocation5], 32
    $region37: #{gpt_forward.31} parent=1 // pred_fallthru
      _
    %130 = vsyncpa [#allocation4], 1
    %131 = vsyncpa [#allocation7], 1
    %132 = vsyncpa [#allocation5], 1

</llo_original>
